<compile_context>
chip_gen: v7x
topology: tpu7x:2x2x1
jax: 0.10.0
libtpu: 0.0.40
codegen_flags: <defaults>
</compile_context>

<pallas_src>
import numpy as np
import jax
import jax.numpy as jnp
from jax.experimental import pallas as pl
from jax.experimental.pallas import tpu as pltpu


# ----------------------------------------------------------------------------
# N-BEATS style basis construction (mirrors the PyTorch `linspace` helper).
# ----------------------------------------------------------------------------
def linspace_np(backcast_length, forecast_length, centered=False):
    if centered:
        norm = max(backcast_length, forecast_length)
        start = -backcast_length
        stop = forecast_length - 1
    else:
        norm = backcast_length + forecast_length
        start = 0
        stop = backcast_length + forecast_length - 1
    lin = np.linspace(start / norm, stop / norm,
                      backcast_length + forecast_length, dtype=np.float32)
    return lin[:backcast_length], lin[backcast_length:]


# ----------------------------------------------------------------------------
# Fused Pallas kernel: runs ALL BaseBlocks + residual updates + weighted sum.
# ----------------------------------------------------------------------------
def make_fused_kernel(types):
    has_ts = any(t != "generic" for t in types)
    has_g = any(t == "generic" for t in types)

    def kernel(*refs):
        it = iter(refs)
        x_ref = next(it)            # (L, BC)           BC = B*C, lane = b*C+c
        agg_ref = next(it)          # (BC, bc)          channel->batch summer
        w1_all = next(it)           # (nb, H, L)
        w234_all = next(it)         # (nb*3, H, H)
        wdim_all = next(it)         # (nb, D, H)
        basis_all = next(it) if has_ts else None        # (n_ts, L, D)
        if has_g:
            wg1_all = next(it)      # (n_g, H, D)
            bg1_all = next(it)      # (n_g, H, 1)
            wg2_all = next(it)      # (n_g, L, H)
            bg2_all = next(it)      # (n_g, L, 1)
        wcls1_all = next(it)        # (nb*(D+4), H, BC) lane-tiled classify L1
        bc1_all = next(it)          # (nb, H, 1)
        wc2_all = next(it)          # (nb, H, H)
        bc2_all = next(it)          # (nb, H, 1)
        wc3_all = next(it)          # (nb, OUT, H)  pre-scaled by softmax(w)
        bc3_all = next(it)          # (nb, OUT, 1)  pre-scaled by softmax(w)
        pred_ref = next(it)         # (1, OUT, bc)

        D = wdim_all.shape[1]
        nf = D + 4                  # dim features + mean/std/min/max

        def mm(a, b):
            return jnp.dot(a, b, preferred_element_type=jnp.float32)

        x = x_ref[...]              # (L, BC)
        agg = agg_ref[...]          # (BC, bc)

        backcast = x
        pred = jnp.zeros(pred_ref.shape[1:], jnp.float32)   # (OUT, bc)
        ts_i = 0
        g_i = 0
        for blk, bt in enumerate(types):
            xb = backcast

            # --- per-(batch, channel) stats over the time axis (sublanes) ---
            mean_r = jnp.mean(xb, axis=0, keepdims=True)            # (1, BC)
            var_r = jnp.mean((xb - mean_r) ** 2, axis=0, keepdims=True)
            std_r = jnp.sqrt(var_r) + 1e-5
            min_r = jnp.min(xb, axis=0, keepdims=True)
            max_r = jnp.max(xb, axis=0, keepdims=True)
            inv_std = pl.reciprocal(std_r, approx=True)             # EUP slot
            xn = (xb - mean_r) * inv_std                            # (L, BC)

            # --- basic_fc: 4x (1x1 conv == matmul) + folded BN + ReLU -------
            a = jnp.maximum(mm(w1_all[blk], xn), 0.0)               # (H, BC)
            for j in range(3):
                a = jnp.maximum(mm(w234_all[blk * 3 + j], a), 0.0)
            d = jnp.tanh(mm(wdim_all[blk], a))                      # (D, BC)

            # --- backcast head ----------------------------------------------
            if bt == "generic":
                g = jnp.maximum(mm(wg1_all[g_i], d) + bg1_all[g_i], 0.0)
                back = mm(wg2_all[g_i], g) + bg2_all[g_i]           # (L, BC)
                g_i += 1
            else:               # trend / seasonal basis expansion
                back = mm(basis_all[ts_i], d)                       # (L, BC)
                ts_i += 1

            # denorm + MTSDNet clamp + residual backcast update
            back = back * std_r + mean_r
            low = min_r - 0.1 * jnp.abs(min_r)
            high = max_r + 0.1 * jnp.abs(max_r)
            back = jnp.minimum(jnp.maximum(back, low), high)
            backcast = xb - back

            # --- classify_fc head -------------------------------------------
            # layer 1: per-feature lane-tiled weights (per-channel rows baked
            # into the lane pattern), then one per-batch lane aggregation.
            feats = [d[k:k + 1, :] for k in range(D)]
            feats += [mean_r, std_r, min_r, max_r]
            yt = wcls1_all[blk * nf] * feats[0]
            for k in range(1, nf):
                yt = yt + wcls1_all[blk * nf + k] * feats[k]        # (H, BC)
            y = jnp.maximum(mm(yt, agg) + bc1_all[blk], 0.0)        # (H, bc)
            y = jnp.maximum(mm(wc2_all[blk], y) + bc2_all[blk], 0.0)
            # wc3/bc3 pre-scaled by softmax(w)[blk] -> accumulate weighted sum
            pred = pred + mm(wc3_all[blk], y) + bc3_all[blk]        # (OUT, bc)

        pred_ref[0] = pred

    return kernel


# ----------------------------------------------------------------------------
# Host-side packing of per-block parameters into the fused kernel's args.
# ----------------------------------------------------------------------------
def pack_mtsdnet_params(blocks, types, softmax_w, bc):
    args = [
        jnp.stack([p["w1"] for p in blocks]),                           # (nb,H,L)
        jnp.stack([p[n] for p in blocks for n in ("w2", "w3", "w4")]),  # (3nb,H,H)
        jnp.stack([p["wdim"] for p in blocks]),                         # (nb,D,H)
    ]
    ts_blocks = [p for p, t in zip(blocks, types) if t != "generic"]
    g_blocks = [p for p, t in zip(blocks, types) if t == "generic"]
    if ts_blocks:
        args.append(jnp.stack([p["basisT"] for p in ts_blocks]))        # (nts,L,D)
    if g_blocks:
        args.append(jnp.stack([p["wg1"] for p in g_blocks]))            # (ng,H,D)
        args.append(jnp.stack([p["bg1"] for p in g_blocks]))            # (ng,H,1)
        args.append(jnp.stack([p["wg2"] for p in g_blocks]))            # (ng,L,H)
        args.append(jnp.stack([p["bg2"] for p in g_blocks]))            # (ng,L,1)
    # classify layer 1: (D+4, H, C) -> lane-tiled (D+4, H, bc*C), flat over blocks
    args.append(jnp.concatenate(
        [jnp.tile(p["wc1"], (1, 1, bc)) for p in blocks], axis=0))      # (nb*(D+4),H,BC)
    args.append(jnp.stack([p["bc1"] for p in blocks]))                  # (nb,H,1)
    args.append(jnp.stack([p["wc2"] for p in blocks]))                  # (nb,H,H)
    args.append(jnp.stack([p["bc2"] for p in blocks]))                  # (nb,H,1)
    # fold softmax block weights into the final classify linear layer
    args.append(jnp.stack([p["wc3"] * softmax_w[i]
                           for i, p in enumerate(blocks)]))             # (nb,OUT,H)
    args.append(jnp.stack([p["bc3"] * softmax_w[i]
                           for i, p in enumerate(blocks)]))             # (nb,OUT,1)
    return args


def mtsdnet_forward(x, params):
    """Full MTSDNet forward.  x: (B, L, C) -> (B, OUT)."""
    B, L, C = x.shape
    types = tuple(params["types"])
    blocks = params["blocks"]
    OUT = blocks[0]["wc3"].shape[0]

    # Single batch chunk: all of B*C is packed onto the lane axis.
    # TODO(synk): for large B, split into batch chunks with chunk*C a multiple
    # of 128 and keep this grid axis "parallel" (exploits v7x's 2 TensorCores).
    bc = B
    nc = 1
    BC = bc * C

    # lane packing: (B, L, C) -> (L, B*C), lane index = b*C + c
    xp = jnp.transpose(x, (1, 0, 2)).reshape(L, B * C)

    softmax_w = jax.nn.softmax(params["w"])
    # lane -> batch aggregation matrix (sums the C channel lanes of each batch)
    agg = jnp.asarray(np.kron(np.eye(bc, dtype=np.float32),
                              np.ones((C, 1), np.float32)))             # (BC, bc)

    weights = pack_mtsdnet_params(blocks, types, softmax_w, bc)
    inputs = [xp, agg] + weights

    in_specs = [pl.BlockSpec((L, BC), lambda i: (0, i))]
    in_specs += [pl.BlockSpec(a.shape, lambda i, nd=a.ndim: (0,) * nd)
                 for a in inputs[1:]]
    out_specs = pl.BlockSpec((1, OUT, bc), lambda i: (i, 0, 0))
    out_shape = jax.ShapeDtypeStruct((nc, OUT, bc), jnp.float32)

    pred = pl.pallas_call(
        make_fused_kernel(types),
        grid=(nc,),
        in_specs=in_specs,
        out_specs=out_specs,
        out_shape=out_shape,
        compiler_params=pltpu.CompilerParams(
            dimension_semantics=("parallel",)),
    )(*inputs)
    # (nc, OUT, bc) -> (B, OUT)
    return pred.transpose(0, 2, 1).reshape(B, OUT)


# ----------------------------------------------------------------------------
# Deterministic parameter construction (BN folded, weights re-laid-out).
# ----------------------------------------------------------------------------
def init_block_params(key, block_type, C, L, H, D, OUT):
    # eval-mode BN with fresh running stats -> pure scale 1/sqrt(1+eps)
    bn_s = np.float32(1.0 / np.sqrt(1.0 + 1e-5))
    ks = iter(jax.random.split(key, 16))

    def rnd(shape, scale=0.1):
        return jax.random.normal(next(ks), shape, dtype=jnp.float32) * scale

    p = {}
    # basic_fc: Conv(L->H) + 3x Conv(H->H), bias-free, BN folded.
    p["w1"] = rnd((H, L)) * bn_s
    p["w2"] = rnd((H, H)) * bn_s
    p["w3"] = rnd((H, H)) * bn_s
    p["w4"] = rnd((H, H)) * bn_s
    # dim_fc: Conv(H->D), no bias, tanh applied in kernel.
    p["wdim"] = rnd((D, H))

    if block_type == "trend":
        b_ls, _ = linspace_np(L, 0, centered=False)
        T = np.stack([b_ls ** i for i in range(D)]).astype(np.float32)
        T = T * np.float32(np.sqrt(1.0 / D))                   # (D, L)
        p["basisT"] = jnp.asarray(T.T)                         # (L, D)
    elif block_type == "seasonal":
        b_ls, _ = linspace_np(L, 0, centered=False)
        p1n, p2n = (D // 2, D // 2) if D % 2 == 0 else (D // 2, D // 2 + 1)
        s1 = np.stack([np.cos(2 * np.pi * i * b_ls) for i in np.linspace(0, L, p1n)])
        s2 = np.stack([np.sin(2 * np.pi * i * b_ls) for i in np.linspace(0, L, p2n)])
        S = np.concatenate([s1, s2]).astype(np.float32)        # (D, L)
        p["basisT"] = jnp.asarray(S.T)                         # (L, D)
    else:  # generic_fc: Conv(D->H, bias)+BN+ReLU, Conv(H->L, bias)
        p["wg1"] = rnd((H, D)) * bn_s
        p["bg1"] = rnd((H, 1)) * bn_s
        p["wg2"] = rnd((L, H))
        p["bg2"] = rnd((L, 1))

    # classify_fc: Linear((D+4)C->H)+BN+ReLU, Linear(H->H)+BN+ReLU, Linear(H->OUT)
    W1 = rnd((H, (D + 4) * C)) * bn_s           # torch layout (out, in)
    b1 = rnd((H,)) * bn_s
    # torch input ordering: [dim.view(B,D*C) (d-major, c-minor), mean(C),
    # std(C), min(C), max(C)]  ->  reorder to (D+4, H, C) for the kernel.
    p["wc1"] = jnp.transpose(W1.reshape(H, D + 4, C), (1, 0, 2))
    p["bc1"] = b1.reshape(H, 1)
    p["wc2"] = rnd((H, H)) * bn_s
    p["bc2"] = (rnd((H,)) * bn_s).reshape(H, 1)
    p["wc3"] = rnd((OUT, H))
    p["bc3"] = rnd((OUT,)).reshape(OUT, 1)
    return p


# ----------------------------------------------------------------------------
# Pure-JAX reference (same folded parameters) for a correctness check.
# ----------------------------------------------------------------------------
def ref_block(x, p, bt):
    relu = jax.nn.relu
    mean = jnp.mean(x, axis=1, keepdims=True)
    var = jnp.mean((x - mean) ** 2, axis=1, keepdims=True)
    std = jnp.sqrt(var) + 1e-5
    mn = jnp.min(x, axis=1, keepdims=True)
    mx = jnp.max(x, axis=1, keepdims=True)
    xn = (x - mean) / std
    a = relu(jnp.einsum("hl,blc->bhc", p["w1"], xn))
    a = relu(jnp.einsum("ij,bjc->bic", p["w2"], a))
    a = relu(jnp.einsum("ij,bjc->bic", p["w3"], a))
    a = relu(jnp.einsum("ij,bjc->bic", p["w4"], a))
    d = jnp.tanh(jnp.einsum("dh,bhc->bdc", p["wdim"], a))
    if bt == "generic":
        g = relu(jnp.einsum("hd,bdc->bhc", p["wg1"], d) + p["bg1"][None])
        back = jnp.einsum("lh,bhc->blc", p["wg2"], g) + p["bg2"][None]
    else:
        back = jnp.einsum("ld,bdc->blc", p["basisT"], d)
    back = back * std + mean
    low = mn - 0.1 * jnp.abs(mn)
    high = mx + 0.1 * jnp.abs(mx)
    back = jnp.minimum(jnp.maximum(back, low), high)
    new_backcast = x - back
    feat = jnp.concatenate([d, mean, std, mn, mx], axis=1)       # (B, D+4, C)
    y = jnp.einsum("bkc,khc->bh", feat, p["wc1"]) + p["bc1"][:, 0][None]
    y = relu(y)
    y = relu(y @ p["wc2"].T + p["bc2"][:, 0][None])
    y = y @ p["wc3"].T + p["bc3"][:, 0][None]
    return new_backcast, y


def mtsdnet_reference(x, params):
    backcast = x
    preds = []
    for p, bt in zip(params["blocks"], params["types"]):
        backcast, pred = ref_block(backcast, p, bt)
        preds.append(pred)
    w = jax.nn.softmax(params["w"])
    out = preds[0] * w[0]
    for i in range(1, len(preds)):
        out = out + preds[i] * w[i]
    return out


# ----------------------------------------------------------------------------
if __name__ == "__main__":
    # small, module-consistent shapes
    B, C, L, H, D, OUT = 2, 4, 8, 32, 5, 3
    structure = "tsg"                 # one trend, one seasonal, one generic

    key = jax.random.PRNGKey(0)
    keys = jax.random.split(key, len(structure) + 1)
    type_map = {"t": "trend", "s": "seasonal", "g": "generic"}
    types = [type_map[c] for c in structure]
    blocks = [init_block_params(keys[i], types[i], C, L, H, D, OUT)
              for i in range(len(structure))]
    params = {"blocks": blocks, "types": types,
              "w": jnp.ones((len(structure),), jnp.float32)}   # MTSDNet.w init

    # layout: x is (B, L, C) = (batch, seq length, channels), i.e. the PyTorch
    # model's input before its internal transpose(1, 2).
    x = jax.random.normal(keys[-1], (B, L, C), dtype=jnp.float32)

    out = mtsdnet_forward(x, params)
    out = jax.block_until_ready(out)

    ref = mtsdnet_reference(x, params)
    assert out.shape == (B, OUT)
    assert jnp.allclose(out, ref, rtol=2e-2, atol=2e-2), (out, ref)

    print("KERNEL_OK")
</pallas_src>

<mosaic_0001>
module attributes {stable_mosaic.version = 11 : i64} {
  func.func @kernel(%arg0: i32, %arg1: memref<8x8xf32, #tpu.memory_space<vmem>>, %arg2: memref<8x2xf32, #tpu.memory_space<vmem>>, %arg3: memref<3x32x8xf32, #tpu.memory_space<vmem>>, %arg4: memref<9x32x32xf32, #tpu.memory_space<vmem>>, %arg5: memref<3x5x32xf32, #tpu.memory_space<vmem>>, %arg6: memref<2x8x5xf32, #tpu.memory_space<vmem>>, %arg7: memref<1x32x5xf32, #tpu.memory_space<vmem>>, %arg8: memref<1x32x1xf32, #tpu.memory_space<vmem>>, %arg9: memref<1x8x32xf32, #tpu.memory_space<vmem>>, %arg10: memref<1x8x1xf32, #tpu.memory_space<vmem>>, %arg11: memref<27x32x8xf32, #tpu.memory_space<vmem>>, %arg12: memref<3x32x1xf32, #tpu.memory_space<vmem>>, %arg13: memref<3x32x32xf32, #tpu.memory_space<vmem>>, %arg14: memref<3x32x1xf32, #tpu.memory_space<vmem>>, %arg15: memref<3x3x32xf32, #tpu.memory_space<vmem>>, %arg16: memref<3x3x1xf32, #tpu.memory_space<vmem>>, %arg17: memref<1x3x2xf32, #tpu.memory_space<vmem>>) attributes {dimension_semantics = [#tpu.dimension_semantics<parallel>], iteration_bounds = array<i64: 1>, scalar_prefetch = 0 : i64, scratch_operands = 0 : i64, tpu.core_type = #tpu.core_type<tc>, window_params = [{transform_indices = @transform_0, window_bounds = array<i64: 8, 8>}, {pipeline_mode = #tpu.pipeline_mode<synchronous>, transform_indices = @transform_1, window_bounds = array<i64: 8, 2>}, {pipeline_mode = #tpu.pipeline_mode<synchronous>, transform_indices = @transform_2, window_bounds = array<i64: 3, 32, 8>}, {pipeline_mode = #tpu.pipeline_mode<synchronous>, transform_indices = @transform_3, window_bounds = array<i64: 9, 32, 32>}, {pipeline_mode = #tpu.pipeline_mode<synchronous>, transform_indices = @transform_4, window_bounds = array<i64: 3, 5, 32>}, {pipeline_mode = #tpu.pipeline_mode<synchronous>, transform_indices = @transform_5, window_bounds = array<i64: 2, 8, 5>}, {pipeline_mode = #tpu.pipeline_mode<synchronous>, transform_indices = @transform_6, window_bounds = array<i64: 1, 32, 5>}, {pipeline_mode = #tpu.pipeline_mode<synchronous>, transform_indices = @transform_7, window_bounds = array<i64: 1, 32, 1>}, {pipeline_mode = #tpu.pipeline_mode<synchronous>, transform_indices = @transform_8, window_bounds = array<i64: 1, 8, 32>}, {pipeline_mode = #tpu.pipeline_mode<synchronous>, transform_indices = @transform_9, window_bounds = array<i64: 1, 8, 1>}, {pipeline_mode = #tpu.pipeline_mode<synchronous>, transform_indices = @transform_10, window_bounds = array<i64: 27, 32, 8>}, {pipeline_mode = #tpu.pipeline_mode<synchronous>, transform_indices = @transform_11, window_bounds = array<i64: 3, 32, 1>}, {pipeline_mode = #tpu.pipeline_mode<synchronous>, transform_indices = @transform_12, window_bounds = array<i64: 3, 32, 32>}, {pipeline_mode = #tpu.pipeline_mode<synchronous>, transform_indices = @transform_13, window_bounds = array<i64: 3, 32, 1>}, {pipeline_mode = #tpu.pipeline_mode<synchronous>, transform_indices = @transform_14, window_bounds = array<i64: 3, 3, 32>}, {pipeline_mode = #tpu.pipeline_mode<synchronous>, transform_indices = @transform_15, window_bounds = array<i64: 3, 3, 1>}, {transform_indices = @transform_16, window_bounds = array<i64: 1, 3, 2>}]} {
    %c0 = arith.constant 0 : index
    %c0_0 = arith.constant 0 : index
    %0 = vector.load %arg1[%c0, %c0_0] : memref<8x8xf32, #tpu.memory_space<vmem>>, vector<8x8xf32>
    %c0_1 = arith.constant 0 : index
    %c0_2 = arith.constant 0 : index
    %1 = vector.load %arg2[%c0_1, %c0_2] : memref<8x2xf32, #tpu.memory_space<vmem>>, vector<8x2xf32>
    %cst = arith.constant 0.000000e+00 : f32
    %2 = vector.broadcast %cst : f32 to vector<3x2xf32>
    %cst_3 = arith.constant dense<0.000000e+00> : vector<8xf32>
    %3 = vector.multi_reduction <add>, %0, %cst_3 [0] : vector<8x8xf32> to vector<8xf32>
    %4 = vector.shape_cast %3 : vector<8xf32> to vector<1x8xf32>
    %cst_4 = arith.constant 8.000000e+00 : f32
    %5 = vector.broadcast %cst_4 : f32 to vector<1x8xf32>
    %6 = arith.divf %4, %5 : vector<1x8xf32>
    %7 = vector.broadcast %6 : vector<1x8xf32> to vector<8x8xf32>
    %8 = arith.subf %0, %7 : vector<8x8xf32>
    %9 = arith.mulf %8, %8 : vector<8x8xf32>
    %cst_5 = arith.constant dense<0.000000e+00> : vector<8xf32>
    %10 = vector.multi_reduction <add>, %9, %cst_5 [0] : vector<8x8xf32> to vector<8xf32>
    %11 = vector.shape_cast %10 : vector<8xf32> to vector<1x8xf32>
    %cst_6 = arith.constant 8.000000e+00 : f32
    %12 = vector.broadcast %cst_6 : f32 to vector<1x8xf32>
    %13 = arith.divf %11, %12 : vector<1x8xf32>
    %14 = math.sqrt %13 : vector<1x8xf32>
    %cst_7 = arith.constant 9.99999974E-6 : f32
    %15 = vector.broadcast %cst_7 : f32 to vector<1x8xf32>
    %16 = arith.addf %14, %15 : vector<1x8xf32>
    %cst_8 = arith.constant dense<0x7F800000> : vector<8xf32>
    %17 = vector.multi_reduction <minimumf>, %0, %cst_8 [0] : vector<8x8xf32> to vector<8xf32>
    %18 = vector.shape_cast %17 : vector<8xf32> to vector<1x8xf32>
    %cst_9 = arith.constant dense<0xFF800000> : vector<8xf32>
    %19 = vector.multi_reduction <maximumf>, %0, %cst_9 [0] : vector<8x8xf32> to vector<8xf32>
    %20 = vector.shape_cast %19 : vector<8xf32> to vector<1x8xf32>
    %21 = tpu.reciprocal %16 {approx = true} : vector<1x8xf32> -> vector<1x8xf32>
    %22 = vector.broadcast %6 : vector<1x8xf32> to vector<8x8xf32>
    %23 = arith.subf %0, %22 : vector<8x8xf32>
    %24 = vector.broadcast %21 : vector<1x8xf32> to vector<8x8xf32>
    %25 = arith.mulf %23, %24 : vector<8x8xf32>
    %c0_10 = arith.constant 0 : index
    %c0_11 = arith.constant 0 : index
    %c0_12 = arith.constant 0 : index
    %26 = vector.load %arg3[%c0_10, %c0_11, %c0_12] : memref<3x32x8xf32, #tpu.memory_space<vmem>>, vector<1x32x8xf32>
    %27 = vector.shape_cast %26 : vector<1x32x8xf32> to vector<32x8xf32>
    %cst_13 = arith.constant dense<0.000000e+00> : vector<32x8xf32>
    %28 = tpu.matmul %27, %25, %cst_13 {dimension_numbers = #tpu.dot_dimension_numbers<[1], [0], [0], [1], [0, 0, 1, 1], [], []>} : vector<32x8xf32>, vector<8x8xf32>, vector<32x8xf32> -> vector<32x8xf32>
    %cst_14 = arith.constant 0.000000e+00 : f32
    %29 = vector.broadcast %cst_14 : f32 to vector<32x8xf32>
    %30 = arith.maximumf %28, %29 : vector<32x8xf32>
    %c0_15 = arith.constant 0 : index
    %c0_16 = arith.constant 0 : index
    %c0_17 = arith.constant 0 : index
    %31 = vector.load %arg4[%c0_15, %c0_16, %c0_17] : memref<9x32x32xf32, #tpu.memory_space<vmem>>, vector<1x32x32xf32>
    %32 = vector.shape_cast %31 : vector<1x32x32xf32> to vector<32x32xf32>
    %cst_18 = arith.constant dense<0.000000e+00> : vector<32x8xf32>
    %33 = tpu.matmul %32, %30, %cst_18 {dimension_numbers = #tpu.dot_dimension_numbers<[1], [0], [0], [1], [0, 0, 1, 1], [], []>} : vector<32x32xf32>, vector<32x8xf32>, vector<32x8xf32> -> vector<32x8xf32>
    %cst_19 = arith.constant 0.000000e+00 : f32
    %34 = vector.broadcast %cst_19 : f32 to vector<32x8xf32>
    %35 = arith.maximumf %33, %34 : vector<32x8xf32>
    %c1 = arith.constant 1 : index
    %c0_20 = arith.constant 0 : index
    %c0_21 = arith.constant 0 : index
    %36 = vector.load %arg4[%c1, %c0_20, %c0_21] : memref<9x32x32xf32, #tpu.memory_space<vmem>>, vector<1x32x32xf32>
    %37 = vector.shape_cast %36 : vector<1x32x32xf32> to vector<32x32xf32>
    %cst_22 = arith.constant dense<0.000000e+00> : vector<32x8xf32>
    %38 = tpu.matmul %37, %35, %cst_22 {dimension_numbers = #tpu.dot_dimension_numbers<[1], [0], [0], [1], [0, 0, 1, 1], [], []>} : vector<32x32xf32>, vector<32x8xf32>, vector<32x8xf32> -> vector<32x8xf32>
    %cst_23 = arith.constant 0.000000e+00 : f32
    %39 = vector.broadcast %cst_23 : f32 to vector<32x8xf32>
    %40 = arith.maximumf %38, %39 : vector<32x8xf32>
    %c2 = arith.constant 2 : index
    %c0_24 = arith.constant 0 : index
    %c0_25 = arith.constant 0 : index
    %41 = vector.load %arg4[%c2, %c0_24, %c0_25] : memref<9x32x32xf32, #tpu.memory_space<vmem>>, vector<1x32x32xf32>
    %42 = vector.shape_cast %41 : vector<1x32x32xf32> to vector<32x32xf32>
    %cst_26 = arith.constant dense<0.000000e+00> : vector<32x8xf32>
    %43 = tpu.matmul %42, %40, %cst_26 {dimension_numbers = #tpu.dot_dimension_numbers<[1], [0], [0], [1], [0, 0, 1, 1], [], []>} : vector<32x32xf32>, vector<32x8xf32>, vector<32x8xf32> -> vector<32x8xf32>
    %cst_27 = arith.constant 0.000000e+00 : f32
    %44 = vector.broadcast %cst_27 : f32 to vector<32x8xf32>
    %45 = arith.maximumf %43, %44 : vector<32x8xf32>
    %c0_28 = arith.constant 0 : index
    %c0_29 = arith.constant 0 : index
    %c0_30 = arith.constant 0 : index
    %46 = vector.load %arg5[%c0_28, %c0_29, %c0_30] : memref<3x5x32xf32, #tpu.memory_space<vmem>>, vector<1x5x32xf32>
    %47 = vector.shape_cast %46 : vector<1x5x32xf32> to vector<5x32xf32>
    %cst_31 = arith.constant dense<0.000000e+00> : vector<5x8xf32>
    %48 = tpu.matmul %47, %45, %cst_31 {dimension_numbers = #tpu.dot_dimension_numbers<[1], [0], [0], [1], [0, 0, 1, 1], [], []>} : vector<5x32xf32>, vector<32x8xf32>, vector<5x8xf32> -> vector<5x8xf32>
    %49 = math.tanh %48 : vector<5x8xf32>
    %c0_32 = arith.constant 0 : index
    %c0_33 = arith.constant 0 : index
    %c0_34 = arith.constant 0 : index
    %50 = vector.load %arg6[%c0_32, %c0_33, %c0_34] : memref<2x8x5xf32, #tpu.memory_space<vmem>>, vector<1x8x5xf32>
    %51 = vector.shape_cast %50 : vector<1x8x5xf32> to vector<8x5xf32>
    %cst_35 = arith.constant dense<0.000000e+00> : vector<8x8xf32>
    %52 = tpu.matmul %51, %49, %cst_35 {dimension_numbers = #tpu.dot_dimension_numbers<[1], [0], [0], [1], [0, 0, 1, 1], [], []>} : vector<8x5xf32>, vector<5x8xf32>, vector<8x8xf32> -> vector<8x8xf32>
    %53 = vector.broadcast %16 : vector<1x8xf32> to vector<8x8xf32>
    %54 = arith.mulf %52, %53 : vector<8x8xf32>
    %55 = vector.broadcast %6 : vector<1x8xf32> to vector<8x8xf32>
    %56 = arith.addf %54, %55 : vector<8x8xf32>
    %57 = math.absf %18 : vector<1x8xf32>
    %cst_36 = arith.constant 1.000000e-01 : f32
    %58 = vector.broadcast %cst_36 : f32 to vector<1x8xf32>
    %59 = arith.mulf %58, %57 : vector<1x8xf32>
    %60 = arith.subf %18, %59 : vector<1x8xf32>
    %61 = math.absf %20 : vector<1x8xf32>
    %cst_37 = arith.constant 1.000000e-01 : f32
    %62 = vector.broadcast %cst_37 : f32 to vector<1x8xf32>
    %63 = arith.mulf %62, %61 : vector<1x8xf32>
    %64 = arith.addf %20, %63 : vector<1x8xf32>
    %65 = vector.broadcast %60 : vector<1x8xf32> to vector<8x8xf32>
    %66 = arith.maximumf %56, %65 : vector<8x8xf32>
    %67 = vector.broadcast %64 : vector<1x8xf32> to vector<8x8xf32>
    %68 = arith.minimumf %66, %67 : vector<8x8xf32>
    %69 = arith.subf %0, %68 : vector<8x8xf32>
    %70 = vector.extract_strided_slice %49 {offsets = [0, 0], sizes = [1, 8], strides = [1, 1]} : vector<5x8xf32> to vector<1x8xf32>
    %71 = vector.extract_strided_slice %49 {offsets = [1, 0], sizes = [1, 8], strides = [1, 1]} : vector<5x8xf32> to vector<1x8xf32>
    %72 = vector.extract_strided_slice %49 {offsets = [2, 0], sizes = [1, 8], strides = [1, 1]} : vector<5x8xf32> to vector<1x8xf32>
    %73 = vector.extract_strided_slice %49 {offsets = [3, 0], sizes = [1, 8], strides = [1, 1]} : vector<5x8xf32> to vector<1x8xf32>
    %74 = vector.extract_strided_slice %49 {offsets = [4, 0], sizes = [1, 8], strides = [1, 1]} : vector<5x8xf32> to vector<1x8xf32>
    %c0_38 = arith.constant 0 : index
    %c0_39 = arith.constant 0 : index
    %c0_40 = arith.constant 0 : index
    %75 = vector.load %arg11[%c0_38, %c0_39, %c0_40] : memref<27x32x8xf32, #tpu.memory_space<vmem>>, vector<1x32x8xf32>
    %76 = vector.shape_cast %75 : vector<1x32x8xf32> to vector<32x8xf32>
    %77 = vector.broadcast %70 : vector<1x8xf32> to vector<32x8xf32>
    %78 = arith.mulf %76, %77 : vector<32x8xf32>
    %c1_41 = arith.constant 1 : index
    %c0_42 = arith.constant 0 : index
    %c0_43 = arith.constant 0 : index
    %79 = vector.load %arg11[%c1_41, %c0_42, %c0_43] : memref<27x32x8xf32, #tpu.memory_space<vmem>>, vector<1x32x8xf32>
    %80 = vector.shape_cast %79 : vector<1x32x8xf32> to vector<32x8xf32>
    %81 = vector.broadcast %71 : vector<1x8xf32> to vector<32x8xf32>
    %82 = arith.mulf %80, %81 : vector<32x8xf32>
    %83 = arith.addf %78, %82 : vector<32x8xf32>
    %c2_44 = arith.constant 2 : index
    %c0_45 = arith.constant 0 : index
    %c0_46 = arith.constant 0 : index
    %84 = vector.load %arg11[%c2_44, %c0_45, %c0_46] : memref<27x32x8xf32, #tpu.memory_space<vmem>>, vector<1x32x8xf32>
    %85 = vector.shape_cast %84 : vector<1x32x8xf32> to vector<32x8xf32>
    %86 = vector.broadcast %72 : vector<1x8xf32> to vector<32x8xf32>
    %87 = arith.mulf %85, %86 : vector<32x8xf32>
    %88 = arith.addf %83, %87 : vector<32x8xf32>
    %c3 = arith.constant 3 : index
    %c0_47 = arith.constant 0 : index
    %c0_48 = arith.constant 0 : index
    %89 = vector.load %arg11[%c3, %c0_47, %c0_48] : memref<27x32x8xf32, #tpu.memory_space<vmem>>, vector<1x32x8xf32>
    %90 = vector.shape_cast %89 : vector<1x32x8xf32> to vector<32x8xf32>
    %91 = vector.broadcast %73 : vector<1x8xf32> to vector<32x8xf32>
    %92 = arith.mulf %90, %91 : vector<32x8xf32>
    %93 = arith.addf %88, %92 : vector<32x8xf32>
    %c4 = arith.constant 4 : index
    %c0_49 = arith.constant 0 : index
    %c0_50 = arith.constant 0 : index
    %94 = vector.load %arg11[%c4, %c0_49, %c0_50] : memref<27x32x8xf32, #tpu.memory_space<vmem>>, vector<1x32x8xf32>
    %95 = vector.shape_cast %94 : vector<1x32x8xf32> to vector<32x8xf32>
    %96 = vector.broadcast %74 : vector<1x8xf32> to vector<32x8xf32>
    %97 = arith.mulf %95, %96 : vector<32x8xf32>
    %98 = arith.addf %93, %97 : vector<32x8xf32>
    %c5 = arith.constant 5 : index
    %c0_51 = arith.constant 0 : index
    %c0_52 = arith.constant 0 : index
    %99 = vector.load %arg11[%c5, %c0_51, %c0_52] : memref<27x32x8xf32, #tpu.memory_space<vmem>>, vector<1x32x8xf32>
    %100 = vector.shape_cast %99 : vector<1x32x8xf32> to vector<32x8xf32>
    %101 = vector.broadcast %6 : vector<1x8xf32> to vector<32x8xf32>
    %102 = arith.mulf %100, %101 : vector<32x8xf32>
    %103 = arith.addf %98, %102 : vector<32x8xf32>
    %c6 = arith.constant 6 : index
    %c0_53 = arith.constant 0 : index
    %c0_54 = arith.constant 0 : index
    %104 = vector.load %arg11[%c6, %c0_53, %c0_54] : memref<27x32x8xf32, #tpu.memory_space<vmem>>, vector<1x32x8xf32>
    %105 = vector.shape_cast %104 : vector<1x32x8xf32> to vector<32x8xf32>
    %106 = vector.broadcast %16 : vector<1x8xf32> to vector<32x8xf32>
    %107 = arith.mulf %105, %106 : vector<32x8xf32>
    %108 = arith.addf %103, %107 : vector<32x8xf32>
    %c7 = arith.constant 7 : index
    %c0_55 = arith.constant 0 : index
    %c0_56 = arith.constant 0 : index
    %109 = vector.load %arg11[%c7, %c0_55, %c0_56] : memref<27x32x8xf32, #tpu.memory_space<vmem>>, vector<1x32x8xf32>
    %110 = vector.shape_cast %109 : vector<1x32x8xf32> to vector<32x8xf32>
    %111 = vector.broadcast %18 : vector<1x8xf32> to vector<32x8xf32>
    %112 = arith.mulf %110, %111 : vector<32x8xf32>
    %113 = arith.addf %108, %112 : vector<32x8xf32>
    %c8 = arith.constant 8 : index
    %c0_57 = arith.constant 0 : index
    %c0_58 = arith.constant 0 : index
    %114 = vector.load %arg11[%c8, %c0_57, %c0_58] : memref<27x32x8xf32, #tpu.memory_space<vmem>>, vector<1x32x8xf32>
    %115 = vector.shape_cast %114 : vector<1x32x8xf32> to vector<32x8xf32>
    %116 = vector.broadcast %20 : vector<1x8xf32> to vector<32x8xf32>
    %117 = arith.mulf %115, %116 : vector<32x8xf32>
    %118 = arith.addf %113, %117 : vector<32x8xf32>
    %cst_59 = arith.constant dense<0.000000e+00> : vector<32x2xf32>
    %119 = tpu.matmul %118, %1, %cst_59 {dimension_numbers = #tpu.dot_dimension_numbers<[1], [0], [0], [1], [0, 0, 1, 1], [], []>} : vector<32x8xf32>, vector<8x2xf32>, vector<32x2xf32> -> vector<32x2xf32>
    %c0_60 = arith.constant 0 : index
    %c0_61 = arith.constant 0 : index
    %c0_62 = arith.constant 0 : index
    %120 = vector.load %arg12[%c0_60, %c0_61, %c0_62] : memref<3x32x1xf32, #tpu.memory_space<vmem>>, vector<1x32x1xf32>
    %121 = vector.shape_cast %120 : vector<1x32x1xf32> to vector<32x1xf32>
    %122 = vector.broadcast %121 : vector<32x1xf32> to vector<32x2xf32>
    %123 = arith.addf %119, %122 : vector<32x2xf32>
    %cst_63 = arith.constant 0.000000e+00 : f32
    %124 = vector.broadcast %cst_63 : f32 to vector<32x2xf32>
    %125 = arith.maximumf %123, %124 : vector<32x2xf32>
    %c0_64 = arith.constant 0 : index
    %c0_65 = arith.constant 0 : index
    %c0_66 = arith.constant 0 : index
    %126 = vector.load %arg13[%c0_64, %c0_65, %c0_66] : memref<3x32x32xf32, #tpu.memory_space<vmem>>, vector<1x32x32xf32>
    %127 = vector.shape_cast %126 : vector<1x32x32xf32> to vector<32x32xf32>
    %cst_67 = arith.constant dense<0.000000e+00> : vector<32x2xf32>
    %128 = tpu.matmul %127, %125, %cst_67 {dimension_numbers = #tpu.dot_dimension_numbers<[1], [0], [0], [1], [0, 0, 1, 1], [], []>} : vector<32x32xf32>, vector<32x2xf32>, vector<32x2xf32> -> vector<32x2xf32>
    %c0_68 = arith.constant 0 : index
    %c0_69 = arith.constant 0 : index
    %c0_70 = arith.constant 0 : index
    %129 = vector.load %arg14[%c0_68, %c0_69, %c0_70] : memref<3x32x1xf32, #tpu.memory_space<vmem>>, vector<1x32x1xf32>
    %130 = vector.shape_cast %129 : vector<1x32x1xf32> to vector<32x1xf32>
    %131 = vector.broadcast %130 : vector<32x1xf32> to vector<32x2xf32>
    %132 = arith.addf %128, %131 : vector<32x2xf32>
    %cst_71 = arith.constant 0.000000e+00 : f32
    %133 = vector.broadcast %cst_71 : f32 to vector<32x2xf32>
    %134 = arith.maximumf %132, %133 : vector<32x2xf32>
    %c0_72 = arith.constant 0 : index
    %c0_73 = arith.constant 0 : index
    %c0_74 = arith.constant 0 : index
    %135 = vector.load %arg15[%c0_72, %c0_73, %c0_74] : memref<3x3x32xf32, #tpu.memory_space<vmem>>, vector<1x3x32xf32>
    %136 = vector.shape_cast %135 : vector<1x3x32xf32> to vector<3x32xf32>
    %cst_75 = arith.constant dense<0.000000e+00> : vector<3x2xf32>
    %137 = tpu.matmul %136, %134, %cst_75 {dimension_numbers = #tpu.dot_dimension_numbers<[1], [0], [0], [1], [0, 0, 1, 1], [], []>} : vector<3x32xf32>, vector<32x2xf32>, vector<3x2xf32> -> vector<3x2xf32>
    %138 = arith.addf %2, %137 : vector<3x2xf32>
    %c0_76 = arith.constant 0 : index
    %c0_77 = arith.constant 0 : index
    %c0_78 = arith.constant 0 : index
    %139 = vector.load %arg16[%c0_76, %c0_77, %c0_78] : memref<3x3x1xf32, #tpu.memory_space<vmem>>, vector<1x3x1xf32>
    %140 = vector.shape_cast %139 : vector<1x3x1xf32> to vector<3x1xf32>
    %141 = vector.broadcast %140 : vector<3x1xf32> to vector<3x2xf32>
    %142 = arith.addf %138, %141 : vector<3x2xf32>
    %cst_79 = arith.constant dense<0.000000e+00> : vector<8xf32>
    %143 = vector.multi_reduction <add>, %69, %cst_79 [0] : vector<8x8xf32> to vector<8xf32>
    %144 = vector.shape_cast %143 : vector<8xf32> to vector<1x8xf32>
    %cst_80 = arith.constant 8.000000e+00 : f32
    %145 = vector.broadcast %cst_80 : f32 to vector<1x8xf32>
    %146 = arith.divf %144, %145 : vector<1x8xf32>
    %147 = vector.broadcast %146 : vector<1x8xf32> to vector<8x8xf32>
    %148 = arith.subf %69, %147 : vector<8x8xf32>
    %149 = arith.mulf %148, %148 : vector<8x8xf32>
    %cst_81 = arith.constant dense<0.000000e+00> : vector<8xf32>
    %150 = vector.multi_reduction <add>, %149, %cst_81 [0] : vector<8x8xf32> to vector<8xf32>
    %151 = vector.shape_cast %150 : vector<8xf32> to vector<1x8xf32>
    %cst_82 = arith.constant 8.000000e+00 : f32
    %152 = vector.broadcast %cst_82 : f32 to vector<1x8xf32>
    %153 = arith.divf %151, %152 : vector<1x8xf32>
    %154 = math.sqrt %153 : vector<1x8xf32>
    %cst_83 = arith.constant 9.99999974E-6 : f32
    %155 = vector.broadcast %cst_83 : f32 to vector<1x8xf32>
    %156 = arith.addf %154, %155 : vector<1x8xf32>
    %cst_84 = arith.constant dense<0x7F800000> : vector<8xf32>
    %157 = vector.multi_reduction <minimumf>, %69, %cst_84 [0] : vector<8x8xf32> to vector<8xf32>
    %158 = vector.shape_cast %157 : vector<8xf32> to vector<1x8xf32>
    %cst_85 = arith.constant dense<0xFF800000> : vector<8xf32>
    %159 = vector.multi_reduction <maximumf>, %69, %cst_85 [0] : vector<8x8xf32> to vector<8xf32>
    %160 = vector.shape_cast %159 : vector<8xf32> to vector<1x8xf32>
    %161 = tpu.reciprocal %156 {approx = true} : vector<1x8xf32> -> vector<1x8xf32>
    %162 = vector.broadcast %146 : vector<1x8xf32> to vector<8x8xf32>
    %163 = arith.subf %69, %162 : vector<8x8xf32>
    %164 = vector.broadcast %161 : vector<1x8xf32> to vector<8x8xf32>
    %165 = arith.mulf %163, %164 : vector<8x8xf32>
    %c1_86 = arith.constant 1 : index
    %c0_87 = arith.constant 0 : index
    %c0_88 = arith.constant 0 : index
    %166 = vector.load %arg3[%c1_86, %c0_87, %c0_88] : memref<3x32x8xf32, #tpu.memory_space<vmem>>, vector<1x32x8xf32>
    %167 = vector.shape_cast %166 : vector<1x32x8xf32> to vector<32x8xf32>
    %cst_89 = arith.constant dense<0.000000e+00> : vector<32x8xf32>
    %168 = tpu.matmul %167, %165, %cst_89 {dimension_numbers = #tpu.dot_dimension_numbers<[1], [0], [0], [1], [0, 0, 1, 1], [], []>} : vector<32x8xf32>, vector<8x8xf32>, vector<32x8xf32> -> vector<32x8xf32>
    %cst_90 = arith.constant 0.000000e+00 : f32
    %169 = vector.broadcast %cst_90 : f32 to vector<32x8xf32>
    %170 = arith.maximumf %168, %169 : vector<32x8xf32>
    %c3_91 = arith.constant 3 : index
    %c0_92 = arith.constant 0 : index
    %c0_93 = arith.constant 0 : index
    %171 = vector.load %arg4[%c3_91, %c0_92, %c0_93] : memref<9x32x32xf32, #tpu.memory_space<vmem>>, vector<1x32x32xf32>
    %172 = vector.shape_cast %171 : vector<1x32x32xf32> to vector<32x32xf32>
    %cst_94 = arith.constant dense<0.000000e+00> : vector<32x8xf32>
    %173 = tpu.matmul %172, %170, %cst_94 {dimension_numbers = #tpu.dot_dimension_numbers<[1], [0], [0], [1], [0, 0, 1, 1], [], []>} : vector<32x32xf32>, vector<32x8xf32>, vector<32x8xf32> -> vector<32x8xf32>
    %cst_95 = arith.constant 0.000000e+00 : f32
    %174 = vector.broadcast %cst_95 : f32 to vector<32x8xf32>
    %175 = arith.maximumf %173, %174 : vector<32x8xf32>
    %c4_96 = arith.constant 4 : index
    %c0_97 = arith.constant 0 : index
    %c0_98 = arith.constant 0 : index
    %176 = vector.load %arg4[%c4_96, %c0_97, %c0_98] : memref<9x32x32xf32, #tpu.memory_space<vmem>>, vector<1x32x32xf32>
    %177 = vector.shape_cast %176 : vector<1x32x32xf32> to vector<32x32xf32>
    %cst_99 = arith.constant dense<0.000000e+00> : vector<32x8xf32>
    %178 = tpu.matmul %177, %175, %cst_99 {dimension_numbers = #tpu.dot_dimension_numbers<[1], [0], [0], [1], [0, 0, 1, 1], [], []>} : vector<32x32xf32>, vector<32x8xf32>, vector<32x8xf32> -> vector<32x8xf32>
    %cst_100 = arith.constant 0.000000e+00 : f32
    %179 = vector.broadcast %cst_100 : f32 to vector<32x8xf32>
    %180 = arith.maximumf %178, %179 : vector<32x8xf32>
    %c5_101 = arith.constant 5 : index
    %c0_102 = arith.constant 0 : index
    %c0_103 = arith.constant 0 : index
    %181 = vector.load %arg4[%c5_101, %c0_102, %c0_103] : memref<9x32x32xf32, #tpu.memory_space<vmem>>, vector<1x32x32xf32>
    %182 = vector.shape_cast %181 : vector<1x32x32xf32> to vector<32x32xf32>
    %cst_104 = arith.constant dense<0.000000e+00> : vector<32x8xf32>
    %183 = tpu.matmul %182, %180, %cst_104 {dimension_numbers = #tpu.dot_dimension_numbers<[1], [0], [0], [1], [0, 0, 1, 1], [], []>} : vector<32x32xf32>, vector<32x8xf32>, vector<32x8xf32> -> vector<32x8xf32>
    %cst_105 = arith.constant 0.000000e+00 : f32
    %184 = vector.broadcast %cst_105 : f32 to vector<32x8xf32>
    %185 = arith.maximumf %183, %184 : vector<32x8xf32>
    %c1_106 = arith.constant 1 : index
    %c0_107 = arith.constant 0 : index
    %c0_108 = arith.constant 0 : index
    %186 = vector.load %arg5[%c1_106, %c0_107, %c0_108] : memref<3x5x32xf32, #tpu.memory_space<vmem>>, vector<1x5x32xf32>
    %187 = vector.shape_cast %186 : vector<1x5x32xf32> to vector<5x32xf32>
    %cst_109 = arith.constant dense<0.000000e+00> : vector<5x8xf32>
    %188 = tpu.matmul %187, %185, %cst_109 {dimension_numbers = #tpu.dot_dimension_numbers<[1], [0], [0], [1], [0, 0, 1, 1], [], []>} : vector<5x32xf32>, vector<32x8xf32>, vector<5x8xf32> -> vector<5x8xf32>
    %189 = math.tanh %188 : vector<5x8xf32>
    %c1_110 = arith.constant 1 : index
    %c0_111 = arith.constant 0 : index
    %c0_112 = arith.constant 0 : index
    %190 = vector.load %arg6[%c1_110, %c0_111, %c0_112] : memref<2x8x5xf32, #tpu.memory_space<vmem>>, vector<1x8x5xf32>
    %191 = vector.shape_cast %190 : vector<1x8x5xf32> to vector<8x5xf32>
    %cst_113 = arith.constant dense<0.000000e+00> : vector<8x8xf32>
    %192 = tpu.matmul %191, %189, %cst_113 {dimension_numbers = #tpu.dot_dimension_numbers<[1], [0], [0], [1], [0, 0, 1, 1], [], []>} : vector<8x5xf32>, vector<5x8xf32>, vector<8x8xf32> -> vector<8x8xf32>
    %193 = vector.broadcast %156 : vector<1x8xf32> to vector<8x8xf32>
    %194 = arith.mulf %192, %193 : vector<8x8xf32>
    %195 = vector.broadcast %146 : vector<1x8xf32> to vector<8x8xf32>
    %196 = arith.addf %194, %195 : vector<8x8xf32>
    %197 = math.absf %158 : vector<1x8xf32>
    %cst_114 = arith.constant 1.000000e-01 : f32
    %198 = vector.broadcast %cst_114 : f32 to vector<1x8xf32>
    %199 = arith.mulf %198, %197 : vector<1x8xf32>
    %200 = arith.subf %158, %199 : vector<1x8xf32>
    %201 = math.absf %160 : vector<1x8xf32>
    %cst_115 = arith.constant 1.000000e-01 : f32
    %202 = vector.broadcast %cst_115 : f32 to vector<1x8xf32>
    %203 = arith.mulf %202, %201 : vector<1x8xf32>
    %204 = arith.addf %160, %203 : vector<1x8xf32>
    %205 = vector.broadcast %200 : vector<1x8xf32> to vector<8x8xf32>
    %206 = arith.maximumf %196, %205 : vector<8x8xf32>
    %207 = vector.broadcast %204 : vector<1x8xf32> to vector<8x8xf32>
    %208 = arith.minimumf %206, %207 : vector<8x8xf32>
    %209 = arith.subf %69, %208 : vector<8x8xf32>
    %210 = vector.extract_strided_slice %189 {offsets = [0, 0], sizes = [1, 8], strides = [1, 1]} : vector<5x8xf32> to vector<1x8xf32>
    %211 = vector.extract_strided_slice %189 {offsets = [1, 0], sizes = [1, 8], strides = [1, 1]} : vector<5x8xf32> to vector<1x8xf32>
    %212 = vector.extract_strided_slice %189 {offsets = [2, 0], sizes = [1, 8], strides = [1, 1]} : vector<5x8xf32> to vector<1x8xf32>
    %213 = vector.extract_strided_slice %189 {offsets = [3, 0], sizes = [1, 8], strides = [1, 1]} : vector<5x8xf32> to vector<1x8xf32>
    %214 = vector.extract_strided_slice %189 {offsets = [4, 0], sizes = [1, 8], strides = [1, 1]} : vector<5x8xf32> to vector<1x8xf32>
    %c9 = arith.constant 9 : index
    %c0_116 = arith.constant 0 : index
    %c0_117 = arith.constant 0 : index
    %215 = vector.load %arg11[%c9, %c0_116, %c0_117] : memref<27x32x8xf32, #tpu.memory_space<vmem>>, vector<1x32x8xf32>
    %216 = vector.shape_cast %215 : vector<1x32x8xf32> to vector<32x8xf32>
    %217 = vector.broadcast %210 : vector<1x8xf32> to vector<32x8xf32>
    %218 = arith.mulf %216, %217 : vector<32x8xf32>
    %c10 = arith.constant 10 : index
    %c0_118 = arith.constant 0 : index
    %c0_119 = arith.constant 0 : index
    %219 = vector.load %arg11[%c10, %c0_118, %c0_119] : memref<27x32x8xf32, #tpu.memory_space<vmem>>, vector<1x32x8xf32>
    %220 = vector.shape_cast %219 : vector<1x32x8xf32> to vector<32x8xf32>
    %221 = vector.broadcast %211 : vector<1x8xf32> to vector<32x8xf32>
    %222 = arith.mulf %220, %221 : vector<32x8xf32>
    %223 = arith.addf %218, %222 : vector<32x8xf32>
    %c11 = arith.constant 11 : index
    %c0_120 = arith.constant 0 : index
    %c0_121 = arith.constant 0 : index
    %224 = vector.load %arg11[%c11, %c0_120, %c0_121] : memref<27x32x8xf32, #tpu.memory_space<vmem>>, vector<1x32x8xf32>
    %225 = vector.shape_cast %224 : vector<1x32x8xf32> to vector<32x8xf32>
    %226 = vector.broadcast %212 : vector<1x8xf32> to vector<32x8xf32>
    %227 = arith.mulf %225, %226 : vector<32x8xf32>
    %228 = arith.addf %223, %227 : vector<32x8xf32>
    %c12 = arith.constant 12 : index
    %c0_122 = arith.constant 0 : index
    %c0_123 = arith.constant 0 : index
    %229 = vector.load %arg11[%c12, %c0_122, %c0_123] : memref<27x32x8xf32, #tpu.memory_space<vmem>>, vector<1x32x8xf32>
    %230 = vector.shape_cast %229 : vector<1x32x8xf32> to vector<32x8xf32>
    %231 = vector.broadcast %213 : vector<1x8xf32> to vector<32x8xf32>
    %232 = arith.mulf %230, %231 : vector<32x8xf32>
    %233 = arith.addf %228, %232 : vector<32x8xf32>
    %c13 = arith.constant 13 : index
    %c0_124 = arith.constant 0 : index
    %c0_125 = arith.constant 0 : index
    %234 = vector.load %arg11[%c13, %c0_124, %c0_125] : memref<27x32x8xf32, #tpu.memory_space<vmem>>, vector<1x32x8xf32>
    %235 = vector.shape_cast %234 : vector<1x32x8xf32> to vector<32x8xf32>
    %236 = vector.broadcast %214 : vector<1x8xf32> to vector<32x8xf32>
    %237 = arith.mulf %235, %236 : vector<32x8xf32>
    %238 = arith.addf %233, %237 : vector<32x8xf32>
    %c14 = arith.constant 14 : index
    %c0_126 = arith.constant 0 : index
    %c0_127 = arith.constant 0 : index
    %239 = vector.load %arg11[%c14, %c0_126, %c0_127] : memref<27x32x8xf32, #tpu.memory_space<vmem>>, vector<1x32x8xf32>
    %240 = vector.shape_cast %239 : vector<1x32x8xf32> to vector<32x8xf32>
    %241 = vector.broadcast %146 : vector<1x8xf32> to vector<32x8xf32>
    %242 = arith.mulf %240, %241 : vector<32x8xf32>
    %243 = arith.addf %238, %242 : vector<32x8xf32>
    %c15 = arith.constant 15 : index
    %c0_128 = arith.constant 0 : index
    %c0_129 = arith.constant 0 : index
    %244 = vector.load %arg11[%c15, %c0_128, %c0_129] : memref<27x32x8xf32, #tpu.memory_space<vmem>>, vector<1x32x8xf32>
    %245 = vector.shape_cast %244 : vector<1x32x8xf32> to vector<32x8xf32>
    %246 = vector.broadcast %156 : vector<1x8xf32> to vector<32x8xf32>
    %247 = arith.mulf %245, %246 : vector<32x8xf32>
    %248 = arith.addf %243, %247 : vector<32x8xf32>
    %c16 = arith.constant 16 : index
    %c0_130 = arith.constant 0 : index
    %c0_131 = arith.constant 0 : index
    %249 = vector.load %arg11[%c16, %c0_130, %c0_131] : memref<27x32x8xf32, #tpu.memory_space<vmem>>, vector<1x32x8xf32>
    %250 = vector.shape_cast %249 : vector<1x32x8xf32> to vector<32x8xf32>
    %251 = vector.broadcast %158 : vector<1x8xf32> to vector<32x8xf32>
    %252 = arith.mulf %250, %251 : vector<32x8xf32>
    %253 = arith.addf %248, %252 : vector<32x8xf32>
    %c17 = arith.constant 17 : index
    %c0_132 = arith.constant 0 : index
    %c0_133 = arith.constant 0 : index
    %254 = vector.load %arg11[%c17, %c0_132, %c0_133] : memref<27x32x8xf32, #tpu.memory_space<vmem>>, vector<1x32x8xf32>
    %255 = vector.shape_cast %254 : vector<1x32x8xf32> to vector<32x8xf32>
    %256 = vector.broadcast %160 : vector<1x8xf32> to vector<32x8xf32>
    %257 = arith.mulf %255, %256 : vector<32x8xf32>
    %258 = arith.addf %253, %257 : vector<32x8xf32>
    %cst_134 = arith.constant dense<0.000000e+00> : vector<32x2xf32>
    %259 = tpu.matmul %258, %1, %cst_134 {dimension_numbers = #tpu.dot_dimension_numbers<[1], [0], [0], [1], [0, 0, 1, 1], [], []>} : vector<32x8xf32>, vector<8x2xf32>, vector<32x2xf32> -> vector<32x2xf32>
    %c1_135 = arith.constant 1 : index
    %c0_136 = arith.constant 0 : index
    %c0_137 = arith.constant 0 : index
    %260 = vector.load %arg12[%c1_135, %c0_136, %c0_137] : memref<3x32x1xf32, #tpu.memory_space<vmem>>, vector<1x32x1xf32>
    %261 = vector.shape_cast %260 : vector<1x32x1xf32> to vector<32x1xf32>
    %262 = vector.broadcast %261 : vector<32x1xf32> to vector<32x2xf32>
    %263 = arith.addf %259, %262 : vector<32x2xf32>
    %cst_138 = arith.constant 0.000000e+00 : f32
    %264 = vector.broadcast %cst_138 : f32 to vector<32x2xf32>
    %265 = arith.maximumf %263, %264 : vector<32x2xf32>
    %c1_139 = arith.constant 1 : index
    %c0_140 = arith.constant 0 : index
    %c0_141 = arith.constant 0 : index
    %266 = vector.load %arg13[%c1_139, %c0_140, %c0_141] : memref<3x32x32xf32, #tpu.memory_space<vmem>>, vector<1x32x32xf32>
    %267 = vector.shape_cast %266 : vector<1x32x32xf32> to vector<32x32xf32>
    %cst_142 = arith.constant dense<0.000000e+00> : vector<32x2xf32>
    %268 = tpu.matmul %267, %265, %cst_142 {dimension_numbers = #tpu.dot_dimension_numbers<[1], [0], [0], [1], [0, 0, 1, 1], [], []>} : vector<32x32xf32>, vector<32x2xf32>, vector<32x2xf32> -> vector<32x2xf32>
    %c1_143 = arith.constant 1 : index
    %c0_144 = arith.constant 0 : index
    %c0_145 = arith.constant 0 : index
    %269 = vector.load %arg14[%c1_143, %c0_144, %c0_145] : memref<3x32x1xf32, #tpu.memory_space<vmem>>, vector<1x32x1xf32>
    %270 = vector.shape_cast %269 : vector<1x32x1xf32> to vector<32x1xf32>
    %271 = vector.broadcast %270 : vector<32x1xf32> to vector<32x2xf32>
    %272 = arith.addf %268, %271 : vector<32x2xf32>
    %cst_146 = arith.constant 0.000000e+00 : f32
    %273 = vector.broadcast %cst_146 : f32 to vector<32x2xf32>
    %274 = arith.maximumf %272, %273 : vector<32x2xf32>
    %c1_147 = arith.constant 1 : index
    %c0_148 = arith.constant 0 : index
    %c0_149 = arith.constant 0 : index
    %275 = vector.load %arg15[%c1_147, %c0_148, %c0_149] : memref<3x3x32xf32, #tpu.memory_space<vmem>>, vector<1x3x32xf32>
    %276 = vector.shape_cast %275 : vector<1x3x32xf32> to vector<3x32xf32>
    %cst_150 = arith.constant dense<0.000000e+00> : vector<3x2xf32>
    %277 = tpu.matmul %276, %274, %cst_150 {dimension_numbers = #tpu.dot_dimension_numbers<[1], [0], [0], [1], [0, 0, 1, 1], [], []>} : vector<3x32xf32>, vector<32x2xf32>, vector<3x2xf32> -> vector<3x2xf32>
    %278 = arith.addf %142, %277 : vector<3x2xf32>
    %c1_151 = arith.constant 1 : index
    %c0_152 = arith.constant 0 : index
    %c0_153 = arith.constant 0 : index
    %279 = vector.load %arg16[%c1_151, %c0_152, %c0_153] : memref<3x3x1xf32, #tpu.memory_space<vmem>>, vector<1x3x1xf32>
    %280 = vector.shape_cast %279 : vector<1x3x1xf32> to vector<3x1xf32>
    %281 = vector.broadcast %280 : vector<3x1xf32> to vector<3x2xf32>
    %282 = arith.addf %278, %281 : vector<3x2xf32>
    %cst_154 = arith.constant dense<0.000000e+00> : vector<8xf32>
    %283 = vector.multi_reduction <add>, %209, %cst_154 [0] : vector<8x8xf32> to vector<8xf32>
    %284 = vector.shape_cast %283 : vector<8xf32> to vector<1x8xf32>
    %cst_155 = arith.constant 8.000000e+00 : f32
    %285 = vector.broadcast %cst_155 : f32 to vector<1x8xf32>
    %286 = arith.divf %284, %285 : vector<1x8xf32>
    %287 = vector.broadcast %286 : vector<1x8xf32> to vector<8x8xf32>
    %288 = arith.subf %209, %287 : vector<8x8xf32>
    %289 = arith.mulf %288, %288 : vector<8x8xf32>
    %cst_156 = arith.constant dense<0.000000e+00> : vector<8xf32>
    %290 = vector.multi_reduction <add>, %289, %cst_156 [0] : vector<8x8xf32> to vector<8xf32>
    %291 = vector.shape_cast %290 : vector<8xf32> to vector<1x8xf32>
    %cst_157 = arith.constant 8.000000e+00 : f32
    %292 = vector.broadcast %cst_157 : f32 to vector<1x8xf32>
    %293 = arith.divf %291, %292 : vector<1x8xf32>
    %294 = math.sqrt %293 : vector<1x8xf32>
    %cst_158 = arith.constant 9.99999974E-6 : f32
    %295 = vector.broadcast %cst_158 : f32 to vector<1x8xf32>
    %296 = arith.addf %294, %295 : vector<1x8xf32>
    %cst_159 = arith.constant dense<0x7F800000> : vector<8xf32>
    %297 = vector.multi_reduction <minimumf>, %209, %cst_159 [0] : vector<8x8xf32> to vector<8xf32>
    %298 = vector.shape_cast %297 : vector<8xf32> to vector<1x8xf32>
    %cst_160 = arith.constant dense<0xFF800000> : vector<8xf32>
    %299 = vector.multi_reduction <maximumf>, %209, %cst_160 [0] : vector<8x8xf32> to vector<8xf32>
    %300 = vector.shape_cast %299 : vector<8xf32> to vector<1x8xf32>
    %301 = tpu.reciprocal %296 {approx = true} : vector<1x8xf32> -> vector<1x8xf32>
    %302 = vector.broadcast %286 : vector<1x8xf32> to vector<8x8xf32>
    %303 = arith.subf %209, %302 : vector<8x8xf32>
    %304 = vector.broadcast %301 : vector<1x8xf32> to vector<8x8xf32>
    %305 = arith.mulf %303, %304 : vector<8x8xf32>
    %c2_161 = arith.constant 2 : index
    %c0_162 = arith.constant 0 : index
    %c0_163 = arith.constant 0 : index
    %306 = vector.load %arg3[%c2_161, %c0_162, %c0_163] : memref<3x32x8xf32, #tpu.memory_space<vmem>>, vector<1x32x8xf32>
    %307 = vector.shape_cast %306 : vector<1x32x8xf32> to vector<32x8xf32>
    %cst_164 = arith.constant dense<0.000000e+00> : vector<32x8xf32>
    %308 = tpu.matmul %307, %305, %cst_164 {dimension_numbers = #tpu.dot_dimension_numbers<[1], [0], [0], [1], [0, 0, 1, 1], [], []>} : vector<32x8xf32>, vector<8x8xf32>, vector<32x8xf32> -> vector<32x8xf32>
    %cst_165 = arith.constant 0.000000e+00 : f32
    %309 = vector.broadcast %cst_165 : f32 to vector<32x8xf32>
    %310 = arith.maximumf %308, %309 : vector<32x8xf32>
    %c6_166 = arith.constant 6 : index
    %c0_167 = arith.constant 0 : index
    %c0_168 = arith.constant 0 : index
    %311 = vector.load %arg4[%c6_166, %c0_167, %c0_168] : memref<9x32x32xf32, #tpu.memory_space<vmem>>, vector<1x32x32xf32>
    %312 = vector.shape_cast %311 : vector<1x32x32xf32> to vector<32x32xf32>
    %cst_169 = arith.constant dense<0.000000e+00> : vector<32x8xf32>
    %313 = tpu.matmul %312, %310, %cst_169 {dimension_numbers = #tpu.dot_dimension_numbers<[1], [0], [0], [1], [0, 0, 1, 1], [], []>} : vector<32x32xf32>, vector<32x8xf32>, vector<32x8xf32> -> vector<32x8xf32>
    %cst_170 = arith.constant 0.000000e+00 : f32
    %314 = vector.broadcast %cst_170 : f32 to vector<32x8xf32>
    %315 = arith.maximumf %313, %314 : vector<32x8xf32>
    %c7_171 = arith.constant 7 : index
    %c0_172 = arith.constant 0 : index
    %c0_173 = arith.constant 0 : index
    %316 = vector.load %arg4[%c7_171, %c0_172, %c0_173] : memref<9x32x32xf32, #tpu.memory_space<vmem>>, vector<1x32x32xf32>
    %317 = vector.shape_cast %316 : vector<1x32x32xf32> to vector<32x32xf32>
    %cst_174 = arith.constant dense<0.000000e+00> : vector<32x8xf32>
    %318 = tpu.matmul %317, %315, %cst_174 {dimension_numbers = #tpu.dot_dimension_numbers<[1], [0], [0], [1], [0, 0, 1, 1], [], []>} : vector<32x32xf32>, vector<32x8xf32>, vector<32x8xf32> -> vector<32x8xf32>
    %cst_175 = arith.constant 0.000000e+00 : f32
    %319 = vector.broadcast %cst_175 : f32 to vector<32x8xf32>
    %320 = arith.maximumf %318, %319 : vector<32x8xf32>
    %c8_176 = arith.constant 8 : index
    %c0_177 = arith.constant 0 : index
    %c0_178 = arith.constant 0 : index
    %321 = vector.load %arg4[%c8_176, %c0_177, %c0_178] : memref<9x32x32xf32, #tpu.memory_space<vmem>>, vector<1x32x32xf32>
    %322 = vector.shape_cast %321 : vector<1x32x32xf32> to vector<32x32xf32>
    %cst_179 = arith.constant dense<0.000000e+00> : vector<32x8xf32>
    %323 = tpu.matmul %322, %320, %cst_179 {dimension_numbers = #tpu.dot_dimension_numbers<[1], [0], [0], [1], [0, 0, 1, 1], [], []>} : vector<32x32xf32>, vector<32x8xf32>, vector<32x8xf32> -> vector<32x8xf32>
    %cst_180 = arith.constant 0.000000e+00 : f32
    %324 = vector.broadcast %cst_180 : f32 to vector<32x8xf32>
    %325 = arith.maximumf %323, %324 : vector<32x8xf32>
    %c2_181 = arith.constant 2 : index
    %c0_182 = arith.constant 0 : index
    %c0_183 = arith.constant 0 : index
    %326 = vector.load %arg5[%c2_181, %c0_182, %c0_183] : memref<3x5x32xf32, #tpu.memory_space<vmem>>, vector<1x5x32xf32>
    %327 = vector.shape_cast %326 : vector<1x5x32xf32> to vector<5x32xf32>
    %cst_184 = arith.constant dense<0.000000e+00> : vector<5x8xf32>
    %328 = tpu.matmul %327, %325, %cst_184 {dimension_numbers = #tpu.dot_dimension_numbers<[1], [0], [0], [1], [0, 0, 1, 1], [], []>} : vector<5x32xf32>, vector<32x8xf32>, vector<5x8xf32> -> vector<5x8xf32>
    %329 = math.tanh %328 : vector<5x8xf32>
    %330 = vector.extract_strided_slice %329 {offsets = [0, 0], sizes = [1, 8], strides = [1, 1]} : vector<5x8xf32> to vector<1x8xf32>
    %331 = vector.extract_strided_slice %329 {offsets = [1, 0], sizes = [1, 8], strides = [1, 1]} : vector<5x8xf32> to vector<1x8xf32>
    %332 = vector.extract_strided_slice %329 {offsets = [2, 0], sizes = [1, 8], strides = [1, 1]} : vector<5x8xf32> to vector<1x8xf32>
    %333 = vector.extract_strided_slice %329 {offsets = [3, 0], sizes = [1, 8], strides = [1, 1]} : vector<5x8xf32> to vector<1x8xf32>
    %334 = vector.extract_strided_slice %329 {offsets = [4, 0], sizes = [1, 8], strides = [1, 1]} : vector<5x8xf32> to vector<1x8xf32>
    %c18 = arith.constant 18 : index
    %c0_185 = arith.constant 0 : index
    %c0_186 = arith.constant 0 : index
    %335 = vector.load %arg11[%c18, %c0_185, %c0_186] : memref<27x32x8xf32, #tpu.memory_space<vmem>>, vector<1x32x8xf32>
    %336 = vector.shape_cast %335 : vector<1x32x8xf32> to vector<32x8xf32>
    %337 = vector.broadcast %330 : vector<1x8xf32> to vector<32x8xf32>
    %338 = arith.mulf %336, %337 : vector<32x8xf32>
    %c19 = arith.constant 19 : index
    %c0_187 = arith.constant 0 : index
    %c0_188 = arith.constant 0 : index
    %339 = vector.load %arg11[%c19, %c0_187, %c0_188] : memref<27x32x8xf32, #tpu.memory_space<vmem>>, vector<1x32x8xf32>
    %340 = vector.shape_cast %339 : vector<1x32x8xf32> to vector<32x8xf32>
    %341 = vector.broadcast %331 : vector<1x8xf32> to vector<32x8xf32>
    %342 = arith.mulf %340, %341 : vector<32x8xf32>
    %343 = arith.addf %338, %342 : vector<32x8xf32>
    %c20 = arith.constant 20 : index
    %c0_189 = arith.constant 0 : index
    %c0_190 = arith.constant 0 : index
    %344 = vector.load %arg11[%c20, %c0_189, %c0_190] : memref<27x32x8xf32, #tpu.memory_space<vmem>>, vector<1x32x8xf32>
    %345 = vector.shape_cast %344 : vector<1x32x8xf32> to vector<32x8xf32>
    %346 = vector.broadcast %332 : vector<1x8xf32> to vector<32x8xf32>
    %347 = arith.mulf %345, %346 : vector<32x8xf32>
    %348 = arith.addf %343, %347 : vector<32x8xf32>
    %c21 = arith.constant 21 : index
    %c0_191 = arith.constant 0 : index
    %c0_192 = arith.constant 0 : index
    %349 = vector.load %arg11[%c21, %c0_191, %c0_192] : memref<27x32x8xf32, #tpu.memory_space<vmem>>, vector<1x32x8xf32>
    %350 = vector.shape_cast %349 : vector<1x32x8xf32> to vector<32x8xf32>
    %351 = vector.broadcast %333 : vector<1x8xf32> to vector<32x8xf32>
    %352 = arith.mulf %350, %351 : vector<32x8xf32>
    %353 = arith.addf %348, %352 : vector<32x8xf32>
    %c22 = arith.constant 22 : index
    %c0_193 = arith.constant 0 : index
    %c0_194 = arith.constant 0 : index
    %354 = vector.load %arg11[%c22, %c0_193, %c0_194] : memref<27x32x8xf32, #tpu.memory_space<vmem>>, vector<1x32x8xf32>
    %355 = vector.shape_cast %354 : vector<1x32x8xf32> to vector<32x8xf32>
    %356 = vector.broadcast %334 : vector<1x8xf32> to vector<32x8xf32>
    %357 = arith.mulf %355, %356 : vector<32x8xf32>
    %358 = arith.addf %353, %357 : vector<32x8xf32>
    %c23 = arith.constant 23 : index
    %c0_195 = arith.constant 0 : index
    %c0_196 = arith.constant 0 : index
    %359 = vector.load %arg11[%c23, %c0_195, %c0_196] : memref<27x32x8xf32, #tpu.memory_space<vmem>>, vector<1x32x8xf32>
    %360 = vector.shape_cast %359 : vector<1x32x8xf32> to vector<32x8xf32>
    %361 = vector.broadcast %286 : vector<1x8xf32> to vector<32x8xf32>
    %362 = arith.mulf %360, %361 : vector<32x8xf32>
    %363 = arith.addf %358, %362 : vector<32x8xf32>
    %c24 = arith.constant 24 : index
    %c0_197 = arith.constant 0 : index
    %c0_198 = arith.constant 0 : index
    %364 = vector.load %arg11[%c24, %c0_197, %c0_198] : memref<27x32x8xf32, #tpu.memory_space<vmem>>, vector<1x32x8xf32>
    %365 = vector.shape_cast %364 : vector<1x32x8xf32> to vector<32x8xf32>
    %366 = vector.broadcast %296 : vector<1x8xf32> to vector<32x8xf32>
    %367 = arith.mulf %365, %366 : vector<32x8xf32>
    %368 = arith.addf %363, %367 : vector<32x8xf32>
    %c25 = arith.constant 25 : index
    %c0_199 = arith.constant 0 : index
    %c0_200 = arith.constant 0 : index
    %369 = vector.load %arg11[%c25, %c0_199, %c0_200] : memref<27x32x8xf32, #tpu.memory_space<vmem>>, vector<1x32x8xf32>
    %370 = vector.shape_cast %369 : vector<1x32x8xf32> to vector<32x8xf32>
    %371 = vector.broadcast %298 : vector<1x8xf32> to vector<32x8xf32>
    %372 = arith.mulf %370, %371 : vector<32x8xf32>
    %373 = arith.addf %368, %372 : vector<32x8xf32>
    %c26 = arith.constant 26 : index
    %c0_201 = arith.constant 0 : index
    %c0_202 = arith.constant 0 : index
    %374 = vector.load %arg11[%c26, %c0_201, %c0_202] : memref<27x32x8xf32, #tpu.memory_space<vmem>>, vector<1x32x8xf32>
    %375 = vector.shape_cast %374 : vector<1x32x8xf32> to vector<32x8xf32>
    %376 = vector.broadcast %300 : vector<1x8xf32> to vector<32x8xf32>
    %377 = arith.mulf %375, %376 : vector<32x8xf32>
    %378 = arith.addf %373, %377 : vector<32x8xf32>
    %cst_203 = arith.constant dense<0.000000e+00> : vector<32x2xf32>
    %379 = tpu.matmul %378, %1, %cst_203 {dimension_numbers = #tpu.dot_dimension_numbers<[1], [0], [0], [1], [0, 0, 1, 1], [], []>} : vector<32x8xf32>, vector<8x2xf32>, vector<32x2xf32> -> vector<32x2xf32>
    %c2_204 = arith.constant 2 : index
    %c0_205 = arith.constant 0 : index
    %c0_206 = arith.constant 0 : index
    %380 = vector.load %arg12[%c2_204, %c0_205, %c0_206] : memref<3x32x1xf32, #tpu.memory_space<vmem>>, vector<1x32x1xf32>
    %381 = vector.shape_cast %380 : vector<1x32x1xf32> to vector<32x1xf32>
    %382 = vector.broadcast %381 : vector<32x1xf32> to vector<32x2xf32>
    %383 = arith.addf %379, %382 : vector<32x2xf32>
    %cst_207 = arith.constant 0.000000e+00 : f32
    %384 = vector.broadcast %cst_207 : f32 to vector<32x2xf32>
    %385 = arith.maximumf %383, %384 : vector<32x2xf32>
    %c2_208 = arith.constant 2 : index
    %c0_209 = arith.constant 0 : index
    %c0_210 = arith.constant 0 : index
    %386 = vector.load %arg13[%c2_208, %c0_209, %c0_210] : memref<3x32x32xf32, #tpu.memory_space<vmem>>, vector<1x32x32xf32>
    %387 = vector.shape_cast %386 : vector<1x32x32xf32> to vector<32x32xf32>
    %cst_211 = arith.constant dense<0.000000e+00> : vector<32x2xf32>
    %388 = tpu.matmul %387, %385, %cst_211 {dimension_numbers = #tpu.dot_dimension_numbers<[1], [0], [0], [1], [0, 0, 1, 1], [], []>} : vector<32x32xf32>, vector<32x2xf32>, vector<32x2xf32> -> vector<32x2xf32>
    %c2_212 = arith.constant 2 : index
    %c0_213 = arith.constant 0 : index
    %c0_214 = arith.constant 0 : index
    %389 = vector.load %arg14[%c2_212, %c0_213, %c0_214] : memref<3x32x1xf32, #tpu.memory_space<vmem>>, vector<1x32x1xf32>
    %390 = vector.shape_cast %389 : vector<1x32x1xf32> to vector<32x1xf32>
    %391 = vector.broadcast %390 : vector<32x1xf32> to vector<32x2xf32>
    %392 = arith.addf %388, %391 : vector<32x2xf32>
    %cst_215 = arith.constant 0.000000e+00 : f32
    %393 = vector.broadcast %cst_215 : f32 to vector<32x2xf32>
    %394 = arith.maximumf %392, %393 : vector<32x2xf32>
    %c2_216 = arith.constant 2 : index
    %c0_217 = arith.constant 0 : index
    %c0_218 = arith.constant 0 : index
    %395 = vector.load %arg15[%c2_216, %c0_217, %c0_218] : memref<3x3x32xf32, #tpu.memory_space<vmem>>, vector<1x3x32xf32>
    %396 = vector.shape_cast %395 : vector<1x3x32xf32> to vector<3x32xf32>
    %cst_219 = arith.constant dense<0.000000e+00> : vector<3x2xf32>
    %397 = tpu.matmul %396, %394, %cst_219 {dimension_numbers = #tpu.dot_dimension_numbers<[1], [0], [0], [1], [0, 0, 1, 1], [], []>} : vector<3x32xf32>, vector<32x2xf32>, vector<3x2xf32> -> vector<3x2xf32>
    %398 = arith.addf %282, %397 : vector<3x2xf32>
    %c2_220 = arith.constant 2 : index
    %c0_221 = arith.constant 0 : index
    %c0_222 = arith.constant 0 : index
    %399 = vector.load %arg16[%c2_220, %c0_221, %c0_222] : memref<3x3x1xf32, #tpu.memory_space<vmem>>, vector<1x3x1xf32>
    %400 = vector.shape_cast %399 : vector<1x3x1xf32> to vector<3x1xf32>
    %401 = vector.broadcast %400 : vector<3x1xf32> to vector<3x2xf32>
    %402 = arith.addf %398, %401 : vector<3x2xf32>
    %c0_223 = arith.constant 0 : index
    %c0_224 = arith.constant 0 : index
    %c0_225 = arith.constant 0 : index
    %403 = vector.load %arg17[%c0_223, %c0_224, %c0_225] : memref<1x3x2xf32, #tpu.memory_space<vmem>>, vector<1x3x2xf32>
    %404 = vector.shape_cast %403 : vector<1x3x2xf32> to vector<3x2xf32>
    %405 = vector.shape_cast %402 : vector<3x2xf32> to vector<1x3x2xf32>
    tpu.vector_store %arg17[%c0_223, %c0_224, %c0_225], %405 {strides = array<i32>} : memref<1x3x2xf32, #tpu.memory_space<vmem>>, vector<1x3x2xf32>,
    return
  }
  func.func @transform_0(%arg0: i32) -> (i32, i32) {
    %c0_i32 = arith.constant 0 : i32
    %c0_i32_0 = arith.constant 0 : i32
    return %c0_i32, %arg0 : i32, i32
  }
  func.func @transform_1(%arg0: i32) -> (i32, i32) {
    %c0_i32 = arith.constant 0 : i32
    %c0_i32_0 = arith.constant 0 : i32
    %c0_i32_1 = arith.constant 0 : i32
    return %c0_i32, %c0_i32_0 : i32, i32
  }
  func.func @transform_2(%arg0: i32) -> (i32, i32, i32) {
    %c0_i32 = arith.constant 0 : i32
    %c0_i32_0 = arith.constant 0 : i32
    %c0_i32_1 = arith.constant 0 : i32
    %c0_i32_2 = arith.constant 0 : i32
    return %c0_i32, %c0_i32_0, %c0_i32_1 : i32, i32, i32
  }
  func.func @transform_3(%arg0: i32) -> (i32, i32, i32) {
    %c0_i32 = arith.constant 0 : i32
    %c0_i32_0 = arith.constant 0 : i32
    %c0_i32_1 = arith.constant 0 : i32
    %c0_i32_2 = arith.constant 0 : i32
    return %c0_i32, %c0_i32_0, %c0_i32_1 : i32, i32, i32
  }
  func.func @transform_4(%arg0: i32) -> (i32, i32, i32) {
    %c0_i32 = arith.constant 0 : i32
    %c0_i32_0 = arith.constant 0 : i32
    %c0_i32_1 = arith.constant 0 : i32
    %c0_i32_2 = arith.constant 0 : i32
    return %c0_i32, %c0_i32_0, %c0_i32_1 : i32, i32, i32
  }
  func.func @transform_5(%arg0: i32) -> (i32, i32, i32) {
    %c0_i32 = arith.constant 0 : i32
    %c0_i32_0 = arith.constant 0 : i32
    %c0_i32_1 = arith.constant 0 : i32
    %c0_i32_2 = arith.constant 0 : i32
    return %c0_i32, %c0_i32_0, %c0_i32_1 : i32, i32, i32
  }
  func.func @transform_6(%arg0: i32) -> (i32, i32, i32) {
    %c0_i32 = arith.constant 0 : i32
    %c0_i32_0 = arith.constant 0 : i32
    %c0_i32_1 = arith.constant 0 : i32
    %c0_i32_2 = arith.constant 0 : i32
    return %c0_i32, %c0_i32_0, %c0_i32_1 : i32, i32, i32
  }
  func.func @transform_7(%arg0: i32) -> (i32, i32, i32) {
    %c0_i32 = arith.constant 0 : i32
    %c0_i32_0 = arith.constant 0 : i32
    %c0_i32_1 = arith.constant 0 : i32
    %c0_i32_2 = arith.constant 0 : i32
    return %c0_i32, %c0_i32_0, %c0_i32_1 : i32, i32, i32
  }
  func.func @transform_8(%arg0: i32) -> (i32, i32, i32) {
    %c0_i32 = arith.constant 0 : i32
    %c0_i32_0 = arith.constant 0 : i32
    %c0_i32_1 = arith.constant 0 : i32
    %c0_i32_2 = arith.constant 0 : i32
    return %c0_i32, %c0_i32_0, %c0_i32_1 : i32, i32, i32
  }
  func.func @transform_9(%arg0: i32) -> (i32, i32, i32) {
    %c0_i32 = arith.constant 0 : i32
    %c0_i32_0 = arith.constant 0 : i32
    %c0_i32_1 = arith.constant 0 : i32
    %c0_i32_2 = arith.constant 0 : i32
    return %c0_i32, %c0_i32_0, %c0_i32_1 : i32, i32, i32
  }
  func.func @transform_10(%arg0: i32) -> (i32, i32, i32) {
    %c0_i32 = arith.constant 0 : i32
    %c0_i32_0 = arith.constant 0 : i32
    %c0_i32_1 = arith.constant 0 : i32
    %c0_i32_2 = arith.constant 0 : i32
    return %c0_i32, %c0_i32_0, %c0_i32_1 : i32, i32, i32
  }
  func.func @transform_11(%arg0: i32) -> (i32, i32, i32) {
    %c0_i32 = arith.constant 0 : i32
    %c0_i32_0 = arith.constant 0 : i32
    %c0_i32_1 = arith.constant 0 : i32
    %c0_i32_2 = arith.constant 0 : i32
    return %c0_i32, %c0_i32_0, %c0_i32_1 : i32, i32, i32
  }
  func.func @transform_12(%arg0: i32) -> (i32, i32, i32) {
    %c0_i32 = arith.constant 0 : i32
    %c0_i32_0 = arith.constant 0 : i32
    %c0_i32_1 = arith.constant 0 : i32
    %c0_i32_2 = arith.constant 0 : i32
    return %c0_i32, %c0_i32_0, %c0_i32_1 : i32, i32, i32
  }
  func.func @transform_13(%arg0: i32) -> (i32, i32, i32) {
    %c0_i32 = arith.constant 0 : i32
    %c0_i32_0 = arith.constant 0 : i32
    %c0_i32_1 = arith.constant 0 : i32
    %c0_i32_2 = arith.constant 0 : i32
    return %c0_i32, %c0_i32_0, %c0_i32_1 : i32, i32, i32
  }
  func.func @transform_14(%arg0: i32) -> (i32, i32, i32) {
    %c0_i32 = arith.constant 0 : i32
    %c0_i32_0 = arith.constant 0 : i32
    %c0_i32_1 = arith.constant 0 : i32
    %c0_i32_2 = arith.constant 0 : i32
    return %c0_i32, %c0_i32_0, %c0_i32_1 : i32, i32, i32
  }
  func.func @transform_15(%arg0: i32) -> (i32, i32, i32) {
    %c0_i32 = arith.constant 0 : i32
    %c0_i32_0 = arith.constant 0 : i32
    %c0_i32_1 = arith.constant 0 : i32
    %c0_i32_2 = arith.constant 0 : i32
    return %c0_i32, %c0_i32_0, %c0_i32_1 : i32, i32, i32
  }
  func.func @transform_16(%arg0: i32) -> (i32, i32, i32) {
    %c0_i32 = arith.constant 0 : i32
    %c0_i32_0 = arith.constant 0 : i32
    %c0_i32_1 = arith.constant 0 : i32
    return %arg0, %c0_i32, %c0_i32_0 : i32, i32, i32
  }
}

</mosaic_0001>

<llo_original>
// kernel: tpu_custom_call.1
$region0: #{tpu_custom_call.1}
  #allocation0 [shape = 'u32[]', space=smem, size = 0x4, offset = 0x4, fixed_abs, tag = 'smem constant byte address 0x4 - core index']
  #allocation1 [shape = 'u32[144,128]{1,0:T(1,128)}', space=vmem, size = 0x12000, scoped, tag = 'internal scratch']
  %s0 = inlined_call_operand.vmem [shape: f32[8,8], index: 0, kind: input, shape index: {}]
  %s1 = inlined_call_operand.vmem [shape: f32[8,2], index: 1, kind: input, shape index: {}]
  %s2 = inlined_call_operand.vmem [shape: f32[3,32,8], index: 2, kind: input, shape index: {}]
  %s3 = inlined_call_operand.vmem [shape: f32[9,32,32], index: 3, kind: input, shape index: {}]
  %s4 = inlined_call_operand.vmem [shape: f32[3,5,32], index: 4, kind: input, shape index: {}]
  %s5 = inlined_call_operand.vmem [shape: f32[2,8,5], index: 5, kind: input, shape index: {}]
  %s6 = inlined_call_operand.vmem [shape: f32[1,32,5], index: 6, kind: input, shape index: {}]
  %s7 = inlined_call_operand.vmem [shape: f32[1,32,1], index: 7, kind: input, shape index: {}]
  %s8 = inlined_call_operand.vmem [shape: f32[1,8,32], index: 8, kind: input, shape index: {}]
  %s9 = inlined_call_operand.vmem [shape: f32[1,8,1], index: 9, kind: input, shape index: {}]
  %s10 = inlined_call_operand.vmem [shape: f32[27,32,8], index: 10, kind: input, shape index: {}]
  %s11 = inlined_call_operand.vmem [shape: f32[3,32,1], index: 11, kind: input, shape index: {}]
  %s12 = inlined_call_operand.vmem [shape: f32[3,32,32], index: 12, kind: input, shape index: {}]
  %s13 = inlined_call_operand.vmem [shape: f32[3,32,1], index: 13, kind: input, shape index: {}]
  %s14 = inlined_call_operand.vmem [shape: f32[3,3,32], index: 14, kind: input, shape index: {}]
  %s15 = inlined_call_operand.vmem [shape: f32[3,3,1], index: 15, kind: input, shape index: {}]
  %s16 = inlined_call_operand.vmem [shape: f32[1,3,2], index: 16, kind: output, shape index: {}]
  %s17 = sld [smem:[#allocation0]]
  $region74: #{tpu_custom_call.1} parent=0
    _
  %s19 = ssub.s32 1, %s17
  %s20 = scalar_select 0, %s19, %s17
  // Predicated region
  $region2: #{tpu_custom_call.1} parent=0 // pred_check
    _
  $region3: #{tpu_custom_call.1} parent=0 // pred_check_branch
    %22 = sbr.rel (0) target = $region5
  $region4: #{tpu_custom_call.1} parent=0 // pred_region
    _
  $region5: #{tpu_custom_call.1} parent=0 // pred_fallthru
    _
  // Predicated region
  $region6: #{tpu_custom_call.1} parent=0 // pred_check
    _
  $region7: #{tpu_custom_call.1} parent=0 // pred_check_branch
    %24 = sbr.rel (0) target = $region9
  $region8: #{tpu_custom_call.1} parent=0 // pred_region
    _
  $region9: #{tpu_custom_call.1} parent=0 // pred_fallthru
    _
  // Predicated region
  $region10: #{tpu_custom_call.1} parent=0 // pred_check
    _
  $region11: #{tpu_custom_call.1} parent=0 // pred_check_branch
    %26 = sbr.rel (0) target = $region13
  $region12: #{tpu_custom_call.1} parent=0 // pred_region
    _
  $region13: #{tpu_custom_call.1} parent=0 // pred_fallthru
    _
  // Predicated region
  $region14: #{tpu_custom_call.1} parent=0 // pred_check
    _
  $region15: #{tpu_custom_call.1} parent=0 // pred_check_branch
    %28 = sbr.rel (0) target = $region17
  $region16: #{tpu_custom_call.1} parent=0 // pred_region
    _
  $region17: #{tpu_custom_call.1} parent=0 // pred_fallthru
    _
  // Predicated region
  $region18: #{tpu_custom_call.1} parent=0 // pred_check
    _
  $region19: #{tpu_custom_call.1} parent=0 // pred_check_branch
    %30 = sbr.rel (0) target = $region21
  $region20: #{tpu_custom_call.1} parent=0 // pred_region
    _
  $region21: #{tpu_custom_call.1} parent=0 // pred_fallthru
    _
  // Predicated region
  $region22: #{tpu_custom_call.1} parent=0 // pred_check
    _
  $region23: #{tpu_custom_call.1} parent=0 // pred_check_branch
    %32 = sbr.rel (0) target = $region25
  $region24: #{tpu_custom_call.1} parent=0 // pred_region
    _
  $region25: #{tpu_custom_call.1} parent=0 // pred_fallthru
    _
  // Predicated region
  $region26: #{tpu_custom_call.1} parent=0 // pred_check
    _
  $region27: #{tpu_custom_call.1} parent=0 // pred_check_branch
    %34 = sbr.rel (0) target = $region29
  $region28: #{tpu_custom_call.1} parent=0 // pred_region
    _
  $region29: #{tpu_custom_call.1} parent=0 // pred_fallthru
    _
  // Predicated region
  $region30: #{tpu_custom_call.1} parent=0 // pred_check
    _
  $region31: #{tpu_custom_call.1} parent=0 // pred_check_branch
    %36 = sbr.rel (0) target = $region33
  $region32: #{tpu_custom_call.1} parent=0 // pred_region
    _
  $region33: #{tpu_custom_call.1} parent=0 // pred_fallthru
    _
  // Predicated region
  $region34: #{tpu_custom_call.1} parent=0 // pred_check
    _
  $region35: #{tpu_custom_call.1} parent=0 // pred_check_branch
    %38 = sbr.rel (0) target = $region37
  $region36: #{tpu_custom_call.1} parent=0 // pred_region
    _
  $region37: #{tpu_custom_call.1} parent=0 // pred_fallthru
    _
  // Predicated region
  $region38: #{tpu_custom_call.1} parent=0 // pred_check
    _
  $region39: #{tpu_custom_call.1} parent=0 // pred_check_branch
    %40 = sbr.rel (0) target = $region41
  $region40: #{tpu_custom_call.1} parent=0 // pred_region
    _
  $region41: #{tpu_custom_call.1} parent=0 // pred_fallthru
    _
  // Predicated region
  $region42: #{tpu_custom_call.1} parent=0 // pred_check
    _
  $region43: #{tpu_custom_call.1} parent=0 // pred_check_branch
    %42 = sbr.rel (0) target = $region45
  $region44: #{tpu_custom_call.1} parent=0 // pred_region
    _
  $region45: #{tpu_custom_call.1} parent=0 // pred_fallthru
    _
  // Predicated region
  $region46: #{tpu_custom_call.1} parent=0 // pred_check
    _
  $region47: #{tpu_custom_call.1} parent=0 // pred_check_branch
    %44 = sbr.rel (0) target = $region49
  $region48: #{tpu_custom_call.1} parent=0 // pred_region
    _
  $region49: #{tpu_custom_call.1} parent=0 // pred_fallthru
    _
  // Predicated region
  $region50: #{tpu_custom_call.1} parent=0 // pred_check
    _
  $region51: #{tpu_custom_call.1} parent=0 // pred_check_branch
    %46 = sbr.rel (0) target = $region53
  $region52: #{tpu_custom_call.1} parent=0 // pred_region
    _
  $region53: #{tpu_custom_call.1} parent=0 // pred_fallthru
    _
  // Predicated region
  $region54: #{tpu_custom_call.1} parent=0 // pred_check
    _
  $region55: #{tpu_custom_call.1} parent=0 // pred_check_branch
    %48 = sbr.rel (0) target = $region57
  $region56: #{tpu_custom_call.1} parent=0 // pred_region
    _
  $region57: #{tpu_custom_call.1} parent=0 // pred_fallthru
    _
  // Predicated region
  $region58: #{tpu_custom_call.1} parent=0 // pred_check
    _
  $region59: #{tpu_custom_call.1} parent=0 // pred_check_branch
    %50 = sbr.rel (0) target = $region61
  $region60: #{tpu_custom_call.1} parent=0 // pred_region
    _
  $region61: #{tpu_custom_call.1} parent=0 // pred_fallthru
    _
  // Predicated region
  $region62: #{tpu_custom_call.1} parent=0 // pred_check
    _
  $region63: #{tpu_custom_call.1} parent=0 // pred_check_branch
    %52 = sbr.rel (0) target = $region65
  $region64: #{tpu_custom_call.1} parent=0 // pred_region
    _
  $region65: #{tpu_custom_call.1} parent=0 // pred_fallthru
    _
  %v53 = vld [vmem:[%s0] sm:$0xff]
  %v54 = vld [vmem:[%s1] sm:$0xff]
  %vm55 = vcmask 64512
  %v56 = vsel %vm55, %v53, 0.0
  %v57 = vrot.slane %v56, 4
  %v58 = vadd.f32 %v56, %v57
  %v59 = vrot.slane %v58, 2
  %v60 = vadd.f32 %v58, %v59
  %v61 = vrot.slane %v60, 1
  %v62 = vadd.f32 %v60, %v61
  %v63 = vrcp.pop 8.0
  %v64 = vmul.f32 %v62, %v63
  %v65 = vsub.f32 %v53, %v64
  %v66 = vmul.f32 %v65, %v65
  %v67 = vsel %vm55, %v66, 0.0
  %v68 = vrot.slane %v67, 4
  %v69 = vadd.f32 %v67, %v68
  %v70 = vrot.slane %v69, 2
  %v71 = vadd.f32 %v69, %v70
  %v72 = vrot.slane %v71, 1
  %v73 = vadd.f32 %v71, %v72
  %v74 = vmul.f32 %v73, %v63
  %v75 = vrsqrt.pop %v74
  %v76 = vmul.f32 %v74, %v75
  %vm77 = vcmp.eq.f32.partialorder %v74, inf
  %v78 = vsel %vm77, %v74, %v76
  %vm79 = vcmp.eq.f32.partialorder %v74, 0.0
  %v80 = vand.u32 %v74, 2147483648
  %v81 = vsel %vm79, %v80, %v78
  %v82 = vadd.f32 %v81, 1e-05
  %v83 = vsel %vm55, %v53, inf
  %v84 = vrot.slane %v83, 4
  %v85 = vmin.f32 %v83, %v84
  %v86 = vrot.slane %v85, 2
  %v87 = vmin.f32 %v85, %v86
  %v88 = vrot.slane %v87, 1
  %v89 = vmin.f32 %v87, %v88
  %v90 = vsel %vm55, %v53, -inf
  %v91 = vrot.slane %v90, 4
  %v92 = vmax.f32 %v90, %v91
  %v93 = vrot.slane %v92, 2
  %v94 = vmax.f32 %v92, %v93
  %v95 = vrot.slane %v94, 1
  %v96 = vmax.f32 %v94, %v95
  %v97 = vrcp.pop %v82
  %v98 = vmul.f32 %v65, %v97
  %v99 = vld [vmem:[%s2] sm:$0xff]
  %v100 = vld [vmem:[%s2 + $0x8] sm:$0xff]
  %v101 = vld [vmem:[%s2 + $0x10] sm:$0xff]
  %v102 = vld [vmem:[%s2 + $0x18] sm:$0xff]
  %v104 = vsel %vm55, %v99, 0
  %v107 = vsel %vm55, %v100, 0
  %v110 = vsel %vm55, %v101, 0
  %v113 = vsel %vm55, %v102, 0
  %115 = vmatprep.subr.mxu0 0.0
  %116 = vmatpush1.msra.mxu0 %v98
  %117 = vmatprep.subr.mxu0 0.0
  %118 = vmatpush1.msra.mxu0 0.0
  %119 = vmatprep.subr.mxu0 0.0
  %120 = vmatpush1.msra.mxu0 0.0
  %121 = vmatprep.subr.mxu0 0.0
  %122 = vmatpush1.msra.mxu0 0.0
  %123 = vmatprep.subr.mxu0 0.0
  %124 = vmatpush1.msra.mxu0 0.0
  %125 = vmatprep.subr.mxu0 0.0
  %126 = vmatpush1.msra.mxu0 0.0
  %127 = vmatprep.subr.mxu0 0.0
  %128 = vmatpush1.msra.mxu0 0.0
  %129 = vmatprep.subr.mxu0 0.0
  %130 = vmatpush1.msra.mxu0 0.0
  %131 = vmatprep.subr.mxu0 0.0
  %132 = vmatpush1.msra.mxu0 0.0
  %133 = vmatprep.subr.mxu0 0.0
  %134 = vmatpush1.msra.mxu0 0.0
  %135 = vmatprep.subr.mxu0 0.0
  %136 = vmatpush1.msra.mxu0 0.0
  %137 = vmatprep.subr.mxu0 0.0
  %138 = vmatpush1.msra.mxu0 0.0
  %139 = vmatprep.subr.mxu0 0.0
  %140 = vmatpush1.msra.mxu0 0.0
  %141 = vmatprep.subr.mxu0 0.0
  %142 = vmatpush1.msra.mxu0 0.0
  %143 = vmatprep.subr.mxu0 0.0
  %144 = vmatpush1.msra.mxu0 0.0
  %145 = vmatprep.subr.mxu0 0.0
  %146 = vmatpush1.msra.mxu0 0.0
  %147 = vmatprep.subr.mxu0 0.0
  %148 = vmatpush1.msra.mxu0 0.0
  %149 = vmatprep.subr.mxu0 0.0
  %150 = vmatpush1.msra.mxu0 0.0
  %151 = vmatprep.subr.mxu0 0.0
  %152 = vmatpush1.msra.mxu0 0.0
  %153 = vmatprep.subr.mxu0 0.0
  %154 = vmatpush1.msra.mxu0 0.0
  %155 = vmatprep.subr.mxu0 0.0
  %156 = vmatpush1.msra.mxu0 0.0
  %157 = vmatprep.subr.mxu0 0.0
  %158 = vmatpush1.msra.mxu0 0.0
  %159 = vmatprep.subr.mxu0 0.0
  %160 = vmatpush1.msra.mxu0 0.0
  %161 = vmatprep.subr.mxu0 0.0
  %162 = vmatpush1.msra.mxu0 0.0
  %163 = vmatprep.subr.mxu0 0.0
  %164 = vmatpush1.msra.mxu0 0.0
  %165 = vmatprep.subr.mxu0 0.0
  %166 = vmatpush1.msra.mxu0 0.0
  %167 = vmatprep.subr.mxu0 0.0
  %168 = vmatpush1.msra.mxu0 0.0
  %169 = vmatprep.subr.mxu0 0.0
  %170 = vmatpush1.msra.mxu0 0.0
  %171 = vmatprep.subr.mxu0 0.0
  %172 = vmatpush1.msra.mxu0 0.0
  %173 = vmatprep.subr.mxu0 0.0
  %174 = vmatpush1.msra.mxu0 0.0
  %175 = vmatprep.subr.mxu0 0.0
  %176 = vmatpush1.msra.mxu0 0.0
  %177 = vmatprep.subr.mxu0 0.0
  %178 = vmatpush1.msra.mxu0 0.0
  %179 = vmatprep.mubr.f32.mxu0 0.0
  %180 = vmatmul.mubr.f32.gmra.mrb[0].mxu0 %v104
  %v181 = vpop.f32.mrb[0].mxu0
  %v182 = vadd.f32 0.0, %v181
  %v183 = vpop.f32.mrb[0].mxu0
  %184 = vmatprep.mubr.f32.mxu0 0.0
  %185 = vmatmul.mubr.f32.gmra.mrb[0].mxu0 %v107
  %v186 = vpop.f32.mrb[0].mxu0
  %v187 = vadd.f32 0.0, %v186
  %v188 = vpop.f32.mrb[0].mxu0
  %189 = vmatprep.mubr.f32.mxu0 0.0
  %190 = vmatmul.mubr.f32.gmra.mrb[0].mxu0 %v110
  %v191 = vpop.f32.mrb[0].mxu0
  %v192 = vadd.f32 0.0, %v191
  %v193 = vpop.f32.mrb[0].mxu0
  %194 = vmatprep.mubr.f32.mxu0 0.0
  %195 = vmatmul.mubr.f32.gmra.mrb[0].mxu0 %v113
  %v196 = vpop.f32.mrb[0].mxu0
  %v197 = vadd.f32 0.0, %v196
  %v198 = vpop.f32.mrb[0].mxu0
  %199 = vdwg.mxu0
  %v200 = vmax.f32 %v182, 0.0
  %v201 = vmax.f32 %v187, 0.0
  %v202 = vmax.f32 %v192, 0.0
  %v203 = vmax.f32 %v197, 0.0
  %v204 = vld [vmem:[%s3] sm:$0xff]
  %v205 = vld [vmem:[%s3 + $0x8] sm:$0xff]
  %v206 = vld [vmem:[%s3 + $0x10] sm:$0xff]
  %v207 = vld [vmem:[%s3 + $0x18] sm:$0xff]
  %vm208 = vcmask 261120
  %v210 = vsel %vm208, %v204, 0
  %v213 = vsel %vm208, %v205, 0
  %v216 = vsel %vm208, %v206, 0
  %v219 = vsel %vm208, %v207, 0
  %221 = vmatprep.subr.mxu0 0.0
  %222 = vmatpush1.msra.mxu0 %v200
  %223 = vmatprep.subr.mxu0 0.0
  %224 = vmatpush1.msra.mxu0 %v201
  %225 = vmatprep.subr.mxu0 0.0
  %226 = vmatpush1.msra.mxu0 %v202
  %227 = vmatprep.subr.mxu0 0.0
  %228 = vmatpush1.msra.mxu0 %v203
  %229 = vmatprep.subr.mxu0 0.0
  %230 = vmatpush1.msra.mxu0 0.0
  %231 = vmatprep.subr.mxu0 0.0
  %232 = vmatpush1.msra.mxu0 0.0
  %233 = vmatprep.subr.mxu0 0.0
  %234 = vmatpush1.msra.mxu0 0.0
  %235 = vmatprep.subr.mxu0 0.0
  %236 = vmatpush1.msra.mxu0 0.0
  %237 = vmatprep.subr.mxu0 0.0
  %238 = vmatpush1.msra.mxu0 0.0
  %239 = vmatprep.subr.mxu0 0.0
  %240 = vmatpush1.msra.mxu0 0.0
  %241 = vmatprep.subr.mxu0 0.0
  %242 = vmatpush1.msra.mxu0 0.0
  %243 = vmatprep.subr.mxu0 0.0
  %244 = vmatpush1.msra.mxu0 0.0
  %245 = vmatprep.subr.mxu0 0.0
  %246 = vmatpush1.msra.mxu0 0.0
  %247 = vmatprep.subr.mxu0 0.0
  %248 = vmatpush1.msra.mxu0 0.0
  %249 = vmatprep.subr.mxu0 0.0
  %250 = vmatpush1.msra.mxu0 0.0
  %251 = vmatprep.subr.mxu0 0.0
  %252 = vmatpush1.msra.mxu0 0.0
  %253 = vmatprep.subr.mxu0 0.0
  %254 = vmatpush1.msra.mxu0 0.0
  %255 = vmatprep.subr.mxu0 0.0
  %256 = vmatpush1.msra.mxu0 0.0
  %257 = vmatprep.subr.mxu0 0.0
  %258 = vmatpush1.msra.mxu0 0.0
  %259 = vmatprep.subr.mxu0 0.0
  %260 = vmatpush1.msra.mxu0 0.0
  %261 = vmatprep.subr.mxu0 0.0
  %262 = vmatpush1.msra.mxu0 0.0
  %263 = vmatprep.subr.mxu0 0.0
  %264 = vmatpush1.msra.mxu0 0.0
  %265 = vmatprep.subr.mxu0 0.0
  %266 = vmatpush1.msra.mxu0 0.0
  %267 = vmatprep.subr.mxu0 0.0
  %268 = vmatpush1.msra.mxu0 0.0
  %269 = vmatprep.subr.mxu0 0.0
  %270 = vmatpush1.msra.mxu0 0.0
  %271 = vmatprep.subr.mxu0 0.0
  %272 = vmatpush1.msra.mxu0 0.0
  %273 = vmatprep.subr.mxu0 0.0
  %274 = vmatpush1.msra.mxu0 0.0
  %275 = vmatprep.subr.mxu0 0.0
  %276 = vmatpush1.msra.mxu0 0.0
  %277 = vmatprep.subr.mxu0 0.0
  %278 = vmatpush1.msra.mxu0 0.0
  %279 = vmatprep.subr.mxu0 0.0
  %280 = vmatpush1.msra.mxu0 0.0
  %281 = vmatprep.subr.mxu0 0.0
  %282 = vmatpush1.msra.mxu0 0.0
  %283 = vmatprep.subr.mxu0 0.0
  %284 = vmatpush1.msra.mxu0 0.0
  %285 = vmatprep.mubr.f32.mxu0 0.0
  %286 = vmatmul.mubr.f32.gmra.mrb[0].mxu0 %v210
  %v287 = vpop.f32.mrb[0].mxu0
  %v288 = vadd.f32 0.0, %v287
  %v289 = vpop.f32.mrb[0].mxu0
  %290 = vmatprep.mubr.f32.mxu0 0.0
  %291 = vmatmul.mubr.f32.gmra.mrb[0].mxu0 %v213
  %v292 = vpop.f32.mrb[0].mxu0
  %v293 = vadd.f32 0.0, %v292
  %v294 = vpop.f32.mrb[0].mxu0
  %295 = vmatprep.mubr.f32.mxu0 0.0
  %296 = vmatmul.mubr.f32.gmra.mrb[0].mxu0 %v216
  %v297 = vpop.f32.mrb[0].mxu0
  %v298 = vadd.f32 0.0, %v297
  %v299 = vpop.f32.mrb[0].mxu0
  %300 = vmatprep.mubr.f32.mxu0 0.0
  %301 = vmatmul.mubr.f32.gmra.mrb[0].mxu0 %v219
  %v302 = vpop.f32.mrb[0].mxu0
  %v303 = vadd.f32 0.0, %v302
  %v304 = vpop.f32.mrb[0].mxu0
  %305 = vdwg.mxu0
  %v306 = vmax.f32 %v288, 0.0
  %v307 = vmax.f32 %v293, 0.0
  %v308 = vmax.f32 %v298, 0.0
  %v309 = vmax.f32 %v303, 0.0
  %s310 = scalar_lea.vmem %s3, 32
  %v311 = vld [vmem:[%s310] sm:$0xff]
  %v312 = vld [vmem:[%s310 + $0x8] sm:$0xff]
  %v313 = vld [vmem:[%s310 + $0x10] sm:$0xff]
  %v314 = vld [vmem:[%s310 + $0x18] sm:$0xff]
  %v316 = vsel %vm208, %v311, 0
  %v319 = vsel %vm208, %v312, 0
  %v322 = vsel %vm208, %v313, 0
  %v325 = vsel %vm208, %v314, 0
  %327 = vmatprep.subr.mxu0 0.0
  %328 = vmatpush1.msra.mxu0 %v306
  %329 = vmatprep.subr.mxu0 0.0
  %330 = vmatpush1.msra.mxu0 %v307
  %331 = vmatprep.subr.mxu0 0.0
  %332 = vmatpush1.msra.mxu0 %v308
  %333 = vmatprep.subr.mxu0 0.0
  %334 = vmatpush1.msra.mxu0 %v309
  %335 = vmatprep.subr.mxu0 0.0
  %336 = vmatpush1.msra.mxu0 0.0
  %337 = vmatprep.subr.mxu0 0.0
  %338 = vmatpush1.msra.mxu0 0.0
  %339 = vmatprep.subr.mxu0 0.0
  %340 = vmatpush1.msra.mxu0 0.0
  %341 = vmatprep.subr.mxu0 0.0
  %342 = vmatpush1.msra.mxu0 0.0
  %343 = vmatprep.subr.mxu0 0.0
  %344 = vmatpush1.msra.mxu0 0.0
  %345 = vmatprep.subr.mxu0 0.0
  %346 = vmatpush1.msra.mxu0 0.0
  %347 = vmatprep.subr.mxu0 0.0
  %348 = vmatpush1.msra.mxu0 0.0
  %349 = vmatprep.subr.mxu0 0.0
  %350 = vmatpush1.msra.mxu0 0.0
  %351 = vmatprep.subr.mxu0 0.0
  %352 = vmatpush1.msra.mxu0 0.0
  %353 = vmatprep.subr.mxu0 0.0
  %354 = vmatpush1.msra.mxu0 0.0
  %355 = vmatprep.subr.mxu0 0.0
  %356 = vmatpush1.msra.mxu0 0.0
  %357 = vmatprep.subr.mxu0 0.0
  %358 = vmatpush1.msra.mxu0 0.0
  %359 = vmatprep.subr.mxu0 0.0
  %360 = vmatpush1.msra.mxu0 0.0
  %361 = vmatprep.subr.mxu0 0.0
  %362 = vmatpush1.msra.mxu0 0.0
  %363 = vmatprep.subr.mxu0 0.0
  %364 = vmatpush1.msra.mxu0 0.0
  %365 = vmatprep.subr.mxu0 0.0
  %366 = vmatpush1.msra.mxu0 0.0
  %367 = vmatprep.subr.mxu0 0.0
  %368 = vmatpush1.msra.mxu0 0.0
  %369 = vmatprep.subr.mxu0 0.0
  %370 = vmatpush1.msra.mxu0 0.0
  %371 = vmatprep.subr.mxu0 0.0
  %372 = vmatpush1.msra.mxu0 0.0
  %373 = vmatprep.subr.mxu0 0.0
  %374 = vmatpush1.msra.mxu0 0.0
  %375 = vmatprep.subr.mxu0 0.0
  %376 = vmatpush1.msra.mxu0 0.0
  %377 = vmatprep.subr.mxu0 0.0
  %378 = vmatpush1.msra.mxu0 0.0
  %379 = vmatprep.subr.mxu0 0.0
  %380 = vmatpush1.msra.mxu0 0.0
  %381 = vmatprep.subr.mxu0 0.0
  %382 = vmatpush1.msra.mxu0 0.0
  %383 = vmatprep.subr.mxu0 0.0
  %384 = vmatpush1.msra.mxu0 0.0
  %385 = vmatprep.subr.mxu0 0.0
  %386 = vmatpush1.msra.mxu0 0.0
  %387 = vmatprep.subr.mxu0 0.0
  %388 = vmatpush1.msra.mxu0 0.0
  %389 = vmatprep.subr.mxu0 0.0
  %390 = vmatpush1.msra.mxu0 0.0
  %391 = vmatprep.mubr.f32.mxu0 0.0
  %392 = vmatmul.mubr.f32.gmra.mrb[0].mxu0 %v316
  %v393 = vpop.f32.mrb[0].mxu0
  %v394 = vadd.f32 0.0, %v393
  %v395 = vpop.f32.mrb[0].mxu0
  %396 = vmatprep.mubr.f32.mxu0 0.0
  %397 = vmatmul.mubr.f32.gmra.mrb[0].mxu0 %v319
  %v398 = vpop.f32.mrb[0].mxu0
  %v399 = vadd.f32 0.0, %v398
  %v400 = vpop.f32.mrb[0].mxu0
  %401 = vmatprep.mubr.f32.mxu0 0.0
  %402 = vmatmul.mubr.f32.gmra.mrb[0].mxu0 %v322
  %v403 = vpop.f32.mrb[0].mxu0
  %v404 = vadd.f32 0.0, %v403
  %v405 = vpop.f32.mrb[0].mxu0
  %406 = vmatprep.mubr.f32.mxu0 0.0
  %407 = vmatmul.mubr.f32.gmra.mrb[0].mxu0 %v325
  %v408 = vpop.f32.mrb[0].mxu0
  %v409 = vadd.f32 0.0, %v408
  %v410 = vpop.f32.mrb[0].mxu0
  %411 = vdwg.mxu0
  %v412 = vmax.f32 %v394, 0.0
  %v413 = vmax.f32 %v399, 0.0
  %v414 = vmax.f32 %v404, 0.0
  %v415 = vmax.f32 %v409, 0.0
  %s416 = scalar_lea.vmem %s3, 64
  %v417 = vld [vmem:[%s416] sm:$0xff]
  %v418 = vld [vmem:[%s416 + $0x8] sm:$0xff]
  %v419 = vld [vmem:[%s416 + $0x10] sm:$0xff]
  %v420 = vld [vmem:[%s416 + $0x18] sm:$0xff]
  %v422 = vsel %vm208, %v417, 0
  %v425 = vsel %vm208, %v418, 0
  %v428 = vsel %vm208, %v419, 0
  %v431 = vsel %vm208, %v420, 0
  %433 = vmatprep.subr.mxu0 0.0
  %434 = vmatpush1.msra.mxu0 %v412
  %435 = vmatprep.subr.mxu0 0.0
  %436 = vmatpush1.msra.mxu0 %v413
  %437 = vmatprep.subr.mxu0 0.0
  %438 = vmatpush1.msra.mxu0 %v414
  %439 = vmatprep.subr.mxu0 0.0
  %440 = vmatpush1.msra.mxu0 %v415
  %441 = vmatprep.subr.mxu0 0.0
  %442 = vmatpush1.msra.mxu0 0.0
  %443 = vmatprep.subr.mxu0 0.0
  %444 = vmatpush1.msra.mxu0 0.0
  %445 = vmatprep.subr.mxu0 0.0
  %446 = vmatpush1.msra.mxu0 0.0
  %447 = vmatprep.subr.mxu0 0.0
  %448 = vmatpush1.msra.mxu0 0.0
  %449 = vmatprep.subr.mxu0 0.0
  %450 = vmatpush1.msra.mxu0 0.0
  %451 = vmatprep.subr.mxu0 0.0
  %452 = vmatpush1.msra.mxu0 0.0
  %453 = vmatprep.subr.mxu0 0.0
  %454 = vmatpush1.msra.mxu0 0.0
  %455 = vmatprep.subr.mxu0 0.0
  %456 = vmatpush1.msra.mxu0 0.0
  %457 = vmatprep.subr.mxu0 0.0
  %458 = vmatpush1.msra.mxu0 0.0
  %459 = vmatprep.subr.mxu0 0.0
  %460 = vmatpush1.msra.mxu0 0.0
  %461 = vmatprep.subr.mxu0 0.0
  %462 = vmatpush1.msra.mxu0 0.0
  %463 = vmatprep.subr.mxu0 0.0
  %464 = vmatpush1.msra.mxu0 0.0
  %465 = vmatprep.subr.mxu0 0.0
  %466 = vmatpush1.msra.mxu0 0.0
  %467 = vmatprep.subr.mxu0 0.0
  %468 = vmatpush1.msra.mxu0 0.0
  %469 = vmatprep.subr.mxu0 0.0
  %470 = vmatpush1.msra.mxu0 0.0
  %471 = vmatprep.subr.mxu0 0.0
  %472 = vmatpush1.msra.mxu0 0.0
  %473 = vmatprep.subr.mxu0 0.0
  %474 = vmatpush1.msra.mxu0 0.0
  %475 = vmatprep.subr.mxu0 0.0
  %476 = vmatpush1.msra.mxu0 0.0
  %477 = vmatprep.subr.mxu0 0.0
  %478 = vmatpush1.msra.mxu0 0.0
  %479 = vmatprep.subr.mxu0 0.0
  %480 = vmatpush1.msra.mxu0 0.0
  %481 = vmatprep.subr.mxu0 0.0
  %482 = vmatpush1.msra.mxu0 0.0
  %483 = vmatprep.subr.mxu0 0.0
  %484 = vmatpush1.msra.mxu0 0.0
  %485 = vmatprep.subr.mxu0 0.0
  %486 = vmatpush1.msra.mxu0 0.0
  %487 = vmatprep.subr.mxu0 0.0
  %488 = vmatpush1.msra.mxu0 0.0
  %489 = vmatprep.subr.mxu0 0.0
  %490 = vmatpush1.msra.mxu0 0.0
  %491 = vmatprep.subr.mxu0 0.0
  %492 = vmatpush1.msra.mxu0 0.0
  %493 = vmatprep.subr.mxu0 0.0
  %494 = vmatpush1.msra.mxu0 0.0
  %495 = vmatprep.subr.mxu0 0.0
  %496 = vmatpush1.msra.mxu0 0.0
  %497 = vmatprep.mubr.f32.mxu0 0.0
  %498 = vmatmul.mubr.f32.gmra.mrb[0].mxu0 %v422
  %v499 = vpop.f32.mrb[0].mxu0
  %v500 = vadd.f32 0.0, %v499
  %v501 = vpop.f32.mrb[0].mxu0
  %502 = vmatprep.mubr.f32.mxu0 0.0
  %503 = vmatmul.mubr.f32.gmra.mrb[0].mxu0 %v425
  %v504 = vpop.f32.mrb[0].mxu0
  %v505 = vadd.f32 0.0, %v504
  %v506 = vpop.f32.mrb[0].mxu0
  %507 = vmatprep.mubr.f32.mxu0 0.0
  %508 = vmatmul.mubr.f32.gmra.mrb[0].mxu0 %v428
  %v509 = vpop.f32.mrb[0].mxu0
  %v510 = vadd.f32 0.0, %v509
  %v511 = vpop.f32.mrb[0].mxu0
  %512 = vmatprep.mubr.f32.mxu0 0.0
  %513 = vmatmul.mubr.f32.gmra.mrb[0].mxu0 %v431
  %v514 = vpop.f32.mrb[0].mxu0
  %v515 = vadd.f32 0.0, %v514
  %v516 = vpop.f32.mrb[0].mxu0
  %517 = vdwg.mxu0
  %v518 = vmax.f32 %v500, 0.0
  %v519 = vmax.f32 %v505, 0.0
  %v520 = vmax.f32 %v510, 0.0
  %v521 = vmax.f32 %v515, 0.0
  %v522 = vld [vmem:[%s4] sm:$0x1f]
  %v524 = vsel %vm208, %v522, 0
  %526 = vmatprep.subr.mxu0 0.0
  %527 = vmatpush1.msra.mxu0 %v518
  %528 = vmatprep.subr.mxu0 0.0
  %529 = vmatpush1.msra.mxu0 %v519
  %530 = vmatprep.subr.mxu0 0.0
  %531 = vmatpush1.msra.mxu0 %v520
  %532 = vmatprep.subr.mxu0 0.0
  %533 = vmatpush1.msra.mxu0 %v521
  %534 = vmatprep.subr.mxu0 0.0
  %535 = vmatpush1.msra.mxu0 0.0
  %536 = vmatprep.subr.mxu0 0.0
  %537 = vmatpush1.msra.mxu0 0.0
  %538 = vmatprep.subr.mxu0 0.0
  %539 = vmatpush1.msra.mxu0 0.0
  %540 = vmatprep.subr.mxu0 0.0
  %541 = vmatpush1.msra.mxu0 0.0
  %542 = vmatprep.subr.mxu0 0.0
  %543 = vmatpush1.msra.mxu0 0.0
  %544 = vmatprep.subr.mxu0 0.0
  %545 = vmatpush1.msra.mxu0 0.0
  %546 = vmatprep.subr.mxu0 0.0
  %547 = vmatpush1.msra.mxu0 0.0
  %548 = vmatprep.subr.mxu0 0.0
  %549 = vmatpush1.msra.mxu0 0.0
  %550 = vmatprep.subr.mxu0 0.0
  %551 = vmatpush1.msra.mxu0 0.0
  %552 = vmatprep.subr.mxu0 0.0
  %553 = vmatpush1.msra.mxu0 0.0
  %554 = vmatprep.subr.mxu0 0.0
  %555 = vmatpush1.msra.mxu0 0.0
  %556 = vmatprep.subr.mxu0 0.0
  %557 = vmatpush1.msra.mxu0 0.0
  %558 = vmatprep.subr.mxu0 0.0
  %559 = vmatpush1.msra.mxu0 0.0
  %560 = vmatprep.subr.mxu0 0.0
  %561 = vmatpush1.msra.mxu0 0.0
  %562 = vmatprep.subr.mxu0 0.0
  %563 = vmatpush1.msra.mxu0 0.0
  %564 = vmatprep.subr.mxu0 0.0
  %565 = vmatpush1.msra.mxu0 0.0
  %566 = vmatprep.subr.mxu0 0.0
  %567 = vmatpush1.msra.mxu0 0.0
  %568 = vmatprep.subr.mxu0 0.0
  %569 = vmatpush1.msra.mxu0 0.0
  %570 = vmatprep.subr.mxu0 0.0
  %571 = vmatpush1.msra.mxu0 0.0
  %572 = vmatprep.subr.mxu0 0.0
  %573 = vmatpush1.msra.mxu0 0.0
  %574 = vmatprep.subr.mxu0 0.0
  %575 = vmatpush1.msra.mxu0 0.0
  %576 = vmatprep.subr.mxu0 0.0
  %577 = vmatpush1.msra.mxu0 0.0
  %578 = vmatprep.subr.mxu0 0.0
  %579 = vmatpush1.msra.mxu0 0.0
  %580 = vmatprep.subr.mxu0 0.0
  %581 = vmatpush1.msra.mxu0 0.0
  %582 = vmatprep.subr.mxu0 0.0
  %583 = vmatpush1.msra.mxu0 0.0
  %584 = vmatprep.subr.mxu0 0.0
  %585 = vmatpush1.msra.mxu0 0.0
  %586 = vmatprep.subr.mxu0 0.0
  %587 = vmatpush1.msra.mxu0 0.0
  %588 = vmatprep.subr.mxu0 0.0
  %589 = vmatpush1.msra.mxu0 0.0
  %590 = vmatprep.mubr.f32.mxu0 0.0
  %591 = vmatmul.mubr.f32.gmra.mrb[0].mxu0 %v524
  %v592 = vpop.f32.mrb[0].mxu0
  %v593 = vadd.f32 0.0, %v592
  %v594 = vpop.f32.mrb[0].mxu0
  %595 = vdwg.mxu0
  %v596 = vtanh.pop %v593
  %v597 = vld [vmem:[%s5] sm:$0xff]
  %vm598 = vcmask 39936
  %v600 = vsel %vm598, %v597, 0
  %vm602 = vcmask 1044480
  %v604 = vsel %vm602, %v596, 0
  %606 = vmatprep.subr.mxu0 0.0
  %607 = vmatpush1.msra.mxu0 %v604
  %608 = vmatprep.subr.mxu0 0.0
  %609 = vmatpush1.msra.mxu0 0.0
  %610 = vmatprep.subr.mxu0 0.0
  %611 = vmatpush1.msra.mxu0 0.0
  %612 = vmatprep.subr.mxu0 0.0
  %613 = vmatpush1.msra.mxu0 0.0
  %614 = vmatprep.subr.mxu0 0.0
  %615 = vmatpush1.msra.mxu0 0.0
  %616 = vmatprep.subr.mxu0 0.0
  %617 = vmatpush1.msra.mxu0 0.0
  %618 = vmatprep.subr.mxu0 0.0
  %619 = vmatpush1.msra.mxu0 0.0
  %620 = vmatprep.subr.mxu0 0.0
  %621 = vmatpush1.msra.mxu0 0.0
  %622 = vmatprep.subr.mxu0 0.0
  %623 = vmatpush1.msra.mxu0 0.0
  %624 = vmatprep.subr.mxu0 0.0
  %625 = vmatpush1.msra.mxu0 0.0
  %626 = vmatprep.subr.mxu0 0.0
  %627 = vmatpush1.msra.mxu0 0.0
  %628 = vmatprep.subr.mxu0 0.0
  %629 = vmatpush1.msra.mxu0 0.0
  %630 = vmatprep.subr.mxu0 0.0
  %631 = vmatpush1.msra.mxu0 0.0
  %632 = vmatprep.subr.mxu0 0.0
  %633 = vmatpush1.msra.mxu0 0.0
  %634 = vmatprep.subr.mxu0 0.0
  %635 = vmatpush1.msra.mxu0 0.0
  %636 = vmatprep.subr.mxu0 0.0
  %637 = vmatpush1.msra.mxu0 0.0
  %638 = vmatprep.subr.mxu0 0.0
  %639 = vmatpush1.msra.mxu0 0.0
  %640 = vmatprep.subr.mxu0 0.0
  %641 = vmatpush1.msra.mxu0 0.0
  %642 = vmatprep.subr.mxu0 0.0
  %643 = vmatpush1.msra.mxu0 0.0
  %644 = vmatprep.subr.mxu0 0.0
  %645 = vmatpush1.msra.mxu0 0.0
  %646 = vmatprep.subr.mxu0 0.0
  %647 = vmatpush1.msra.mxu0 0.0
  %648 = vmatprep.subr.mxu0 0.0
  %649 = vmatpush1.msra.mxu0 0.0
  %650 = vmatprep.subr.mxu0 0.0
  %651 = vmatpush1.msra.mxu0 0.0
  %652 = vmatprep.subr.mxu0 0.0
  %653 = vmatpush1.msra.mxu0 0.0
  %654 = vmatprep.subr.mxu0 0.0
  %655 = vmatpush1.msra.mxu0 0.0
  %656 = vmatprep.subr.mxu0 0.0
  %657 = vmatpush1.msra.mxu0 0.0
  %658 = vmatprep.subr.mxu0 0.0
  %659 = vmatpush1.msra.mxu0 0.0
  %660 = vmatprep.subr.mxu0 0.0
  %661 = vmatpush1.msra.mxu0 0.0
  %662 = vmatprep.subr.mxu0 0.0
  %663 = vmatpush1.msra.mxu0 0.0
  %664 = vmatprep.subr.mxu0 0.0
  %665 = vmatpush1.msra.mxu0 0.0
  %666 = vmatprep.subr.mxu0 0.0
  %667 = vmatpush1.msra.mxu0 0.0
  %668 = vmatprep.subr.mxu0 0.0
  %669 = vmatpush1.msra.mxu0 0.0
  %670 = vmatprep.mubr.f32.mxu0 0.0
  %671 = vmatmul.mubr.f32.gmra.mrb[0].mxu0 %v600
  %v672 = vpop.f32.mrb[0].mxu0
  %v673 = vadd.f32 0.0, %v672
  %v674 = vpop.f32.mrb[0].mxu0
  %675 = vdwg.mxu0
  %v676 = vmul.f32 %v673, %v82
  %v677 = vadd.f32 %v676, %v64
  %v678 = vand.u32 2147483647, %v89
  %v679 = vmul.f32 %v678, 0.1
  %v680 = vsub.f32 %v89, %v679
  %v681 = vand.u32 2147483647, %v96
  %v682 = vmul.f32 %v681, 0.1
  %v683 = vadd.f32 %v96, %v682
  %v684 = vmax.f32 %v677, %v680
  %v685 = vmin.f32 %v684, %v683
  %v686 = vsub.f32 %v53, %v685
  %v687 = vld [vmem:[%s10] sm:$0xff]
  %v688 = vld [vmem:[%s10 + $0x8] sm:$0xff]
  %v689 = vld [vmem:[%s10 + $0x10] sm:$0xff]
  %v690 = vld [vmem:[%s10 + $0x18] sm:$0xff]
  %v691 = vlaneseq
  %v692 = vshrl.u32 %v691, 7
  %v693 = vsub.s32 0, %v692
  %v694 = vrot.slane %v596, %v693
  %v695 = vmul.f32 %v687, %v694
  %v696 = vmul.f32 %v688, %v694
  %v697 = vmul.f32 %v689, %v694
  %v698 = vmul.f32 %v690, %v694
  %s699 = scalar_lea.vmem %s10, 32
  %v700 = vld [vmem:[%s699] sm:$0xff]
  %v701 = vld [vmem:[%s699 + $0x8] sm:$0xff]
  %v702 = vld [vmem:[%s699 + $0x10] sm:$0xff]
  %v703 = vld [vmem:[%s699 + $0x18] sm:$0xff]
  %v704 = vlaneseq
  %v705 = vshrl.u32 %v704, 7
  %v706 = vsub.s32 1, %v705
  %v707 = vrot.slane %v596, %v706
  %v708 = vmul.f32 %v700, %v707
  %v709 = vmul.f32 %v701, %v707
  %v710 = vmul.f32 %v702, %v707
  %v711 = vmul.f32 %v703, %v707
  %v712 = vadd.f32 %v695, %v708
  %v713 = vadd.f32 %v696, %v709
  %v714 = vadd.f32 %v697, %v710
  %v715 = vadd.f32 %v698, %v711
  %s716 = scalar_lea.vmem %s10, 64
  %v717 = vld [vmem:[%s716] sm:$0xff]
  %v718 = vld [vmem:[%s716 + $0x8] sm:$0xff]
  %v719 = vld [vmem:[%s716 + $0x10] sm:$0xff]
  %v720 = vld [vmem:[%s716 + $0x18] sm:$0xff]
  %v721 = vlaneseq
  %v722 = vshrl.u32 %v721, 7
  %v723 = vsub.s32 2, %v722
  %v724 = vrot.slane %v596, %v723
  %v725 = vmul.f32 %v717, %v724
  %v726 = vmul.f32 %v718, %v724
  %v727 = vmul.f32 %v719, %v724
  %v728 = vmul.f32 %v720, %v724
  %v729 = vadd.f32 %v712, %v725
  %v730 = vadd.f32 %v713, %v726
  %v731 = vadd.f32 %v714, %v727
  %v732 = vadd.f32 %v715, %v728
  %s733 = scalar_lea.vmem %s10, 96
  %v734 = vld [vmem:[%s733] sm:$0xff]
  %v735 = vld [vmem:[%s733 + $0x8] sm:$0xff]
  %v736 = vld [vmem:[%s733 + $0x10] sm:$0xff]
  %v737 = vld [vmem:[%s733 + $0x18] sm:$0xff]
  %v738 = vlaneseq
  %v739 = vshrl.u32 %v738, 7
  %v740 = vsub.s32 3, %v739
  %v741 = vrot.slane %v596, %v740
  %v742 = vmul.f32 %v734, %v741
  %v743 = vmul.f32 %v735, %v741
  %v744 = vmul.f32 %v736, %v741
  %v745 = vmul.f32 %v737, %v741
  %v746 = vadd.f32 %v729, %v742
  %v747 = vadd.f32 %v730, %v743
  %v748 = vadd.f32 %v731, %v744
  %v749 = vadd.f32 %v732, %v745
  %s750 = scalar_lea.vmem %s10, 128
  %v751 = vld [vmem:[%s750] sm:$0xff]
  %v752 = vld [vmem:[%s750 + $0x8] sm:$0xff]
  %v753 = vld [vmem:[%s750 + $0x10] sm:$0xff]
  %v754 = vld [vmem:[%s750 + $0x18] sm:$0xff]
  %v755 = vlaneseq
  %v756 = vshrl.u32 %v755, 7
  %v757 = vsub.s32 4, %v756
  %v758 = vrot.slane %v596, %v757
  %v759 = vmul.f32 %v751, %v758
  %v760 = vmul.f32 %v752, %v758
  %v761 = vmul.f32 %v753, %v758
  %v762 = vmul.f32 %v754, %v758
  %v763 = vadd.f32 %v746, %v759
  %v764 = vadd.f32 %v747, %v760
  %v765 = vadd.f32 %v748, %v761
  %v766 = vadd.f32 %v749, %v762
  %s767 = scalar_lea.vmem %s10, 160
  %v768 = vld [vmem:[%s767] sm:$0xff]
  %v769 = vld [vmem:[%s767 + $0x8] sm:$0xff]
  %v770 = vld [vmem:[%s767 + $0x10] sm:$0xff]
  %v771 = vld [vmem:[%s767 + $0x18] sm:$0xff]
  %v772 = vmul.f32 %v768, %v64
  %v773 = vmul.f32 %v769, %v64
  %v774 = vmul.f32 %v770, %v64
  %v775 = vmul.f32 %v771, %v64
  %v776 = vadd.f32 %v763, %v772
  %v777 = vadd.f32 %v764, %v773
  %v778 = vadd.f32 %v765, %v774
  %v779 = vadd.f32 %v766, %v775
  %s780 = scalar_lea.vmem %s10, 192
  %v781 = vld [vmem:[%s780] sm:$0xff]
  %v782 = vld [vmem:[%s780 + $0x8] sm:$0xff]
  %v783 = vld [vmem:[%s780 + $0x10] sm:$0xff]
  %v784 = vld [vmem:[%s780 + $0x18] sm:$0xff]
  %v785 = vmul.f32 %v781, %v82
  %v786 = vmul.f32 %v782, %v82
  %v787 = vmul.f32 %v783, %v82
  %v788 = vmul.f32 %v784, %v82
  %v789 = vadd.f32 %v776, %v785
  %v790 = vadd.f32 %v777, %v786
  %v791 = vadd.f32 %v778, %v787
  %v792 = vadd.f32 %v779, %v788
  %s793 = scalar_lea.vmem %s10, 224
  %v794 = vld [vmem:[%s793] sm:$0xff]
  %v795 = vld [vmem:[%s793 + $0x8] sm:$0xff]
  %v796 = vld [vmem:[%s793 + $0x10] sm:$0xff]
  %v797 = vld [vmem:[%s793 + $0x18] sm:$0xff]
  %v798 = vmul.f32 %v794, %v89
  %v799 = vmul.f32 %v795, %v89
  %v800 = vmul.f32 %v796, %v89
  %v801 = vmul.f32 %v797, %v89
  %v802 = vadd.f32 %v789, %v798
  %v803 = vadd.f32 %v790, %v799
  %v804 = vadd.f32 %v791, %v800
  %v805 = vadd.f32 %v792, %v801
  %s806 = scalar_lea.vmem %s10, 256
  %v807 = vld [vmem:[%s806] sm:$0xff]
  %v808 = vld [vmem:[%s806 + $0x8] sm:$0xff]
  %v809 = vld [vmem:[%s806 + $0x10] sm:$0xff]
  %v810 = vld [vmem:[%s806 + $0x18] sm:$0xff]
  %v811 = vmul.f32 %v807, %v96
  %v812 = vmul.f32 %v808, %v96
  %v813 = vmul.f32 %v809, %v96
  %v814 = vmul.f32 %v810, %v96
  %v815 = vadd.f32 %v802, %v811
  %v816 = vadd.f32 %v803, %v812
  %v817 = vadd.f32 %v804, %v813
  %v818 = vadd.f32 %v805, %v814
  %v819 = vld [vmem:[%s11] sm:$0xff]
  %v820 = vld [vmem:[%s11 + $0x8] sm:$0xff]
  %v821 = vld [vmem:[%s11 + $0x10] sm:$0xff]
  %v822 = vld [vmem:[%s11 + $0x18] sm:$0xff]
  %824 = vset.pattern.permute.xlu0 0
  %825 = vperm.xlu0 %824, %v819
  %v826 = vpop.permute.xlu0 %825
  %829 = vset.pattern.permute.xlu0 0
  %830 = vperm.xlu0 %829, %v820
  %v831 = vpop.permute.xlu0 %830
  %834 = vset.pattern.permute.xlu0 0
  %835 = vperm.xlu0 %834, %v821
  %v836 = vpop.permute.xlu0 %835
  %839 = vset.pattern.permute.xlu0 0
  %840 = vperm.xlu0 %839, %v822
  %v841 = vpop.permute.xlu0 %840
  %v844 = vsel %vm55, %v815, 0
  %v847 = vsel %vm55, %v816, 0
  %v850 = vsel %vm55, %v817, 0
  %v853 = vsel %vm55, %v818, 0
  %855 = vmatprep.subr.mxu0 0.0
  %856 = vmatpush1.msra.mxu0 %v54
  %857 = vmatprep.subr.mxu0 0.0
  %858 = vmatpush1.msra.mxu0 0.0
  %859 = vmatprep.subr.mxu0 0.0
  %860 = vmatpush1.msra.mxu0 0.0
  %861 = vmatprep.subr.mxu0 0.0
  %862 = vmatpush1.msra.mxu0 0.0
  %863 = vmatprep.subr.mxu0 0.0
  %864 = vmatpush1.msra.mxu0 0.0
  %865 = vmatprep.subr.mxu0 0.0
  %866 = vmatpush1.msra.mxu0 0.0
  %867 = vmatprep.subr.mxu0 0.0
  %868 = vmatpush1.msra.mxu0 0.0
  %869 = vmatprep.subr.mxu0 0.0
  %870 = vmatpush1.msra.mxu0 0.0
  %871 = vmatprep.subr.mxu0 0.0
  %872 = vmatpush1.msra.mxu0 0.0
  %873 = vmatprep.subr.mxu0 0.0
  %874 = vmatpush1.msra.mxu0 0.0
  %875 = vmatprep.subr.mxu0 0.0
  %876 = vmatpush1.msra.mxu0 0.0
  %877 = vmatprep.subr.mxu0 0.0
  %878 = vmatpush1.msra.mxu0 0.0
  %879 = vmatprep.subr.mxu0 0.0
  %880 = vmatpush1.msra.mxu0 0.0
  %881 = vmatprep.subr.mxu0 0.0
  %882 = vmatpush1.msra.mxu0 0.0
  %883 = vmatprep.subr.mxu0 0.0
  %884 = vmatpush1.msra.mxu0 0.0
  %885 = vmatprep.subr.mxu0 0.0
  %886 = vmatpush1.msra.mxu0 0.0
  %887 = vmatprep.subr.mxu0 0.0
  %888 = vmatpush1.msra.mxu0 0.0
  %889 = vmatprep.subr.mxu0 0.0
  %890 = vmatpush1.msra.mxu0 0.0
  %891 = vmatprep.subr.mxu0 0.0
  %892 = vmatpush1.msra.mxu0 0.0
  %893 = vmatprep.subr.mxu0 0.0
  %894 = vmatpush1.msra.mxu0 0.0
  %895 = vmatprep.subr.mxu0 0.0
  %896 = vmatpush1.msra.mxu0 0.0
  %897 = vmatprep.subr.mxu0 0.0
  %898 = vmatpush1.msra.mxu0 0.0
  %899 = vmatprep.subr.mxu0 0.0
  %900 = vmatpush1.msra.mxu0 0.0
  %901 = vmatprep.subr.mxu0 0.0
  %902 = vmatpush1.msra.mxu0 0.0
  %903 = vmatprep.subr.mxu0 0.0
  %904 = vmatpush1.msra.mxu0 0.0
  %905 = vmatprep.subr.mxu0 0.0
  %906 = vmatpush1.msra.mxu0 0.0
  %907 = vmatprep.subr.mxu0 0.0
  %908 = vmatpush1.msra.mxu0 0.0
  %909 = vmatprep.subr.mxu0 0.0
  %910 = vmatpush1.msra.mxu0 0.0
  %911 = vmatprep.subr.mxu0 0.0
  %912 = vmatpush1.msra.mxu0 0.0
  %913 = vmatprep.subr.mxu0 0.0
  %914 = vmatpush1.msra.mxu0 0.0
  %915 = vmatprep.subr.mxu0 0.0
  %916 = vmatpush1.msra.mxu0 0.0
  %917 = vmatprep.subr.mxu0 0.0
  %918 = vmatpush1.msra.mxu0 0.0
  %919 = vmatprep.mubr.f32.mxu0 0.0
  %920 = vmatmul.mubr.f32.gmra.mrb[0].mxu0 %v844
  %v921 = vpop.f32.mrb[0].mxu0
  %v922 = vadd.f32 %v826, %v921
  %v923 = vpop.f32.mrb[0].mxu0
  %924 = vmatprep.mubr.f32.mxu0 0.0
  %925 = vmatmul.mubr.f32.gmra.mrb[0].mxu0 %v847
  %v926 = vpop.f32.mrb[0].mxu0
  %v927 = vadd.f32 %v831, %v926
  %v928 = vpop.f32.mrb[0].mxu0
  %929 = vmatprep.mubr.f32.mxu0 0.0
  %930 = vmatmul.mubr.f32.gmra.mrb[0].mxu0 %v850
  %v931 = vpop.f32.mrb[0].mxu0
  %v932 = vadd.f32 %v836, %v931
  %v933 = vpop.f32.mrb[0].mxu0
  %934 = vmatprep.mubr.f32.mxu0 0.0
  %935 = vmatmul.mubr.f32.gmra.mrb[0].mxu0 %v853
  %v936 = vpop.f32.mrb[0].mxu0
  %v937 = vadd.f32 %v841, %v936
  %v938 = vpop.f32.mrb[0].mxu0
  %939 = vdwg.mxu0
  %v940 = vmax.f32 %v922, 0.0
  %v941 = vmax.f32 %v927, 0.0
  %v942 = vmax.f32 %v932, 0.0
  %v943 = vmax.f32 %v937, 0.0
  %v944 = vld [vmem:[%s12] sm:$0xff]
  %v945 = vld [vmem:[%s12 + $0x8] sm:$0xff]
  %v946 = vld [vmem:[%s12 + $0x10] sm:$0xff]
  %v947 = vld [vmem:[%s12 + $0x18] sm:$0xff]
  %v948 = vld [vmem:[%s13] sm:$0xff]
  %v949 = vld [vmem:[%s13 + $0x8] sm:$0xff]
  %v950 = vld [vmem:[%s13 + $0x10] sm:$0xff]
  %v951 = vld [vmem:[%s13 + $0x18] sm:$0xff]
  %953 = vset.pattern.permute.xlu0 0
  %954 = vperm.xlu0 %953, %v948
  %v955 = vpop.permute.xlu0 %954
  %958 = vset.pattern.permute.xlu0 0
  %959 = vperm.xlu0 %958, %v949
  %v960 = vpop.permute.xlu0 %959
  %963 = vset.pattern.permute.xlu0 0
  %964 = vperm.xlu0 %963, %v950
  %v965 = vpop.permute.xlu0 %964
  %968 = vset.pattern.permute.xlu0 0
  %969 = vperm.xlu0 %968, %v951
  %v970 = vpop.permute.xlu0 %969
  %v973 = vsel %vm208, %v944, 0
  %v976 = vsel %vm208, %v945, 0
  %v979 = vsel %vm208, %v946, 0
  %v982 = vsel %vm208, %v947, 0
  %984 = vmatprep.subr.mxu0 0.0
  %985 = vmatpush1.msra.mxu0 %v940
  %986 = vmatprep.subr.mxu0 0.0
  %987 = vmatpush1.msra.mxu0 %v941
  %988 = vmatprep.subr.mxu0 0.0
  %989 = vmatpush1.msra.mxu0 %v942
  %990 = vmatprep.subr.mxu0 0.0
  %991 = vmatpush1.msra.mxu0 %v943
  %992 = vmatprep.subr.mxu0 0.0
  %993 = vmatpush1.msra.mxu0 0.0
  %994 = vmatprep.subr.mxu0 0.0
  %995 = vmatpush1.msra.mxu0 0.0
  %996 = vmatprep.subr.mxu0 0.0
  %997 = vmatpush1.msra.mxu0 0.0
  %998 = vmatprep.subr.mxu0 0.0
  %999 = vmatpush1.msra.mxu0 0.0
  %1000 = vmatprep.subr.mxu0 0.0
  %1001 = vmatpush1.msra.mxu0 0.0
  %1002 = vmatprep.subr.mxu0 0.0
  %1003 = vmatpush1.msra.mxu0 0.0
  %1004 = vmatprep.subr.mxu0 0.0
  %1005 = vmatpush1.msra.mxu0 0.0
  %1006 = vmatprep.subr.mxu0 0.0
  %1007 = vmatpush1.msra.mxu0 0.0
  %1008 = vmatprep.subr.mxu0 0.0
  %1009 = vmatpush1.msra.mxu0 0.0
  %1010 = vmatprep.subr.mxu0 0.0
  %1011 = vmatpush1.msra.mxu0 0.0
  %1012 = vmatprep.subr.mxu0 0.0
  %1013 = vmatpush1.msra.mxu0 0.0
  %1014 = vmatprep.subr.mxu0 0.0
  %1015 = vmatpush1.msra.mxu0 0.0
  %1016 = vmatprep.subr.mxu0 0.0
  %1017 = vmatpush1.msra.mxu0 0.0
  %1018 = vmatprep.subr.mxu0 0.0
  %1019 = vmatpush1.msra.mxu0 0.0
  %1020 = vmatprep.subr.mxu0 0.0
  %1021 = vmatpush1.msra.mxu0 0.0
  %1022 = vmatprep.subr.mxu0 0.0
  %1023 = vmatpush1.msra.mxu0 0.0
  %1024 = vmatprep.subr.mxu0 0.0
  %1025 = vmatpush1.msra.mxu0 0.0
  %1026 = vmatprep.subr.mxu0 0.0
  %1027 = vmatpush1.msra.mxu0 0.0
  %1028 = vmatprep.subr.mxu0 0.0
  %1029 = vmatpush1.msra.mxu0 0.0
  %1030 = vmatprep.subr.mxu0 0.0
  %1031 = vmatpush1.msra.mxu0 0.0
  %1032 = vmatprep.subr.mxu0 0.0
  %1033 = vmatpush1.msra.mxu0 0.0
  %1034 = vmatprep.subr.mxu0 0.0
  %1035 = vmatpush1.msra.mxu0 0.0
  %1036 = vmatprep.subr.mxu0 0.0
  %1037 = vmatpush1.msra.mxu0 0.0
  %1038 = vmatprep.subr.mxu0 0.0
  %1039 = vmatpush1.msra.mxu0 0.0
  %1040 = vmatprep.subr.mxu0 0.0
  %1041 = vmatpush1.msra.mxu0 0.0
  %1042 = vmatprep.subr.mxu0 0.0
  %1043 = vmatpush1.msra.mxu0 0.0
  %1044 = vmatprep.subr.mxu0 0.0
  %1045 = vmatpush1.msra.mxu0 0.0
  %1046 = vmatprep.subr.mxu0 0.0
  %1047 = vmatpush1.msra.mxu0 0.0
  %1048 = vmatprep.mubr.f32.mxu0 0.0
  %1049 = vmatmul.mubr.f32.gmra.mrb[0].mxu0 %v973
  %v1050 = vpop.f32.mrb[0].mxu0
  %v1051 = vadd.f32 %v955, %v1050
  %v1052 = vpop.f32.mrb[0].mxu0
  %1053 = vmatprep.mubr.f32.mxu0 0.0
  %1054 = vmatmul.mubr.f32.gmra.mrb[0].mxu0 %v976
  %v1055 = vpop.f32.mrb[0].mxu0
  %v1056 = vadd.f32 %v960, %v1055
  %v1057 = vpop.f32.mrb[0].mxu0
  %1058 = vmatprep.mubr.f32.mxu0 0.0
  %1059 = vmatmul.mubr.f32.gmra.mrb[0].mxu0 %v979
  %v1060 = vpop.f32.mrb[0].mxu0
  %v1061 = vadd.f32 %v965, %v1060
  %v1062 = vpop.f32.mrb[0].mxu0
  %1063 = vmatprep.mubr.f32.mxu0 0.0
  %1064 = vmatmul.mubr.f32.gmra.mrb[0].mxu0 %v982
  %v1065 = vpop.f32.mrb[0].mxu0
  %v1066 = vadd.f32 %v970, %v1065
  %v1067 = vpop.f32.mrb[0].mxu0
  %1068 = vdwg.mxu0
  %v1069 = vmax.f32 %v1051, 0.0
  %v1070 = vmax.f32 %v1056, 0.0
  %v1071 = vmax.f32 %v1061, 0.0
  %v1072 = vmax.f32 %v1066, 0.0
  %v1073 = vld [vmem:[%s14] sm:$0x7]
  %v1074 = vld [vmem:[%s15] sm:$0x7]
  %1076 = vset.pattern.permute.xlu0 0
  %1077 = vperm.xlu0 %1076, %v1074
  %v1078 = vpop.permute.xlu0 %1077
  %v1081 = vsel %vm208, %v1073, 0
  %1083 = vmatprep.subr.mxu0 0.0
  %1084 = vmatpush1.msra.mxu0 %v1069
  %1085 = vmatprep.subr.mxu0 0.0
  %1086 = vmatpush1.msra.mxu0 %v1070
  %1087 = vmatprep.subr.mxu0 0.0
  %1088 = vmatpush1.msra.mxu0 %v1071
  %1089 = vmatprep.subr.mxu0 0.0
  %1090 = vmatpush1.msra.mxu0 %v1072
  %1091 = vmatprep.subr.mxu0 0.0
  %1092 = vmatpush1.msra.mxu0 0.0
  %1093 = vmatprep.subr.mxu0 0.0
  %1094 = vmatpush1.msra.mxu0 0.0
  %1095 = vmatprep.subr.mxu0 0.0
  %1096 = vmatpush1.msra.mxu0 0.0
  %1097 = vmatprep.subr.mxu0 0.0
  %1098 = vmatpush1.msra.mxu0 0.0
  %1099 = vmatprep.subr.mxu0 0.0
  %1100 = vmatpush1.msra.mxu0 0.0
  %1101 = vmatprep.subr.mxu0 0.0
  %1102 = vmatpush1.msra.mxu0 0.0
  %1103 = vmatprep.subr.mxu0 0.0
  %1104 = vmatpush1.msra.mxu0 0.0
  %1105 = vmatprep.subr.mxu0 0.0
  %1106 = vmatpush1.msra.mxu0 0.0
  %1107 = vmatprep.subr.mxu0 0.0
  %1108 = vmatpush1.msra.mxu0 0.0
  %1109 = vmatprep.subr.mxu0 0.0
  %1110 = vmatpush1.msra.mxu0 0.0
  %1111 = vmatprep.subr.mxu0 0.0
  %1112 = vmatpush1.msra.mxu0 0.0
  %1113 = vmatprep.subr.mxu0 0.0
  %1114 = vmatpush1.msra.mxu0 0.0
  %1115 = vmatprep.subr.mxu0 0.0
  %1116 = vmatpush1.msra.mxu0 0.0
  %1117 = vmatprep.subr.mxu0 0.0
  %1118 = vmatpush1.msra.mxu0 0.0
  %1119 = vmatprep.subr.mxu0 0.0
  %1120 = vmatpush1.msra.mxu0 0.0
  %1121 = vmatprep.subr.mxu0 0.0
  %1122 = vmatpush1.msra.mxu0 0.0
  %1123 = vmatprep.subr.mxu0 0.0
  %1124 = vmatpush1.msra.mxu0 0.0
  %1125 = vmatprep.subr.mxu0 0.0
  %1126 = vmatpush1.msra.mxu0 0.0
  %1127 = vmatprep.subr.mxu0 0.0
  %1128 = vmatpush1.msra.mxu0 0.0
  %1129 = vmatprep.subr.mxu0 0.0
  %1130 = vmatpush1.msra.mxu0 0.0
  %1131 = vmatprep.subr.mxu0 0.0
  %1132 = vmatpush1.msra.mxu0 0.0
  %1133 = vmatprep.subr.mxu0 0.0
  %1134 = vmatpush1.msra.mxu0 0.0
  %1135 = vmatprep.subr.mxu0 0.0
  %1136 = vmatpush1.msra.mxu0 0.0
  %1137 = vmatprep.subr.mxu0 0.0
  %1138 = vmatpush1.msra.mxu0 0.0
  %1139 = vmatprep.subr.mxu0 0.0
  %1140 = vmatpush1.msra.mxu0 0.0
  %1141 = vmatprep.subr.mxu0 0.0
  %1142 = vmatpush1.msra.mxu0 0.0
  %1143 = vmatprep.subr.mxu0 0.0
  %1144 = vmatpush1.msra.mxu0 0.0
  %1145 = vmatprep.subr.mxu0 0.0
  %1146 = vmatpush1.msra.mxu0 0.0
  %1147 = vmatprep.mubr.f32.mxu0 0.0
  %1148 = vmatmul.mubr.f32.gmra.mrb[0].mxu0 %v1081
  %v1149 = vpop.f32.mrb[0].mxu0
  %v1150 = vadd.f32 %v1078, %v1149
  %v1151 = vpop.f32.mrb[0].mxu0
  %1152 = vdwg.mxu0
  %v1153 = vsel %vm55, %v686, 0.0
  %v1154 = vrot.slane %v1153, 4
  %v1155 = vadd.f32 %v1153, %v1154
  %v1156 = vrot.slane %v1155, 2
  %v1157 = vadd.f32 %v1155, %v1156
  %v1158 = vrot.slane %v1157, 1
  %v1159 = vadd.f32 %v1157, %v1158
  %v1160 = vmul.f32 %v1159, %v63
  %v1161 = vsub.f32 %v686, %v1160
  %v1162 = vmul.f32 %v1161, %v1161
  %v1163 = vsel %vm55, %v1162, 0.0
  %v1164 = vrot.slane %v1163, 4
  %v1165 = vadd.f32 %v1163, %v1164
  %v1166 = vrot.slane %v1165, 2
  %v1167 = vadd.f32 %v1165, %v1166
  %v1168 = vrot.slane %v1167, 1
  %v1169 = vadd.f32 %v1167, %v1168
  %v1170 = vmul.f32 %v1169, %v63
  %v1171 = vrsqrt.pop %v1170
  %v1172 = vmul.f32 %v1170, %v1171
  %vm1173 = vcmp.eq.f32.partialorder %v1170, inf
  %v1174 = vsel %vm1173, %v1170, %v1172
  %vm1175 = vcmp.eq.f32.partialorder %v1170, 0.0
  %v1176 = vand.u32 %v1170, 2147483648
  %v1177 = vsel %vm1175, %v1176, %v1174
  %v1178 = vadd.f32 %v1177, 1e-05
  %v1179 = vsel %vm55, %v686, inf
  %v1180 = vrot.slane %v1179, 4
  %v1181 = vmin.f32 %v1179, %v1180
  %v1182 = vrot.slane %v1181, 2
  %v1183 = vmin.f32 %v1181, %v1182
  %v1184 = vrot.slane %v1183, 1
  %v1185 = vmin.f32 %v1183, %v1184
  %v1186 = vsel %vm55, %v686, -inf
  %v1187 = vrot.slane %v1186, 4
  %v1188 = vmax.f32 %v1186, %v1187
  %v1189 = vrot.slane %v1188, 2
  %v1190 = vmax.f32 %v1188, %v1189
  %v1191 = vrot.slane %v1190, 1
  %v1192 = vmax.f32 %v1190, %v1191
  %v1193 = vrcp.pop %v1178
  %v1194 = vmul.f32 %v1161, %v1193
  %s1195 = scalar_lea.vmem %s2, 32
  %v1196 = vld [vmem:[%s1195] sm:$0xff]
  %v1197 = vld [vmem:[%s1195 + $0x8] sm:$0xff]
  %v1198 = vld [vmem:[%s1195 + $0x10] sm:$0xff]
  %v1199 = vld [vmem:[%s1195 + $0x18] sm:$0xff]
  %v1201 = vsel %vm55, %v1196, 0
  %v1204 = vsel %vm55, %v1197, 0
  %v1207 = vsel %vm55, %v1198, 0
  %v1210 = vsel %vm55, %v1199, 0
  %1212 = vmatprep.subr.mxu0 0.0
  %1213 = vmatpush1.msra.mxu0 %v1194
  %1214 = vmatprep.subr.mxu0 0.0
  %1215 = vmatpush1.msra.mxu0 0.0
  %1216 = vmatprep.subr.mxu0 0.0
  %1217 = vmatpush1.msra.mxu0 0.0
  %1218 = vmatprep.subr.mxu0 0.0
  %1219 = vmatpush1.msra.mxu0 0.0
  %1220 = vmatprep.subr.mxu0 0.0
  %1221 = vmatpush1.msra.mxu0 0.0
  %1222 = vmatprep.subr.mxu0 0.0
  %1223 = vmatpush1.msra.mxu0 0.0
  %1224 = vmatprep.subr.mxu0 0.0
  %1225 = vmatpush1.msra.mxu0 0.0
  %1226 = vmatprep.subr.mxu0 0.0
  %1227 = vmatpush1.msra.mxu0 0.0
  %1228 = vmatprep.subr.mxu0 0.0
  %1229 = vmatpush1.msra.mxu0 0.0
  %1230 = vmatprep.subr.mxu0 0.0
  %1231 = vmatpush1.msra.mxu0 0.0
  %1232 = vmatprep.subr.mxu0 0.0
  %1233 = vmatpush1.msra.mxu0 0.0
  %1234 = vmatprep.subr.mxu0 0.0
  %1235 = vmatpush1.msra.mxu0 0.0
  %1236 = vmatprep.subr.mxu0 0.0
  %1237 = vmatpush1.msra.mxu0 0.0
  %1238 = vmatprep.subr.mxu0 0.0
  %1239 = vmatpush1.msra.mxu0 0.0
  %1240 = vmatprep.subr.mxu0 0.0
  %1241 = vmatpush1.msra.mxu0 0.0
  %1242 = vmatprep.subr.mxu0 0.0
  %1243 = vmatpush1.msra.mxu0 0.0
  %1244 = vmatprep.subr.mxu0 0.0
  %1245 = vmatpush1.msra.mxu0 0.0
  %1246 = vmatprep.subr.mxu0 0.0
  %1247 = vmatpush1.msra.mxu0 0.0
  %1248 = vmatprep.subr.mxu0 0.0
  %1249 = vmatpush1.msra.mxu0 0.0
  %1250 = vmatprep.subr.mxu0 0.0
  %1251 = vmatpush1.msra.mxu0 0.0
  %1252 = vmatprep.subr.mxu0 0.0
  %1253 = vmatpush1.msra.mxu0 0.0
  %1254 = vmatprep.subr.mxu0 0.0
  %1255 = vmatpush1.msra.mxu0 0.0
  %1256 = vmatprep.subr.mxu0 0.0
  %1257 = vmatpush1.msra.mxu0 0.0
  %1258 = vmatprep.subr.mxu0 0.0
  %1259 = vmatpush1.msra.mxu0 0.0
  %1260 = vmatprep.subr.mxu0 0.0
  %1261 = vmatpush1.msra.mxu0 0.0
  %1262 = vmatprep.subr.mxu0 0.0
  %1263 = vmatpush1.msra.mxu0 0.0
  %1264 = vmatprep.subr.mxu0 0.0
  %1265 = vmatpush1.msra.mxu0 0.0
  %1266 = vmatprep.subr.mxu0 0.0
  %1267 = vmatpush1.msra.mxu0 0.0
  %1268 = vmatprep.subr.mxu0 0.0
  %1269 = vmatpush1.msra.mxu0 0.0
  %1270 = vmatprep.subr.mxu0 0.0
  %1271 = vmatpush1.msra.mxu0 0.0
  %1272 = vmatprep.subr.mxu0 0.0
  %1273 = vmatpush1.msra.mxu0 0.0
  %1274 = vmatprep.subr.mxu0 0.0
  %1275 = vmatpush1.msra.mxu0 0.0
  %1276 = vmatprep.mubr.f32.mxu0 0.0
  %1277 = vmatmul.mubr.f32.gmra.mrb[0].mxu0 %v1201
  %v1278 = vpop.f32.mrb[0].mxu0
  %v1279 = vadd.f32 0.0, %v1278
  %v1280 = vpop.f32.mrb[0].mxu0
  %1281 = vmatprep.mubr.f32.mxu0 0.0
  %1282 = vmatmul.mubr.f32.gmra.mrb[0].mxu0 %v1204
  %v1283 = vpop.f32.mrb[0].mxu0
  %v1284 = vadd.f32 0.0, %v1283
  %v1285 = vpop.f32.mrb[0].mxu0
  %1286 = vmatprep.mubr.f32.mxu0 0.0
  %1287 = vmatmul.mubr.f32.gmra.mrb[0].mxu0 %v1207
  %v1288 = vpop.f32.mrb[0].mxu0
  %v1289 = vadd.f32 0.0, %v1288
  %v1290 = vpop.f32.mrb[0].mxu0
  %1291 = vmatprep.mubr.f32.mxu0 0.0
  %1292 = vmatmul.mubr.f32.gmra.mrb[0].mxu0 %v1210
  %v1293 = vpop.f32.mrb[0].mxu0
  %v1294 = vadd.f32 0.0, %v1293
  %v1295 = vpop.f32.mrb[0].mxu0
  %1296 = vdwg.mxu0
  %v1297 = vmax.f32 %v1279, 0.0
  %v1298 = vmax.f32 %v1284, 0.0
  %v1299 = vmax.f32 %v1289, 0.0
  %v1300 = vmax.f32 %v1294, 0.0
  %s1301 = scalar_lea.vmem %s3, 96
  %v1302 = vld [vmem:[%s1301] sm:$0xff]
  %v1303 = vld [vmem:[%s1301 + $0x8] sm:$0xff]
  %v1304 = vld [vmem:[%s1301 + $0x10] sm:$0xff]
  %v1305 = vld [vmem:[%s1301 + $0x18] sm:$0xff]
  %v1307 = vsel %vm208, %v1302, 0
  %v1310 = vsel %vm208, %v1303, 0
  %v1313 = vsel %vm208, %v1304, 0
  %v1316 = vsel %vm208, %v1305, 0
  %1318 = vmatprep.subr.mxu0 0.0
  %1319 = vmatpush1.msra.mxu0 %v1297
  %1320 = vmatprep.subr.mxu0 0.0
  %1321 = vmatpush1.msra.mxu0 %v1298
  %1322 = vmatprep.subr.mxu0 0.0
  %1323 = vmatpush1.msra.mxu0 %v1299
  %1324 = vmatprep.subr.mxu0 0.0
  %1325 = vmatpush1.msra.mxu0 %v1300
  %1326 = vmatprep.subr.mxu0 0.0
  %1327 = vmatpush1.msra.mxu0 0.0
  %1328 = vmatprep.subr.mxu0 0.0
  %1329 = vmatpush1.msra.mxu0 0.0
  %1330 = vmatprep.subr.mxu0 0.0
  %1331 = vmatpush1.msra.mxu0 0.0
  %1332 = vmatprep.subr.mxu0 0.0
  %1333 = vmatpush1.msra.mxu0 0.0
  %1334 = vmatprep.subr.mxu0 0.0
  %1335 = vmatpush1.msra.mxu0 0.0
  %1336 = vmatprep.subr.mxu0 0.0
  %1337 = vmatpush1.msra.mxu0 0.0
  %1338 = vmatprep.subr.mxu0 0.0
  %1339 = vmatpush1.msra.mxu0 0.0
  %1340 = vmatprep.subr.mxu0 0.0
  %1341 = vmatpush1.msra.mxu0 0.0
  %1342 = vmatprep.subr.mxu0 0.0
  %1343 = vmatpush1.msra.mxu0 0.0
  %1344 = vmatprep.subr.mxu0 0.0
  %1345 = vmatpush1.msra.mxu0 0.0
  %1346 = vmatprep.subr.mxu0 0.0
  %1347 = vmatpush1.msra.mxu0 0.0
  %1348 = vmatprep.subr.mxu0 0.0
  %1349 = vmatpush1.msra.mxu0 0.0
  %1350 = vmatprep.subr.mxu0 0.0
  %1351 = vmatpush1.msra.mxu0 0.0
  %1352 = vmatprep.subr.mxu0 0.0
  %1353 = vmatpush1.msra.mxu0 0.0
  %1354 = vmatprep.subr.mxu0 0.0
  %1355 = vmatpush1.msra.mxu0 0.0
  %1356 = vmatprep.subr.mxu0 0.0
  %1357 = vmatpush1.msra.mxu0 0.0
  %1358 = vmatprep.subr.mxu0 0.0
  %1359 = vmatpush1.msra.mxu0 0.0
  %1360 = vmatprep.subr.mxu0 0.0
  %1361 = vmatpush1.msra.mxu0 0.0
  %1362 = vmatprep.subr.mxu0 0.0
  %1363 = vmatpush1.msra.mxu0 0.0
  %1364 = vmatprep.subr.mxu0 0.0
  %1365 = vmatpush1.msra.mxu0 0.0
  %1366 = vmatprep.subr.mxu0 0.0
  %1367 = vmatpush1.msra.mxu0 0.0
  %1368 = vmatprep.subr.mxu0 0.0
  %1369 = vmatpush1.msra.mxu0 0.0
  %1370 = vmatprep.subr.mxu0 0.0
  %1371 = vmatpush1.msra.mxu0 0.0
  %1372 = vmatprep.subr.mxu0 0.0
  %1373 = vmatpush1.msra.mxu0 0.0
  %1374 = vmatprep.subr.mxu0 0.0
  %1375 = vmatpush1.msra.mxu0 0.0
  %1376 = vmatprep.subr.mxu0 0.0
  %1377 = vmatpush1.msra.mxu0 0.0
  %1378 = vmatprep.subr.mxu0 0.0
  %1379 = vmatpush1.msra.mxu0 0.0
  %1380 = vmatprep.subr.mxu0 0.0
  %1381 = vmatpush1.msra.mxu0 0.0
  %1382 = vmatprep.mubr.f32.mxu0 0.0
  %1383 = vmatmul.mubr.f32.gmra.mrb[0].mxu0 %v1307
  %v1384 = vpop.f32.mrb[0].mxu0
  %v1385 = vadd.f32 0.0, %v1384
  %v1386 = vpop.f32.mrb[0].mxu0
  %1387 = vmatprep.mubr.f32.mxu0 0.0
  %1388 = vmatmul.mubr.f32.gmra.mrb[0].mxu0 %v1310
  %v1389 = vpop.f32.mrb[0].mxu0
  %v1390 = vadd.f32 0.0, %v1389
  %v1391 = vpop.f32.mrb[0].mxu0
  %1392 = vmatprep.mubr.f32.mxu0 0.0
  %1393 = vmatmul.mubr.f32.gmra.mrb[0].mxu0 %v1313
  %v1394 = vpop.f32.mrb[0].mxu0
  %v1395 = vadd.f32 0.0, %v1394
  %v1396 = vpop.f32.mrb[0].mxu0
  %1397 = vmatprep.mubr.f32.mxu0 0.0
  %1398 = vmatmul.mubr.f32.gmra.mrb[0].mxu0 %v1316
  %v1399 = vpop.f32.mrb[0].mxu0
  %v1400 = vadd.f32 0.0, %v1399
  %v1401 = vpop.f32.mrb[0].mxu0
  %1402 = vdwg.mxu0
  %v1403 = vmax.f32 %v1385, 0.0
  %v1404 = vmax.f32 %v1390, 0.0
  %v1405 = vmax.f32 %v1395, 0.0
  %v1406 = vmax.f32 %v1400, 0.0
  %s1407 = scalar_lea.vmem %s3, 128
  %v1408 = vld [vmem:[%s1407] sm:$0xff]
  %v1409 = vld [vmem:[%s1407 + $0x8] sm:$0xff]
  %v1410 = vld [vmem:[%s1407 + $0x10] sm:$0xff]
  %v1411 = vld [vmem:[%s1407 + $0x18] sm:$0xff]
  %v1413 = vsel %vm208, %v1408, 0
  %v1416 = vsel %vm208, %v1409, 0
  %v1419 = vsel %vm208, %v1410, 0
  %v1422 = vsel %vm208, %v1411, 0
  %1424 = vmatprep.subr.mxu0 0.0
  %1425 = vmatpush1.msra.mxu0 %v1403
  %1426 = vmatprep.subr.mxu0 0.0
  %1427 = vmatpush1.msra.mxu0 %v1404
  %1428 = vmatprep.subr.mxu0 0.0
  %1429 = vmatpush1.msra.mxu0 %v1405
  %1430 = vmatprep.subr.mxu0 0.0
  %1431 = vmatpush1.msra.mxu0 %v1406
  %1432 = vmatprep.subr.mxu0 0.0
  %1433 = vmatpush1.msra.mxu0 0.0
  %1434 = vmatprep.subr.mxu0 0.0
  %1435 = vmatpush1.msra.mxu0 0.0
  %1436 = vmatprep.subr.mxu0 0.0
  %1437 = vmatpush1.msra.mxu0 0.0
  %1438 = vmatprep.subr.mxu0 0.0
  %1439 = vmatpush1.msra.mxu0 0.0
  %1440 = vmatprep.subr.mxu0 0.0
  %1441 = vmatpush1.msra.mxu0 0.0
  %1442 = vmatprep.subr.mxu0 0.0
  %1443 = vmatpush1.msra.mxu0 0.0
  %1444 = vmatprep.subr.mxu0 0.0
  %1445 = vmatpush1.msra.mxu0 0.0
  %1446 = vmatprep.subr.mxu0 0.0
  %1447 = vmatpush1.msra.mxu0 0.0
  %1448 = vmatprep.subr.mxu0 0.0
  %1449 = vmatpush1.msra.mxu0 0.0
  %1450 = vmatprep.subr.mxu0 0.0
  %1451 = vmatpush1.msra.mxu0 0.0
  %1452 = vmatprep.subr.mxu0 0.0
  %1453 = vmatpush1.msra.mxu0 0.0
  %1454 = vmatprep.subr.mxu0 0.0
  %1455 = vmatpush1.msra.mxu0 0.0
  %1456 = vmatprep.subr.mxu0 0.0
  %1457 = vmatpush1.msra.mxu0 0.0
  %1458 = vmatprep.subr.mxu0 0.0
  %1459 = vmatpush1.msra.mxu0 0.0
  %1460 = vmatprep.subr.mxu0 0.0
  %1461 = vmatpush1.msra.mxu0 0.0
  %1462 = vmatprep.subr.mxu0 0.0
  %1463 = vmatpush1.msra.mxu0 0.0
  %1464 = vmatprep.subr.mxu0 0.0
  %1465 = vmatpush1.msra.mxu0 0.0
  %1466 = vmatprep.subr.mxu0 0.0
  %1467 = vmatpush1.msra.mxu0 0.0
  %1468 = vmatprep.subr.mxu0 0.0
  %1469 = vmatpush1.msra.mxu0 0.0
  %1470 = vmatprep.subr.mxu0 0.0
  %1471 = vmatpush1.msra.mxu0 0.0
  %1472 = vmatprep.subr.mxu0 0.0
  %1473 = vmatpush1.msra.mxu0 0.0
  %1474 = vmatprep.subr.mxu0 0.0
  %1475 = vmatpush1.msra.mxu0 0.0
  %1476 = vmatprep.subr.mxu0 0.0
  %1477 = vmatpush1.msra.mxu0 0.0
  %1478 = vmatprep.subr.mxu0 0.0
  %1479 = vmatpush1.msra.mxu0 0.0
  %1480 = vmatprep.subr.mxu0 0.0
  %1481 = vmatpush1.msra.mxu0 0.0
  %1482 = vmatprep.subr.mxu0 0.0
  %1483 = vmatpush1.msra.mxu0 0.0
  %1484 = vmatprep.subr.mxu0 0.0
  %1485 = vmatpush1.msra.mxu0 0.0
  %1486 = vmatprep.subr.mxu0 0.0
  %1487 = vmatpush1.msra.mxu0 0.0
  %1488 = vmatprep.mubr.f32.mxu0 0.0
  %1489 = vmatmul.mubr.f32.gmra.mrb[0].mxu0 %v1413
  %v1490 = vpop.f32.mrb[0].mxu0
  %v1491 = vadd.f32 0.0, %v1490
  %v1492 = vpop.f32.mrb[0].mxu0
  %1493 = vmatprep.mubr.f32.mxu0 0.0
  %1494 = vmatmul.mubr.f32.gmra.mrb[0].mxu0 %v1416
  %v1495 = vpop.f32.mrb[0].mxu0
  %v1496 = vadd.f32 0.0, %v1495
  %v1497 = vpop.f32.mrb[0].mxu0
  %1498 = vmatprep.mubr.f32.mxu0 0.0
  %1499 = vmatmul.mubr.f32.gmra.mrb[0].mxu0 %v1419
  %v1500 = vpop.f32.mrb[0].mxu0
  %v1501 = vadd.f32 0.0, %v1500
  %v1502 = vpop.f32.mrb[0].mxu0
  %1503 = vmatprep.mubr.f32.mxu0 0.0
  %1504 = vmatmul.mubr.f32.gmra.mrb[0].mxu0 %v1422
  %v1505 = vpop.f32.mrb[0].mxu0
  %v1506 = vadd.f32 0.0, %v1505
  %v1507 = vpop.f32.mrb[0].mxu0
  %1508 = vdwg.mxu0
  %v1509 = vmax.f32 %v1491, 0.0
  %v1510 = vmax.f32 %v1496, 0.0
  %v1511 = vmax.f32 %v1501, 0.0
  %v1512 = vmax.f32 %v1506, 0.0
  %s1513 = scalar_lea.vmem %s3, 160
  %v1514 = vld [vmem:[%s1513] sm:$0xff]
  %v1515 = vld [vmem:[%s1513 + $0x8] sm:$0xff]
  %v1516 = vld [vmem:[%s1513 + $0x10] sm:$0xff]
  %v1517 = vld [vmem:[%s1513 + $0x18] sm:$0xff]
  %v1519 = vsel %vm208, %v1514, 0
  %v1522 = vsel %vm208, %v1515, 0
  %v1525 = vsel %vm208, %v1516, 0
  %v1528 = vsel %vm208, %v1517, 0
  %1530 = vmatprep.subr.mxu0 0.0
  %1531 = vmatpush1.msra.mxu0 %v1509
  %1532 = vmatprep.subr.mxu0 0.0
  %1533 = vmatpush1.msra.mxu0 %v1510
  %1534 = vmatprep.subr.mxu0 0.0
  %1535 = vmatpush1.msra.mxu0 %v1511
  %1536 = vmatprep.subr.mxu0 0.0
  %1537 = vmatpush1.msra.mxu0 %v1512
  %1538 = vmatprep.subr.mxu0 0.0
  %1539 = vmatpush1.msra.mxu0 0.0
  %1540 = vmatprep.subr.mxu0 0.0
  %1541 = vmatpush1.msra.mxu0 0.0
  %1542 = vmatprep.subr.mxu0 0.0
  %1543 = vmatpush1.msra.mxu0 0.0
  %1544 = vmatprep.subr.mxu0 0.0
  %1545 = vmatpush1.msra.mxu0 0.0
  %1546 = vmatprep.subr.mxu0 0.0
  %1547 = vmatpush1.msra.mxu0 0.0
  %1548 = vmatprep.subr.mxu0 0.0
  %1549 = vmatpush1.msra.mxu0 0.0
  %1550 = vmatprep.subr.mxu0 0.0
  %1551 = vmatpush1.msra.mxu0 0.0
  %1552 = vmatprep.subr.mxu0 0.0
  %1553 = vmatpush1.msra.mxu0 0.0
  %1554 = vmatprep.subr.mxu0 0.0
  %1555 = vmatpush1.msra.mxu0 0.0
  %1556 = vmatprep.subr.mxu0 0.0
  %1557 = vmatpush1.msra.mxu0 0.0
  %1558 = vmatprep.subr.mxu0 0.0
  %1559 = vmatpush1.msra.mxu0 0.0
  %1560 = vmatprep.subr.mxu0 0.0
  %1561 = vmatpush1.msra.mxu0 0.0
  %1562 = vmatprep.subr.mxu0 0.0
  %1563 = vmatpush1.msra.mxu0 0.0
  %1564 = vmatprep.subr.mxu0 0.0
  %1565 = vmatpush1.msra.mxu0 0.0
  %1566 = vmatprep.subr.mxu0 0.0
  %1567 = vmatpush1.msra.mxu0 0.0
  %1568 = vmatprep.subr.mxu0 0.0
  %1569 = vmatpush1.msra.mxu0 0.0
  %1570 = vmatprep.subr.mxu0 0.0
  %1571 = vmatpush1.msra.mxu0 0.0
  %1572 = vmatprep.subr.mxu0 0.0
  %1573 = vmatpush1.msra.mxu0 0.0
  %1574 = vmatprep.subr.mxu0 0.0
  %1575 = vmatpush1.msra.mxu0 0.0
  %1576 = vmatprep.subr.mxu0 0.0
  %1577 = vmatpush1.msra.mxu0 0.0
  %1578 = vmatprep.subr.mxu0 0.0
  %1579 = vmatpush1.msra.mxu0 0.0
  %1580 = vmatprep.subr.mxu0 0.0
  %1581 = vmatpush1.msra.mxu0 0.0
  %1582 = vmatprep.subr.mxu0 0.0
  %1583 = vmatpush1.msra.mxu0 0.0
  %1584 = vmatprep.subr.mxu0 0.0
  %1585 = vmatpush1.msra.mxu0 0.0
  %1586 = vmatprep.subr.mxu0 0.0
  %1587 = vmatpush1.msra.mxu0 0.0
  %1588 = vmatprep.subr.mxu0 0.0
  %1589 = vmatpush1.msra.mxu0 0.0
  %1590 = vmatprep.subr.mxu0 0.0
  %1591 = vmatpush1.msra.mxu0 0.0
  %1592 = vmatprep.subr.mxu0 0.0
  %1593 = vmatpush1.msra.mxu0 0.0
  %1594 = vmatprep.mubr.f32.mxu0 0.0
  %1595 = vmatmul.mubr.f32.gmra.mrb[0].mxu0 %v1519
  %v1596 = vpop.f32.mrb[0].mxu0
  %v1597 = vadd.f32 0.0, %v1596
  %v1598 = vpop.f32.mrb[0].mxu0
  %1599 = vmatprep.mubr.f32.mxu0 0.0
  %1600 = vmatmul.mubr.f32.gmra.mrb[0].mxu0 %v1522
  %v1601 = vpop.f32.mrb[0].mxu0
  %v1602 = vadd.f32 0.0, %v1601
  %v1603 = vpop.f32.mrb[0].mxu0
  %1604 = vmatprep.mubr.f32.mxu0 0.0
  %1605 = vmatmul.mubr.f32.gmra.mrb[0].mxu0 %v1525
  %v1606 = vpop.f32.mrb[0].mxu0
  %v1607 = vadd.f32 0.0, %v1606
  %v1608 = vpop.f32.mrb[0].mxu0
  %1609 = vmatprep.mubr.f32.mxu0 0.0
  %1610 = vmatmul.mubr.f32.gmra.mrb[0].mxu0 %v1528
  %v1611 = vpop.f32.mrb[0].mxu0
  %v1612 = vadd.f32 0.0, %v1611
  %v1613 = vpop.f32.mrb[0].mxu0
  %1614 = vdwg.mxu0
  %v1615 = vmax.f32 %v1597, 0.0
  %v1616 = vmax.f32 %v1602, 0.0
  %v1617 = vmax.f32 %v1607, 0.0
  %v1618 = vmax.f32 %v1612, 0.0
  %s1619 = scalar_lea.vmem %s4, 8
  %v1620 = vld [vmem:[%s1619] sm:$0x1f]
  %v1622 = vsel %vm208, %v1620, 0
  %1624 = vmatprep.subr.mxu0 0.0
  %1625 = vmatpush1.msra.mxu0 %v1615
  %1626 = vmatprep.subr.mxu0 0.0
  %1627 = vmatpush1.msra.mxu0 %v1616
  %1628 = vmatprep.subr.mxu0 0.0
  %1629 = vmatpush1.msra.mxu0 %v1617
  %1630 = vmatprep.subr.mxu0 0.0
  %1631 = vmatpush1.msra.mxu0 %v1618
  %1632 = vmatprep.subr.mxu0 0.0
  %1633 = vmatpush1.msra.mxu0 0.0
  %1634 = vmatprep.subr.mxu0 0.0
  %1635 = vmatpush1.msra.mxu0 0.0
  %1636 = vmatprep.subr.mxu0 0.0
  %1637 = vmatpush1.msra.mxu0 0.0
  %1638 = vmatprep.subr.mxu0 0.0
  %1639 = vmatpush1.msra.mxu0 0.0
  %1640 = vmatprep.subr.mxu0 0.0
  %1641 = vmatpush1.msra.mxu0 0.0
  %1642 = vmatprep.subr.mxu0 0.0
  %1643 = vmatpush1.msra.mxu0 0.0
  %1644 = vmatprep.subr.mxu0 0.0
  %1645 = vmatpush1.msra.mxu0 0.0
  %1646 = vmatprep.subr.mxu0 0.0
  %1647 = vmatpush1.msra.mxu0 0.0
  %1648 = vmatprep.subr.mxu0 0.0
  %1649 = vmatpush1.msra.mxu0 0.0
  %1650 = vmatprep.subr.mxu0 0.0
  %1651 = vmatpush1.msra.mxu0 0.0
  %1652 = vmatprep.subr.mxu0 0.0
  %1653 = vmatpush1.msra.mxu0 0.0
  %1654 = vmatprep.subr.mxu0 0.0
  %1655 = vmatpush1.msra.mxu0 0.0
  %1656 = vmatprep.subr.mxu0 0.0
  %1657 = vmatpush1.msra.mxu0 0.0
  %1658 = vmatprep.subr.mxu0 0.0
  %1659 = vmatpush1.msra.mxu0 0.0
  %1660 = vmatprep.subr.mxu0 0.0
  %1661 = vmatpush1.msra.mxu0 0.0
  %1662 = vmatprep.subr.mxu0 0.0
  %1663 = vmatpush1.msra.mxu0 0.0
  %1664 = vmatprep.subr.mxu0 0.0
  %1665 = vmatpush1.msra.mxu0 0.0
  %1666 = vmatprep.subr.mxu0 0.0
  %1667 = vmatpush1.msra.mxu0 0.0
  %1668 = vmatprep.subr.mxu0 0.0
  %1669 = vmatpush1.msra.mxu0 0.0
  %1670 = vmatprep.subr.mxu0 0.0
  %1671 = vmatpush1.msra.mxu0 0.0
  %1672 = vmatprep.subr.mxu0 0.0
  %1673 = vmatpush1.msra.mxu0 0.0
  %1674 = vmatprep.subr.mxu0 0.0
  %1675 = vmatpush1.msra.mxu0 0.0
  %1676 = vmatprep.subr.mxu0 0.0
  %1677 = vmatpush1.msra.mxu0 0.0
  %1678 = vmatprep.subr.mxu0 0.0
  %1679 = vmatpush1.msra.mxu0 0.0
  %1680 = vmatprep.subr.mxu0 0.0
  %1681 = vmatpush1.msra.mxu0 0.0
  %1682 = vmatprep.subr.mxu0 0.0
  %1683 = vmatpush1.msra.mxu0 0.0
  %1684 = vmatprep.subr.mxu0 0.0
  %1685 = vmatpush1.msra.mxu0 0.0
  %1686 = vmatprep.subr.mxu0 0.0
  %1687 = vmatpush1.msra.mxu0 0.0
  %1688 = vmatprep.mubr.f32.mxu0 0.0
  %1689 = vmatmul.mubr.f32.gmra.mrb[0].mxu0 %v1622
  %v1690 = vpop.f32.mrb[0].mxu0
  %v1691 = vadd.f32 0.0, %v1690
  %v1692 = vpop.f32.mrb[0].mxu0
  %1693 = vdwg.mxu0
  %v1694 = vtanh.pop %v1691
  %s1695 = scalar_lea.vmem %s5, 8
  %v1696 = vld [vmem:[%s1695] sm:$0xff]
  %v1698 = vsel %vm598, %v1696, 0
  %v1701 = vsel %vm602, %v1694, 0
  %1703 = vmatprep.subr.mxu0 0.0
  %1704 = vmatpush1.msra.mxu0 %v1701
  %1705 = vmatprep.subr.mxu0 0.0
  %1706 = vmatpush1.msra.mxu0 0.0
  %1707 = vmatprep.subr.mxu0 0.0
  %1708 = vmatpush1.msra.mxu0 0.0
  %1709 = vmatprep.subr.mxu0 0.0
  %1710 = vmatpush1.msra.mxu0 0.0
  %1711 = vmatprep.subr.mxu0 0.0
  %1712 = vmatpush1.msra.mxu0 0.0
  %1713 = vmatprep.subr.mxu0 0.0
  %1714 = vmatpush1.msra.mxu0 0.0
  %1715 = vmatprep.subr.mxu0 0.0
  %1716 = vmatpush1.msra.mxu0 0.0
  %1717 = vmatprep.subr.mxu0 0.0
  %1718 = vmatpush1.msra.mxu0 0.0
  %1719 = vmatprep.subr.mxu0 0.0
  %1720 = vmatpush1.msra.mxu0 0.0
  %1721 = vmatprep.subr.mxu0 0.0
  %1722 = vmatpush1.msra.mxu0 0.0
  %1723 = vmatprep.subr.mxu0 0.0
  %1724 = vmatpush1.msra.mxu0 0.0
  %1725 = vmatprep.subr.mxu0 0.0
  %1726 = vmatpush1.msra.mxu0 0.0
  %1727 = vmatprep.subr.mxu0 0.0
  %1728 = vmatpush1.msra.mxu0 0.0
  %1729 = vmatprep.subr.mxu0 0.0
  %1730 = vmatpush1.msra.mxu0 0.0
  %1731 = vmatprep.subr.mxu0 0.0
  %1732 = vmatpush1.msra.mxu0 0.0
  %1733 = vmatprep.subr.mxu0 0.0
  %1734 = vmatpush1.msra.mxu0 0.0
  %1735 = vmatprep.subr.mxu0 0.0
  %1736 = vmatpush1.msra.mxu0 0.0
  %1737 = vmatprep.subr.mxu0 0.0
  %1738 = vmatpush1.msra.mxu0 0.0
  %1739 = vmatprep.subr.mxu0 0.0
  %1740 = vmatpush1.msra.mxu0 0.0
  %1741 = vmatprep.subr.mxu0 0.0
  %1742 = vmatpush1.msra.mxu0 0.0
  %1743 = vmatprep.subr.mxu0 0.0
  %1744 = vmatpush1.msra.mxu0 0.0
  %1745 = vmatprep.subr.mxu0 0.0
  %1746 = vmatpush1.msra.mxu0 0.0
  %1747 = vmatprep.subr.mxu0 0.0
  %1748 = vmatpush1.msra.mxu0 0.0
  %1749 = vmatprep.subr.mxu0 0.0
  %1750 = vmatpush1.msra.mxu0 0.0
  %1751 = vmatprep.subr.mxu0 0.0
  %1752 = vmatpush1.msra.mxu0 0.0
  %1753 = vmatprep.subr.mxu0 0.0
  %1754 = vmatpush1.msra.mxu0 0.0
  %1755 = vmatprep.subr.mxu0 0.0
  %1756 = vmatpush1.msra.mxu0 0.0
  %1757 = vmatprep.subr.mxu0 0.0
  %1758 = vmatpush1.msra.mxu0 0.0
  %1759 = vmatprep.subr.mxu0 0.0
  %1760 = vmatpush1.msra.mxu0 0.0
  %1761 = vmatprep.subr.mxu0 0.0
  %1762 = vmatpush1.msra.mxu0 0.0
  %1763 = vmatprep.subr.mxu0 0.0
  %1764 = vmatpush1.msra.mxu0 0.0
  %1765 = vmatprep.subr.mxu0 0.0
  %1766 = vmatpush1.msra.mxu0 0.0
  %1767 = vmatprep.mubr.f32.mxu0 0.0
  %1768 = vmatmul.mubr.f32.gmra.mrb[0].mxu0 %v1698
  %v1769 = vpop.f32.mrb[0].mxu0
  %v1770 = vadd.f32 0.0, %v1769
  %v1771 = vpop.f32.mrb[0].mxu0
  %1772 = vdwg.mxu0
  %v1773 = vmul.f32 %v1770, %v1178
  %v1774 = vadd.f32 %v1773, %v1160
  %v1775 = vand.u32 2147483647, %v1185
  %v1776 = vmul.f32 %v1775, 0.1
  %v1777 = vsub.f32 %v1185, %v1776
  %v1778 = vand.u32 2147483647, %v1192
  %v1779 = vmul.f32 %v1778, 0.1
  %v1780 = vadd.f32 %v1192, %v1779
  %v1781 = vmax.f32 %v1774, %v1777
  %v1782 = vmin.f32 %v1781, %v1780
  %v1783 = vsub.f32 %v686, %v1782
  %s1784 = scalar_lea.vmem %s10, 288
  %v1785 = vld [vmem:[%s1784] sm:$0xff]
  %v1786 = vld [vmem:[%s1784 + $0x8] sm:$0xff]
  %v1787 = vld [vmem:[%s1784 + $0x10] sm:$0xff]
  %v1788 = vld [vmem:[%s1784 + $0x18] sm:$0xff]
  %v1789 = vlaneseq
  %v1790 = vshrl.u32 %v1789, 7
  %v1791 = vsub.s32 0, %v1790
  %v1792 = vrot.slane %v1694, %v1791
  %v1793 = vmul.f32 %v1785, %v1792
  %v1794 = vmul.f32 %v1786, %v1792
  %v1795 = vmul.f32 %v1787, %v1792
  %v1796 = vmul.f32 %v1788, %v1792
  %s1797 = scalar_lea.vmem %s10, 320
  %v1798 = vld [vmem:[%s1797] sm:$0xff]
  %v1799 = vld [vmem:[%s1797 + $0x8] sm:$0xff]
  %v1800 = vld [vmem:[%s1797 + $0x10] sm:$0xff]
  %v1801 = vld [vmem:[%s1797 + $0x18] sm:$0xff]
  %v1802 = vlaneseq
  %v1803 = vshrl.u32 %v1802, 7
  %v1804 = vsub.s32 1, %v1803
  %v1805 = vrot.slane %v1694, %v1804
  %v1806 = vmul.f32 %v1798, %v1805
  %v1807 = vmul.f32 %v1799, %v1805
  %v1808 = vmul.f32 %v1800, %v1805
  %v1809 = vmul.f32 %v1801, %v1805
  %v1810 = vadd.f32 %v1793, %v1806
  %v1811 = vadd.f32 %v1794, %v1807
  %v1812 = vadd.f32 %v1795, %v1808
  %v1813 = vadd.f32 %v1796, %v1809
  %s1814 = scalar_lea.vmem %s10, 352
  %v1815 = vld [vmem:[%s1814] sm:$0xff]
  %v1816 = vld [vmem:[%s1814 + $0x8] sm:$0xff]
  %v1817 = vld [vmem:[%s1814 + $0x10] sm:$0xff]
  %v1818 = vld [vmem:[%s1814 + $0x18] sm:$0xff]
  %v1819 = vlaneseq
  %v1820 = vshrl.u32 %v1819, 7
  %v1821 = vsub.s32 2, %v1820
  %v1822 = vrot.slane %v1694, %v1821
  %v1823 = vmul.f32 %v1815, %v1822
  %v1824 = vmul.f32 %v1816, %v1822
  %v1825 = vmul.f32 %v1817, %v1822
  %v1826 = vmul.f32 %v1818, %v1822
  %v1827 = vadd.f32 %v1810, %v1823
  %v1828 = vadd.f32 %v1811, %v1824
  %v1829 = vadd.f32 %v1812, %v1825
  %v1830 = vadd.f32 %v1813, %v1826
  %s1831 = scalar_lea.vmem %s10, 384
  %v1832 = vld [vmem:[%s1831] sm:$0xff]
  %v1833 = vld [vmem:[%s1831 + $0x8] sm:$0xff]
  %v1834 = vld [vmem:[%s1831 + $0x10] sm:$0xff]
  %v1835 = vld [vmem:[%s1831 + $0x18] sm:$0xff]
  %v1836 = vlaneseq
  %v1837 = vshrl.u32 %v1836, 7
  %v1838 = vsub.s32 3, %v1837
  %v1839 = vrot.slane %v1694, %v1838
  %v1840 = vmul.f32 %v1832, %v1839
  %v1841 = vmul.f32 %v1833, %v1839
  %v1842 = vmul.f32 %v1834, %v1839
  %v1843 = vmul.f32 %v1835, %v1839
  %v1844 = vadd.f32 %v1827, %v1840
  %v1845 = vadd.f32 %v1828, %v1841
  %v1846 = vadd.f32 %v1829, %v1842
  %v1847 = vadd.f32 %v1830, %v1843
  %s1848 = scalar_lea.vmem %s10, 416
  %v1849 = vld [vmem:[%s1848] sm:$0xff]
  %v1850 = vld [vmem:[%s1848 + $0x8] sm:$0xff]
  %v1851 = vld [vmem:[%s1848 + $0x10] sm:$0xff]
  %v1852 = vld [vmem:[%s1848 + $0x18] sm:$0xff]
  %v1853 = vlaneseq
  %v1854 = vshrl.u32 %v1853, 7
  %v1855 = vsub.s32 4, %v1854
  %v1856 = vrot.slane %v1694, %v1855
  %v1857 = vmul.f32 %v1849, %v1856
  %v1858 = vmul.f32 %v1850, %v1856
  %v1859 = vmul.f32 %v1851, %v1856
  %v1860 = vmul.f32 %v1852, %v1856
  %v1861 = vadd.f32 %v1844, %v1857
  %v1862 = vadd.f32 %v1845, %v1858
  %v1863 = vadd.f32 %v1846, %v1859
  %v1864 = vadd.f32 %v1847, %v1860
  %s1865 = scalar_lea.vmem %s10, 448
  %v1866 = vld [vmem:[%s1865] sm:$0xff]
  %v1867 = vld [vmem:[%s1865 + $0x8] sm:$0xff]
  %v1868 = vld [vmem:[%s1865 + $0x10] sm:$0xff]
  %v1869 = vld [vmem:[%s1865 + $0x18] sm:$0xff]
  %v1870 = vmul.f32 %v1866, %v1160
  %v1871 = vmul.f32 %v1867, %v1160
  %v1872 = vmul.f32 %v1868, %v1160
  %v1873 = vmul.f32 %v1869, %v1160
  %v1874 = vadd.f32 %v1861, %v1870
  %v1875 = vadd.f32 %v1862, %v1871
  %v1876 = vadd.f32 %v1863, %v1872
  %v1877 = vadd.f32 %v1864, %v1873
  %s1878 = scalar_lea.vmem %s10, 480
  %v1879 = vld [vmem:[%s1878] sm:$0xff]
  %v1880 = vld [vmem:[%s1878 + $0x8] sm:$0xff]
  %v1881 = vld [vmem:[%s1878 + $0x10] sm:$0xff]
  %v1882 = vld [vmem:[%s1878 + $0x18] sm:$0xff]
  %v1883 = vmul.f32 %v1879, %v1178
  %v1884 = vmul.f32 %v1880, %v1178
  %v1885 = vmul.f32 %v1881, %v1178
  %v1886 = vmul.f32 %v1882, %v1178
  %v1887 = vadd.f32 %v1874, %v1883
  %v1888 = vadd.f32 %v1875, %v1884
  %v1889 = vadd.f32 %v1876, %v1885
  %v1890 = vadd.f32 %v1877, %v1886
  %s1891 = scalar_lea.vmem %s10, 512
  %v1892 = vld [vmem:[%s1891] sm:$0xff]
  %v1893 = vld [vmem:[%s1891 + $0x8] sm:$0xff]
  %v1894 = vld [vmem:[%s1891 + $0x10] sm:$0xff]
  %v1895 = vld [vmem:[%s1891 + $0x18] sm:$0xff]
  %v1896 = vmul.f32 %v1892, %v1185
  %v1897 = vmul.f32 %v1893, %v1185
  %v1898 = vmul.f32 %v1894, %v1185
  %v1899 = vmul.f32 %v1895, %v1185
  %v1900 = vadd.f32 %v1887, %v1896
  %v1901 = vadd.f32 %v1888, %v1897
  %v1902 = vadd.f32 %v1889, %v1898
  %v1903 = vadd.f32 %v1890, %v1899
  %s1904 = scalar_lea.vmem %s10, 544
  %v1905 = vld [vmem:[%s1904] sm:$0xff]
  %v1906 = vld [vmem:[%s1904 + $0x8] sm:$0xff]
  %v1907 = vld [vmem:[%s1904 + $0x10] sm:$0xff]
  %v1908 = vld [vmem:[%s1904 + $0x18] sm:$0xff]
  %v1909 = vmul.f32 %v1905, %v1192
  %v1910 = vmul.f32 %v1906, %v1192
  %v1911 = vmul.f32 %v1907, %v1192
  %v1912 = vmul.f32 %v1908, %v1192
  %v1913 = vadd.f32 %v1900, %v1909
  %v1914 = vadd.f32 %v1901, %v1910
  %v1915 = vadd.f32 %v1902, %v1911
  %v1916 = vadd.f32 %v1903, %v1912
  %s1917 = scalar_lea.vmem %s11, 32
  %v1918 = vld [vmem:[%s1917] sm:$0xff]
  %v1919 = vld [vmem:[%s1917 + $0x8] sm:$0xff]
  %v1920 = vld [vmem:[%s1917 + $0x10] sm:$0xff]
  %v1921 = vld [vmem:[%s1917 + $0x18] sm:$0xff]
  %1923 = vset.pattern.permute.xlu0 0
  %1924 = vperm.xlu0 %1923, %v1918
  %v1925 = vpop.permute.xlu0 %1924
  %1928 = vset.pattern.permute.xlu0 0
  %1929 = vperm.xlu0 %1928, %v1919
  %v1930 = vpop.permute.xlu0 %1929
  %1933 = vset.pattern.permute.xlu0 0
  %1934 = vperm.xlu0 %1933, %v1920
  %v1935 = vpop.permute.xlu0 %1934
  %1938 = vset.pattern.permute.xlu0 0
  %1939 = vperm.xlu0 %1938, %v1921
  %v1940 = vpop.permute.xlu0 %1939
  %v1943 = vsel %vm55, %v1913, 0
  %v1946 = vsel %vm55, %v1914, 0
  %v1949 = vsel %vm55, %v1915, 0
  %v1952 = vsel %vm55, %v1916, 0
  %1954 = vmatprep.subr.mxu0 0.0
  %1955 = vmatpush1.msra.mxu0 %v54
  %1956 = vmatprep.subr.mxu0 0.0
  %1957 = vmatpush1.msra.mxu0 0.0
  %1958 = vmatprep.subr.mxu0 0.0
  %1959 = vmatpush1.msra.mxu0 0.0
  %1960 = vmatprep.subr.mxu0 0.0
  %1961 = vmatpush1.msra.mxu0 0.0
  %1962 = vmatprep.subr.mxu0 0.0
  %1963 = vmatpush1.msra.mxu0 0.0
  %1964 = vmatprep.subr.mxu0 0.0
  %1965 = vmatpush1.msra.mxu0 0.0
  %1966 = vmatprep.subr.mxu0 0.0
  %1967 = vmatpush1.msra.mxu0 0.0
  %1968 = vmatprep.subr.mxu0 0.0
  %1969 = vmatpush1.msra.mxu0 0.0
  %1970 = vmatprep.subr.mxu0 0.0
  %1971 = vmatpush1.msra.mxu0 0.0
  %1972 = vmatprep.subr.mxu0 0.0
  %1973 = vmatpush1.msra.mxu0 0.0
  %1974 = vmatprep.subr.mxu0 0.0
  %1975 = vmatpush1.msra.mxu0 0.0
  %1976 = vmatprep.subr.mxu0 0.0
  %1977 = vmatpush1.msra.mxu0 0.0
  %1978 = vmatprep.subr.mxu0 0.0
  %1979 = vmatpush1.msra.mxu0 0.0
  %1980 = vmatprep.subr.mxu0 0.0
  %1981 = vmatpush1.msra.mxu0 0.0
  %1982 = vmatprep.subr.mxu0 0.0
  %1983 = vmatpush1.msra.mxu0 0.0
  %1984 = vmatprep.subr.mxu0 0.0
  %1985 = vmatpush1.msra.mxu0 0.0
  %1986 = vmatprep.subr.mxu0 0.0
  %1987 = vmatpush1.msra.mxu0 0.0
  %1988 = vmatprep.subr.mxu0 0.0
  %1989 = vmatpush1.msra.mxu0 0.0
  %1990 = vmatprep.subr.mxu0 0.0
  %1991 = vmatpush1.msra.mxu0 0.0
  %1992 = vmatprep.subr.mxu0 0.0
  %1993 = vmatpush1.msra.mxu0 0.0
  %1994 = vmatprep.subr.mxu0 0.0
  %1995 = vmatpush1.msra.mxu0 0.0
  %1996 = vmatprep.subr.mxu0 0.0
  %1997 = vmatpush1.msra.mxu0 0.0
  %1998 = vmatprep.subr.mxu0 0.0
  %1999 = vmatpush1.msra.mxu0 0.0
  %2000 = vmatprep.subr.mxu0 0.0
  %2001 = vmatpush1.msra.mxu0 0.0
  %2002 = vmatprep.subr.mxu0 0.0
  %2003 = vmatpush1.msra.mxu0 0.0
  %2004 = vmatprep.subr.mxu0 0.0
  %2005 = vmatpush1.msra.mxu0 0.0
  %2006 = vmatprep.subr.mxu0 0.0
  %2007 = vmatpush1.msra.mxu0 0.0
  %2008 = vmatprep.subr.mxu0 0.0
  %2009 = vmatpush1.msra.mxu0 0.0
  %2010 = vmatprep.subr.mxu0 0.0
  %2011 = vmatpush1.msra.mxu0 0.0
  %2012 = vmatprep.subr.mxu0 0.0
  %2013 = vmatpush1.msra.mxu0 0.0
  %2014 = vmatprep.subr.mxu0 0.0
  %2015 = vmatpush1.msra.mxu0 0.0
  %2016 = vmatprep.subr.mxu0 0.0
  %2017 = vmatpush1.msra.mxu0 0.0
  %2018 = vmatprep.mubr.f32.mxu0 0.0
  %2019 = vmatmul.mubr.f32.gmra.mrb[0].mxu0 %v1943
  %v2020 = vpop.f32.mrb[0].mxu0
  %v2021 = vadd.f32 %v1925, %v2020
  %v2022 = vpop.f32.mrb[0].mxu0
  %2023 = vmatprep.mubr.f32.mxu0 0.0
  %2024 = vmatmul.mubr.f32.gmra.mrb[0].mxu0 %v1946
  %v2025 = vpop.f32.mrb[0].mxu0
  %v2026 = vadd.f32 %v1930, %v2025
  %v2027 = vpop.f32.mrb[0].mxu0
  %2028 = vmatprep.mubr.f32.mxu0 0.0
  %2029 = vmatmul.mubr.f32.gmra.mrb[0].mxu0 %v1949
  %v2030 = vpop.f32.mrb[0].mxu0
  %v2031 = vadd.f32 %v1935, %v2030
  %v2032 = vpop.f32.mrb[0].mxu0
  %2033 = vmatprep.mubr.f32.mxu0 0.0
  %2034 = vmatmul.mubr.f32.gmra.mrb[0].mxu0 %v1952
  %v2035 = vpop.f32.mrb[0].mxu0
  %v2036 = vadd.f32 %v1940, %v2035
  %v2037 = vpop.f32.mrb[0].mxu0
  %2038 = vdwg.mxu0
  %v2039 = vmax.f32 %v2021, 0.0
  %v2040 = vmax.f32 %v2026, 0.0
  %v2041 = vmax.f32 %v2031, 0.0
  %v2042 = vmax.f32 %v2036, 0.0
  %s2043 = scalar_lea.vmem %s12, 32
  %v2044 = vld [vmem:[%s2043] sm:$0xff]
  %v2045 = vld [vmem:[%s2043 + $0x8] sm:$0xff]
  %v2046 = vld [vmem:[%s2043 + $0x10] sm:$0xff]
  %v2047 = vld [vmem:[%s2043 + $0x18] sm:$0xff]
  %s2048 = scalar_lea.vmem %s13, 32
  %v2049 = vld [vmem:[%s2048] sm:$0xff]
  %v2050 = vld [vmem:[%s2048 + $0x8] sm:$0xff]
  %v2051 = vld [vmem:[%s2048 + $0x10] sm:$0xff]
  %v2052 = vld [vmem:[%s2048 + $0x18] sm:$0xff]
  %2054 = vset.pattern.permute.xlu0 0
  %2055 = vperm.xlu0 %2054, %v2049
  %v2056 = vpop.permute.xlu0 %2055
  %2059 = vset.pattern.permute.xlu0 0
  %2060 = vperm.xlu0 %2059, %v2050
  %v2061 = vpop.permute.xlu0 %2060
  %2064 = vset.pattern.permute.xlu0 0
  %2065 = vperm.xlu0 %2064, %v2051
  %v2066 = vpop.permute.xlu0 %2065
  %2069 = vset.pattern.permute.xlu0 0
  %2070 = vperm.xlu0 %2069, %v2052
  %v2071 = vpop.permute.xlu0 %2070
  %v2074 = vsel %vm208, %v2044, 0
  %v2077 = vsel %vm208, %v2045, 0
  %v2080 = vsel %vm208, %v2046, 0
  %v2083 = vsel %vm208, %v2047, 0
  %2085 = vmatprep.subr.mxu0 0.0
  %2086 = vmatpush1.msra.mxu0 %v2039
  %2087 = vmatprep.subr.mxu0 0.0
  %2088 = vmatpush1.msra.mxu0 %v2040
  %2089 = vmatprep.subr.mxu0 0.0
  %2090 = vmatpush1.msra.mxu0 %v2041
  %2091 = vmatprep.subr.mxu0 0.0
  %2092 = vmatpush1.msra.mxu0 %v2042
  %2093 = vmatprep.subr.mxu0 0.0
  %2094 = vmatpush1.msra.mxu0 0.0
  %2095 = vmatprep.subr.mxu0 0.0
  %2096 = vmatpush1.msra.mxu0 0.0
  %2097 = vmatprep.subr.mxu0 0.0
  %2098 = vmatpush1.msra.mxu0 0.0
  %2099 = vmatprep.subr.mxu0 0.0
  %2100 = vmatpush1.msra.mxu0 0.0
  %2101 = vmatprep.subr.mxu0 0.0
  %2102 = vmatpush1.msra.mxu0 0.0
  %2103 = vmatprep.subr.mxu0 0.0
  %2104 = vmatpush1.msra.mxu0 0.0
  %2105 = vmatprep.subr.mxu0 0.0
  %2106 = vmatpush1.msra.mxu0 0.0
  %2107 = vmatprep.subr.mxu0 0.0
  %2108 = vmatpush1.msra.mxu0 0.0
  %2109 = vmatprep.subr.mxu0 0.0
  %2110 = vmatpush1.msra.mxu0 0.0
  %2111 = vmatprep.subr.mxu0 0.0
  %2112 = vmatpush1.msra.mxu0 0.0
  %2113 = vmatprep.subr.mxu0 0.0
  %2114 = vmatpush1.msra.mxu0 0.0
  %2115 = vmatprep.subr.mxu0 0.0
  %2116 = vmatpush1.msra.mxu0 0.0
  %2117 = vmatprep.subr.mxu0 0.0
  %2118 = vmatpush1.msra.mxu0 0.0
  %2119 = vmatprep.subr.mxu0 0.0
  %2120 = vmatpush1.msra.mxu0 0.0
  %2121 = vmatprep.subr.mxu0 0.0
  %2122 = vmatpush1.msra.mxu0 0.0
  %2123 = vmatprep.subr.mxu0 0.0
  %2124 = vmatpush1.msra.mxu0 0.0
  %2125 = vmatprep.subr.mxu0 0.0
  %2126 = vmatpush1.msra.mxu0 0.0
  %2127 = vmatprep.subr.mxu0 0.0
  %2128 = vmatpush1.msra.mxu0 0.0
  %2129 = vmatprep.subr.mxu0 0.0
  %2130 = vmatpush1.msra.mxu0 0.0
  %2131 = vmatprep.subr.mxu0 0.0
  %2132 = vmatpush1.msra.mxu0 0.0
  %2133 = vmatprep.subr.mxu0 0.0
  %2134 = vmatpush1.msra.mxu0 0.0
  %2135 = vmatprep.subr.mxu0 0.0
  %2136 = vmatpush1.msra.mxu0 0.0
  %2137 = vmatprep.subr.mxu0 0.0
  %2138 = vmatpush1.msra.mxu0 0.0
  %2139 = vmatprep.subr.mxu0 0.0
  %2140 = vmatpush1.msra.mxu0 0.0
  %2141 = vmatprep.subr.mxu0 0.0
  %2142 = vmatpush1.msra.mxu0 0.0
  %2143 = vmatprep.subr.mxu0 0.0
  %2144 = vmatpush1.msra.mxu0 0.0
  %2145 = vmatprep.subr.mxu0 0.0
  %2146 = vmatpush1.msra.mxu0 0.0
  %2147 = vmatprep.subr.mxu0 0.0
  %2148 = vmatpush1.msra.mxu0 0.0
  %2149 = vmatprep.mubr.f32.mxu0 0.0
  %2150 = vmatmul.mubr.f32.gmra.mrb[0].mxu0 %v2074
  %v2151 = vpop.f32.mrb[0].mxu0
  %v2152 = vadd.f32 %v2056, %v2151
  %v2153 = vpop.f32.mrb[0].mxu0
  %2154 = vmatprep.mubr.f32.mxu0 0.0
  %2155 = vmatmul.mubr.f32.gmra.mrb[0].mxu0 %v2077
  %v2156 = vpop.f32.mrb[0].mxu0
  %v2157 = vadd.f32 %v2061, %v2156
  %v2158 = vpop.f32.mrb[0].mxu0
  %2159 = vmatprep.mubr.f32.mxu0 0.0
  %2160 = vmatmul.mubr.f32.gmra.mrb[0].mxu0 %v2080
  %v2161 = vpop.f32.mrb[0].mxu0
  %v2162 = vadd.f32 %v2066, %v2161
  %v2163 = vpop.f32.mrb[0].mxu0
  %2164 = vmatprep.mubr.f32.mxu0 0.0
  %2165 = vmatmul.mubr.f32.gmra.mrb[0].mxu0 %v2083
  %v2166 = vpop.f32.mrb[0].mxu0
  %v2167 = vadd.f32 %v2071, %v2166
  %v2168 = vpop.f32.mrb[0].mxu0
  %2169 = vdwg.mxu0
  %v2170 = vmax.f32 %v2152, 0.0
  %v2171 = vmax.f32 %v2157, 0.0
  %v2172 = vmax.f32 %v2162, 0.0
  %v2173 = vmax.f32 %v2167, 0.0
  %s2174 = scalar_lea.vmem %s14, 4
  %v2175 = vld [vmem:[%s2174] sm:$0x7]
  %v2177 = vsel %vm208, %v2175, 0
  %2179 = vmatprep.subr.mxu0 0.0
  %2180 = vmatpush1.msra.mxu0 %v2170
  %2181 = vmatprep.subr.mxu0 0.0
  %2182 = vmatpush1.msra.mxu0 %v2171
  %2183 = vmatprep.subr.mxu0 0.0
  %2184 = vmatpush1.msra.mxu0 %v2172
  %2185 = vmatprep.subr.mxu0 0.0
  %2186 = vmatpush1.msra.mxu0 %v2173
  %2187 = vmatprep.subr.mxu0 0.0
  %2188 = vmatpush1.msra.mxu0 0.0
  %2189 = vmatprep.subr.mxu0 0.0
  %2190 = vmatpush1.msra.mxu0 0.0
  %2191 = vmatprep.subr.mxu0 0.0
  %2192 = vmatpush1.msra.mxu0 0.0
  %2193 = vmatprep.subr.mxu0 0.0
  %2194 = vmatpush1.msra.mxu0 0.0
  %2195 = vmatprep.subr.mxu0 0.0
  %2196 = vmatpush1.msra.mxu0 0.0
  %2197 = vmatprep.subr.mxu0 0.0
  %2198 = vmatpush1.msra.mxu0 0.0
  %2199 = vmatprep.subr.mxu0 0.0
  %2200 = vmatpush1.msra.mxu0 0.0
  %2201 = vmatprep.subr.mxu0 0.0
  %2202 = vmatpush1.msra.mxu0 0.0
  %2203 = vmatprep.subr.mxu0 0.0
  %2204 = vmatpush1.msra.mxu0 0.0
  %2205 = vmatprep.subr.mxu0 0.0
  %2206 = vmatpush1.msra.mxu0 0.0
  %2207 = vmatprep.subr.mxu0 0.0
  %2208 = vmatpush1.msra.mxu0 0.0
  %2209 = vmatprep.subr.mxu0 0.0
  %2210 = vmatpush1.msra.mxu0 0.0
  %2211 = vmatprep.subr.mxu0 0.0
  %2212 = vmatpush1.msra.mxu0 0.0
  %2213 = vmatprep.subr.mxu0 0.0
  %2214 = vmatpush1.msra.mxu0 0.0
  %2215 = vmatprep.subr.mxu0 0.0
  %2216 = vmatpush1.msra.mxu0 0.0
  %2217 = vmatprep.subr.mxu0 0.0
  %2218 = vmatpush1.msra.mxu0 0.0
  %2219 = vmatprep.subr.mxu0 0.0
  %2220 = vmatpush1.msra.mxu0 0.0
  %2221 = vmatprep.subr.mxu0 0.0
  %2222 = vmatpush1.msra.mxu0 0.0
  %2223 = vmatprep.subr.mxu0 0.0
  %2224 = vmatpush1.msra.mxu0 0.0
  %2225 = vmatprep.subr.mxu0 0.0
  %2226 = vmatpush1.msra.mxu0 0.0
  %2227 = vmatprep.subr.mxu0 0.0
  %2228 = vmatpush1.msra.mxu0 0.0
  %2229 = vmatprep.subr.mxu0 0.0
  %2230 = vmatpush1.msra.mxu0 0.0
  %2231 = vmatprep.subr.mxu0 0.0
  %2232 = vmatpush1.msra.mxu0 0.0
  %2233 = vmatprep.subr.mxu0 0.0
  %2234 = vmatpush1.msra.mxu0 0.0
  %2235 = vmatprep.subr.mxu0 0.0
  %2236 = vmatpush1.msra.mxu0 0.0
  %2237 = vmatprep.subr.mxu0 0.0
  %2238 = vmatpush1.msra.mxu0 0.0
  %2239 = vmatprep.subr.mxu0 0.0
  %2240 = vmatpush1.msra.mxu0 0.0
  %2241 = vmatprep.subr.mxu0 0.0
  %2242 = vmatpush1.msra.mxu0 0.0
  %2243 = vmatprep.mubr.f32.mxu0 0.0
  %2244 = vmatmul.mubr.f32.gmra.mrb[0].mxu0 %v2177
  %v2245 = vpop.f32.mrb[0].mxu0
  %v2246 = vadd.f32 0.0, %v2245
  %v2247 = vpop.f32.mrb[0].mxu0
  %2248 = vdwg.mxu0
  %v2249 = vadd.f32 %v1150, %v2246
  %s2250 = scalar_lea.vmem %s15, 4
  %v2251 = vld [vmem:[%s2250] sm:$0x7]
  %2253 = vset.pattern.permute.xlu0 0
  %2254 = vperm.xlu0 %2253, %v2251
  %v2255 = vpop.permute.xlu0 %2254
  %v2257 = vadd.f32 %v2249, %v2255
  %v2258 = vsel %vm55, %v1783, 0.0
  %v2259 = vrot.slane %v2258, 4
  %v2260 = vadd.f32 %v2258, %v2259
  %v2261 = vrot.slane %v2260, 2
  %v2262 = vadd.f32 %v2260, %v2261
  %v2263 = vrot.slane %v2262, 1
  %v2264 = vadd.f32 %v2262, %v2263
  %v2265 = vmul.f32 %v2264, %v63
  %v2266 = vsub.f32 %v1783, %v2265
  %v2267 = vmul.f32 %v2266, %v2266
  %v2268 = vsel %vm55, %v2267, 0.0
  %v2269 = vrot.slane %v2268, 4
  %v2270 = vadd.f32 %v2268, %v2269
  %v2271 = vrot.slane %v2270, 2
  %v2272 = vadd.f32 %v2270, %v2271
  %v2273 = vrot.slane %v2272, 1
  %v2274 = vadd.f32 %v2272, %v2273
  %v2275 = vmul.f32 %v2274, %v63
  %v2276 = vrsqrt.pop %v2275
  %v2277 = vmul.f32 %v2275, %v2276
  %vm2278 = vcmp.eq.f32.partialorder %v2275, inf
  %v2279 = vsel %vm2278, %v2275, %v2277
  %vm2280 = vcmp.eq.f32.partialorder %v2275, 0.0
  %v2281 = vand.u32 %v2275, 2147483648
  %v2282 = vsel %vm2280, %v2281, %v2279
  %v2283 = vadd.f32 %v2282, 1e-05
  %v2284 = vsel %vm55, %v1783, inf
  %v2285 = vrot.slane %v2284, 4
  %v2286 = vmin.f32 %v2284, %v2285
  %v2287 = vrot.slane %v2286, 2
  %v2288 = vmin.f32 %v2286, %v2287
  %v2289 = vrot.slane %v2288, 1
  %v2290 = vmin.f32 %v2288, %v2289
  %v2291 = vsel %vm55, %v1783, -inf
  %v2292 = vrot.slane %v2291, 4
  %v2293 = vmax.f32 %v2291, %v2292
  %v2294 = vrot.slane %v2293, 2
  %v2295 = vmax.f32 %v2293, %v2294
  %v2296 = vrot.slane %v2295, 1
  %v2297 = vmax.f32 %v2295, %v2296
  %v2298 = vrcp.pop %v2283
  %v2299 = vmul.f32 %v2266, %v2298
  %s2300 = scalar_lea.vmem %s2, 64
  %v2301 = vld [vmem:[%s2300] sm:$0xff]
  %v2302 = vld [vmem:[%s2300 + $0x8] sm:$0xff]
  %v2303 = vld [vmem:[%s2300 + $0x10] sm:$0xff]
  %v2304 = vld [vmem:[%s2300 + $0x18] sm:$0xff]
  %v2306 = vsel %vm55, %v2301, 0
  %v2309 = vsel %vm55, %v2302, 0
  %v2312 = vsel %vm55, %v2303, 0
  %v2315 = vsel %vm55, %v2304, 0
  %2317 = vmatprep.subr.mxu0 0.0
  %2318 = vmatpush1.msra.mxu0 %v2299
  %2319 = vmatprep.subr.mxu0 0.0
  %2320 = vmatpush1.msra.mxu0 0.0
  %2321 = vmatprep.subr.mxu0 0.0
  %2322 = vmatpush1.msra.mxu0 0.0
  %2323 = vmatprep.subr.mxu0 0.0
  %2324 = vmatpush1.msra.mxu0 0.0
  %2325 = vmatprep.subr.mxu0 0.0
  %2326 = vmatpush1.msra.mxu0 0.0
  %2327 = vmatprep.subr.mxu0 0.0
  %2328 = vmatpush1.msra.mxu0 0.0
  %2329 = vmatprep.subr.mxu0 0.0
  %2330 = vmatpush1.msra.mxu0 0.0
  %2331 = vmatprep.subr.mxu0 0.0
  %2332 = vmatpush1.msra.mxu0 0.0
  %2333 = vmatprep.subr.mxu0 0.0
  %2334 = vmatpush1.msra.mxu0 0.0
  %2335 = vmatprep.subr.mxu0 0.0
  %2336 = vmatpush1.msra.mxu0 0.0
  %2337 = vmatprep.subr.mxu0 0.0
  %2338 = vmatpush1.msra.mxu0 0.0
  %2339 = vmatprep.subr.mxu0 0.0
  %2340 = vmatpush1.msra.mxu0 0.0
  %2341 = vmatprep.subr.mxu0 0.0
  %2342 = vmatpush1.msra.mxu0 0.0
  %2343 = vmatprep.subr.mxu0 0.0
  %2344 = vmatpush1.msra.mxu0 0.0
  %2345 = vmatprep.subr.mxu0 0.0
  %2346 = vmatpush1.msra.mxu0 0.0
  %2347 = vmatprep.subr.mxu0 0.0
  %2348 = vmatpush1.msra.mxu0 0.0
  %2349 = vmatprep.subr.mxu0 0.0
  %2350 = vmatpush1.msra.mxu0 0.0
  %2351 = vmatprep.subr.mxu0 0.0
  %2352 = vmatpush1.msra.mxu0 0.0
  %2353 = vmatprep.subr.mxu0 0.0
  %2354 = vmatpush1.msra.mxu0 0.0
  %2355 = vmatprep.subr.mxu0 0.0
  %2356 = vmatpush1.msra.mxu0 0.0
  %2357 = vmatprep.subr.mxu0 0.0
  %2358 = vmatpush1.msra.mxu0 0.0
  %2359 = vmatprep.subr.mxu0 0.0
  %2360 = vmatpush1.msra.mxu0 0.0
  %2361 = vmatprep.subr.mxu0 0.0
  %2362 = vmatpush1.msra.mxu0 0.0
  %2363 = vmatprep.subr.mxu0 0.0
  %2364 = vmatpush1.msra.mxu0 0.0
  %2365 = vmatprep.subr.mxu0 0.0
  %2366 = vmatpush1.msra.mxu0 0.0
  %2367 = vmatprep.subr.mxu0 0.0
  %2368 = vmatpush1.msra.mxu0 0.0
  %2369 = vmatprep.subr.mxu0 0.0
  %2370 = vmatpush1.msra.mxu0 0.0
  %2371 = vmatprep.subr.mxu0 0.0
  %2372 = vmatpush1.msra.mxu0 0.0
  %2373 = vmatprep.subr.mxu0 0.0
  %2374 = vmatpush1.msra.mxu0 0.0
  %2375 = vmatprep.subr.mxu0 0.0
  %2376 = vmatpush1.msra.mxu0 0.0
  %2377 = vmatprep.subr.mxu0 0.0
  %2378 = vmatpush1.msra.mxu0 0.0
  %2379 = vmatprep.subr.mxu0 0.0
  %2380 = vmatpush1.msra.mxu0 0.0
  %2381 = vmatprep.mubr.f32.mxu0 0.0
  %2382 = vmatmul.mubr.f32.gmra.mrb[0].mxu0 %v2306
  %v2383 = vpop.f32.mrb[0].mxu0
  %v2384 = vadd.f32 0.0, %v2383
  %v2385 = vpop.f32.mrb[0].mxu0
  %2386 = vmatprep.mubr.f32.mxu0 0.0
  %2387 = vmatmul.mubr.f32.gmra.mrb[0].mxu0 %v2309
  %v2388 = vpop.f32.mrb[0].mxu0
  %v2389 = vadd.f32 0.0, %v2388
  %v2390 = vpop.f32.mrb[0].mxu0
  %2391 = vmatprep.mubr.f32.mxu0 0.0
  %2392 = vmatmul.mubr.f32.gmra.mrb[0].mxu0 %v2312
  %v2393 = vpop.f32.mrb[0].mxu0
  %v2394 = vadd.f32 0.0, %v2393
  %v2395 = vpop.f32.mrb[0].mxu0
  %2396 = vmatprep.mubr.f32.mxu0 0.0
  %2397 = vmatmul.mubr.f32.gmra.mrb[0].mxu0 %v2315
  %v2398 = vpop.f32.mrb[0].mxu0
  %v2399 = vadd.f32 0.0, %v2398
  %v2400 = vpop.f32.mrb[0].mxu0
  %2401 = vdwg.mxu0
  %v2402 = vmax.f32 %v2384, 0.0
  %v2403 = vmax.f32 %v2389, 0.0
  %v2404 = vmax.f32 %v2394, 0.0
  %v2405 = vmax.f32 %v2399, 0.0
  %s2406 = scalar_lea.vmem %s3, 192
  %v2407 = vld [vmem:[%s2406] sm:$0xff]
  %v2408 = vld [vmem:[%s2406 + $0x8] sm:$0xff]
  %v2409 = vld [vmem:[%s2406 + $0x10] sm:$0xff]
  %v2410 = vld [vmem:[%s2406 + $0x18] sm:$0xff]
  %v2412 = vsel %vm208, %v2407, 0
  %v2415 = vsel %vm208, %v2408, 0
  %v2418 = vsel %vm208, %v2409, 0
  %v2421 = vsel %vm208, %v2410, 0
  %2423 = vmatprep.subr.mxu0 0.0
  %2424 = vmatpush1.msra.mxu0 %v2402
  %2425 = vmatprep.subr.mxu0 0.0
  %2426 = vmatpush1.msra.mxu0 %v2403
  %2427 = vmatprep.subr.mxu0 0.0
  %2428 = vmatpush1.msra.mxu0 %v2404
  %2429 = vmatprep.subr.mxu0 0.0
  %2430 = vmatpush1.msra.mxu0 %v2405
  %2431 = vmatprep.subr.mxu0 0.0
  %2432 = vmatpush1.msra.mxu0 0.0
  %2433 = vmatprep.subr.mxu0 0.0
  %2434 = vmatpush1.msra.mxu0 0.0
  %2435 = vmatprep.subr.mxu0 0.0
  %2436 = vmatpush1.msra.mxu0 0.0
  %2437 = vmatprep.subr.mxu0 0.0
  %2438 = vmatpush1.msra.mxu0 0.0
  %2439 = vmatprep.subr.mxu0 0.0
  %2440 = vmatpush1.msra.mxu0 0.0
  %2441 = vmatprep.subr.mxu0 0.0
  %2442 = vmatpush1.msra.mxu0 0.0
  %2443 = vmatprep.subr.mxu0 0.0
  %2444 = vmatpush1.msra.mxu0 0.0
  %2445 = vmatprep.subr.mxu0 0.0
  %2446 = vmatpush1.msra.mxu0 0.0
  %2447 = vmatprep.subr.mxu0 0.0
  %2448 = vmatpush1.msra.mxu0 0.0
  %2449 = vmatprep.subr.mxu0 0.0
  %2450 = vmatpush1.msra.mxu0 0.0
  %2451 = vmatprep.subr.mxu0 0.0
  %2452 = vmatpush1.msra.mxu0 0.0
  %2453 = vmatprep.subr.mxu0 0.0
  %2454 = vmatpush1.msra.mxu0 0.0
  %2455 = vmatprep.subr.mxu0 0.0
  %2456 = vmatpush1.msra.mxu0 0.0
  %2457 = vmatprep.subr.mxu0 0.0
  %2458 = vmatpush1.msra.mxu0 0.0
  %2459 = vmatprep.subr.mxu0 0.0
  %2460 = vmatpush1.msra.mxu0 0.0
  %2461 = vmatprep.subr.mxu0 0.0
  %2462 = vmatpush1.msra.mxu0 0.0
  %2463 = vmatprep.subr.mxu0 0.0
  %2464 = vmatpush1.msra.mxu0 0.0
  %2465 = vmatprep.subr.mxu0 0.0
  %2466 = vmatpush1.msra.mxu0 0.0
  %2467 = vmatprep.subr.mxu0 0.0
  %2468 = vmatpush1.msra.mxu0 0.0
  %2469 = vmatprep.subr.mxu0 0.0
  %2470 = vmatpush1.msra.mxu0 0.0
  %2471 = vmatprep.subr.mxu0 0.0
  %2472 = vmatpush1.msra.mxu0 0.0
  %2473 = vmatprep.subr.mxu0 0.0
  %2474 = vmatpush1.msra.mxu0 0.0
  %2475 = vmatprep.subr.mxu0 0.0
  %2476 = vmatpush1.msra.mxu0 0.0
  %2477 = vmatprep.subr.mxu0 0.0
  %2478 = vmatpush1.msra.mxu0 0.0
  %2479 = vmatprep.subr.mxu0 0.0
  %2480 = vmatpush1.msra.mxu0 0.0
  %2481 = vmatprep.subr.mxu0 0.0
  %2482 = vmatpush1.msra.mxu0 0.0
  %2483 = vmatprep.subr.mxu0 0.0
  %2484 = vmatpush1.msra.mxu0 0.0
  %2485 = vmatprep.subr.mxu0 0.0
  %2486 = vmatpush1.msra.mxu0 0.0
  %2487 = vmatprep.mubr.f32.mxu0 0.0
  %2488 = vmatmul.mubr.f32.gmra.mrb[0].mxu0 %v2412
  %v2489 = vpop.f32.mrb[0].mxu0
  %v2490 = vadd.f32 0.0, %v2489
  %v2491 = vpop.f32.mrb[0].mxu0
  %2492 = vmatprep.mubr.f32.mxu0 0.0
  %2493 = vmatmul.mubr.f32.gmra.mrb[0].mxu0 %v2415
  %v2494 = vpop.f32.mrb[0].mxu0
  %v2495 = vadd.f32 0.0, %v2494
  %v2496 = vpop.f32.mrb[0].mxu0
  %2497 = vmatprep.mubr.f32.mxu0 0.0
  %2498 = vmatmul.mubr.f32.gmra.mrb[0].mxu0 %v2418
  %v2499 = vpop.f32.mrb[0].mxu0
  %v2500 = vadd.f32 0.0, %v2499
  %v2501 = vpop.f32.mrb[0].mxu0
  %2502 = vmatprep.mubr.f32.mxu0 0.0
  %2503 = vmatmul.mubr.f32.gmra.mrb[0].mxu0 %v2421
  %v2504 = vpop.f32.mrb[0].mxu0
  %v2505 = vadd.f32 0.0, %v2504
  %v2506 = vpop.f32.mrb[0].mxu0
  %2507 = vdwg.mxu0
  %v2508 = vmax.f32 %v2490, 0.0
  %v2509 = vmax.f32 %v2495, 0.0
  %v2510 = vmax.f32 %v2500, 0.0
  %v2511 = vmax.f32 %v2505, 0.0
  %s2512 = scalar_lea.vmem %s3, 224
  %v2513 = vld [vmem:[%s2512] sm:$0xff]
  %v2514 = vld [vmem:[%s2512 + $0x8] sm:$0xff]
  %v2515 = vld [vmem:[%s2512 + $0x10] sm:$0xff]
  %v2516 = vld [vmem:[%s2512 + $0x18] sm:$0xff]
  %v2518 = vsel %vm208, %v2513, 0
  %v2521 = vsel %vm208, %v2514, 0
  %v2524 = vsel %vm208, %v2515, 0
  %v2527 = vsel %vm208, %v2516, 0
  %2529 = vmatprep.subr.mxu0 0.0
  %2530 = vmatpush1.msra.mxu0 %v2508
  %2531 = vmatprep.subr.mxu0 0.0
  %2532 = vmatpush1.msra.mxu0 %v2509
  %2533 = vmatprep.subr.mxu0 0.0
  %2534 = vmatpush1.msra.mxu0 %v2510
  %2535 = vmatprep.subr.mxu0 0.0
  %2536 = vmatpush1.msra.mxu0 %v2511
  %2537 = vmatprep.subr.mxu0 0.0
  %2538 = vmatpush1.msra.mxu0 0.0
  %2539 = vmatprep.subr.mxu0 0.0
  %2540 = vmatpush1.msra.mxu0 0.0
  %2541 = vmatprep.subr.mxu0 0.0
  %2542 = vmatpush1.msra.mxu0 0.0
  %2543 = vmatprep.subr.mxu0 0.0
  %2544 = vmatpush1.msra.mxu0 0.0
  %2545 = vmatprep.subr.mxu0 0.0
  %2546 = vmatpush1.msra.mxu0 0.0
  %2547 = vmatprep.subr.mxu0 0.0
  %2548 = vmatpush1.msra.mxu0 0.0
  %2549 = vmatprep.subr.mxu0 0.0
  %2550 = vmatpush1.msra.mxu0 0.0
  %2551 = vmatprep.subr.mxu0 0.0
  %2552 = vmatpush1.msra.mxu0 0.0
  %2553 = vmatprep.subr.mxu0 0.0
  %2554 = vmatpush1.msra.mxu0 0.0
  %2555 = vmatprep.subr.mxu0 0.0
  %2556 = vmatpush1.msra.mxu0 0.0
  %2557 = vmatprep.subr.mxu0 0.0
  %2558 = vmatpush1.msra.mxu0 0.0
  %2559 = vmatprep.subr.mxu0 0.0
  %2560 = vmatpush1.msra.mxu0 0.0
  %2561 = vmatprep.subr.mxu0 0.0
  %2562 = vmatpush1.msra.mxu0 0.0
  %2563 = vmatprep.subr.mxu0 0.0
  %2564 = vmatpush1.msra.mxu0 0.0
  %2565 = vmatprep.subr.mxu0 0.0
  %2566 = vmatpush1.msra.mxu0 0.0
  %2567 = vmatprep.subr.mxu0 0.0
  %2568 = vmatpush1.msra.mxu0 0.0
  %2569 = vmatprep.subr.mxu0 0.0
  %2570 = vmatpush1.msra.mxu0 0.0
  %2571 = vmatprep.subr.mxu0 0.0
  %2572 = vmatpush1.msra.mxu0 0.0
  %2573 = vmatprep.subr.mxu0 0.0
  %2574 = vmatpush1.msra.mxu0 0.0
  %2575 = vmatprep.subr.mxu0 0.0
  %2576 = vmatpush1.msra.mxu0 0.0
  %2577 = vmatprep.subr.mxu0 0.0
  %2578 = vmatpush1.msra.mxu0 0.0
  %2579 = vmatprep.subr.mxu0 0.0
  %2580 = vmatpush1.msra.mxu0 0.0
  %2581 = vmatprep.subr.mxu0 0.0
  %2582 = vmatpush1.msra.mxu0 0.0
  %2583 = vmatprep.subr.mxu0 0.0
  %2584 = vmatpush1.msra.mxu0 0.0
  %2585 = vmatprep.subr.mxu0 0.0
  %2586 = vmatpush1.msra.mxu0 0.0
  %2587 = vmatprep.subr.mxu0 0.0
  %2588 = vmatpush1.msra.mxu0 0.0
  %2589 = vmatprep.subr.mxu0 0.0
  %2590 = vmatpush1.msra.mxu0 0.0
  %2591 = vmatprep.subr.mxu0 0.0
  %2592 = vmatpush1.msra.mxu0 0.0
  %2593 = vmatprep.mubr.f32.mxu0 0.0
  %2594 = vmatmul.mubr.f32.gmra.mrb[0].mxu0 %v2518
  %v2595 = vpop.f32.mrb[0].mxu0
  %v2596 = vadd.f32 0.0, %v2595
  %v2597 = vpop.f32.mrb[0].mxu0
  %2598 = vmatprep.mubr.f32.mxu0 0.0
  %2599 = vmatmul.mubr.f32.gmra.mrb[0].mxu0 %v2521
  %v2600 = vpop.f32.mrb[0].mxu0
  %v2601 = vadd.f32 0.0, %v2600
  %v2602 = vpop.f32.mrb[0].mxu0
  %2603 = vmatprep.mubr.f32.mxu0 0.0
  %2604 = vmatmul.mubr.f32.gmra.mrb[0].mxu0 %v2524
  %v2605 = vpop.f32.mrb[0].mxu0
  %v2606 = vadd.f32 0.0, %v2605
  %v2607 = vpop.f32.mrb[0].mxu0
  %2608 = vmatprep.mubr.f32.mxu0 0.0
  %2609 = vmatmul.mubr.f32.gmra.mrb[0].mxu0 %v2527
  %v2610 = vpop.f32.mrb[0].mxu0
  %v2611 = vadd.f32 0.0, %v2610
  %v2612 = vpop.f32.mrb[0].mxu0
  %2613 = vdwg.mxu0
  %v2614 = vmax.f32 %v2596, 0.0
  %v2615 = vmax.f32 %v2601, 0.0
  %v2616 = vmax.f32 %v2606, 0.0
  %v2617 = vmax.f32 %v2611, 0.0
  %s2618 = scalar_lea.vmem %s3, 256
  %v2619 = vld [vmem:[%s2618] sm:$0xff]
  %v2620 = vld [vmem:[%s2618 + $0x8] sm:$0xff]
  %v2621 = vld [vmem:[%s2618 + $0x10] sm:$0xff]
  %v2622 = vld [vmem:[%s2618 + $0x18] sm:$0xff]
  %v2624 = vsel %vm208, %v2619, 0
  %v2627 = vsel %vm208, %v2620, 0
  %v2630 = vsel %vm208, %v2621, 0
  %v2633 = vsel %vm208, %v2622, 0
  %2635 = vmatprep.subr.mxu0 0.0
  %2636 = vmatpush1.msra.mxu0 %v2614
  %2637 = vmatprep.subr.mxu0 0.0
  %2638 = vmatpush1.msra.mxu0 %v2615
  %2639 = vmatprep.subr.mxu0 0.0
  %2640 = vmatpush1.msra.mxu0 %v2616
  %2641 = vmatprep.subr.mxu0 0.0
  %2642 = vmatpush1.msra.mxu0 %v2617
  %2643 = vmatprep.subr.mxu0 0.0
  %2644 = vmatpush1.msra.mxu0 0.0
  %2645 = vmatprep.subr.mxu0 0.0
  %2646 = vmatpush1.msra.mxu0 0.0
  %2647 = vmatprep.subr.mxu0 0.0
  %2648 = vmatpush1.msra.mxu0 0.0
  %2649 = vmatprep.subr.mxu0 0.0
  %2650 = vmatpush1.msra.mxu0 0.0
  %2651 = vmatprep.subr.mxu0 0.0
  %2652 = vmatpush1.msra.mxu0 0.0
  %2653 = vmatprep.subr.mxu0 0.0
  %2654 = vmatpush1.msra.mxu0 0.0
  %2655 = vmatprep.subr.mxu0 0.0
  %2656 = vmatpush1.msra.mxu0 0.0
  %2657 = vmatprep.subr.mxu0 0.0
  %2658 = vmatpush1.msra.mxu0 0.0
  %2659 = vmatprep.subr.mxu0 0.0
  %2660 = vmatpush1.msra.mxu0 0.0
  %2661 = vmatprep.subr.mxu0 0.0
  %2662 = vmatpush1.msra.mxu0 0.0
  %2663 = vmatprep.subr.mxu0 0.0
  %2664 = vmatpush1.msra.mxu0 0.0
  %2665 = vmatprep.subr.mxu0 0.0
  %2666 = vmatpush1.msra.mxu0 0.0
  %2667 = vmatprep.subr.mxu0 0.0
  %2668 = vmatpush1.msra.mxu0 0.0
  %2669 = vmatprep.subr.mxu0 0.0
  %2670 = vmatpush1.msra.mxu0 0.0
  %2671 = vmatprep.subr.mxu0 0.0
  %2672 = vmatpush1.msra.mxu0 0.0
  %2673 = vmatprep.subr.mxu0 0.0
  %2674 = vmatpush1.msra.mxu0 0.0
  %2675 = vmatprep.subr.mxu0 0.0
  %2676 = vmatpush1.msra.mxu0 0.0
  %2677 = vmatprep.subr.mxu0 0.0
  %2678 = vmatpush1.msra.mxu0 0.0
  %2679 = vmatprep.subr.mxu0 0.0
  %2680 = vmatpush1.msra.mxu0 0.0
  %2681 = vmatprep.subr.mxu0 0.0
  %2682 = vmatpush1.msra.mxu0 0.0
  %2683 = vmatprep.subr.mxu0 0.0
  %2684 = vmatpush1.msra.mxu0 0.0
  %2685 = vmatprep.subr.mxu0 0.0
  %2686 = vmatpush1.msra.mxu0 0.0
  %2687 = vmatprep.subr.mxu0 0.0
  %2688 = vmatpush1.msra.mxu0 0.0
  %2689 = vmatprep.subr.mxu0 0.0
  %2690 = vmatpush1.msra.mxu0 0.0
  %2691 = vmatprep.subr.mxu0 0.0
  %2692 = vmatpush1.msra.mxu0 0.0
  %2693 = vmatprep.subr.mxu0 0.0
  %2694 = vmatpush1.msra.mxu0 0.0
  %2695 = vmatprep.subr.mxu0 0.0
  %2696 = vmatpush1.msra.mxu0 0.0
  %2697 = vmatprep.subr.mxu0 0.0
  %2698 = vmatpush1.msra.mxu0 0.0
  %2699 = vmatprep.mubr.f32.mxu0 0.0
  %2700 = vmatmul.mubr.f32.gmra.mrb[0].mxu0 %v2624
  %v2701 = vpop.f32.mrb[0].mxu0
  %v2702 = vadd.f32 0.0, %v2701
  %v2703 = vpop.f32.mrb[0].mxu0
  %2704 = vmatprep.mubr.f32.mxu0 0.0
  %2705 = vmatmul.mubr.f32.gmra.mrb[0].mxu0 %v2627
  %v2706 = vpop.f32.mrb[0].mxu0
  %v2707 = vadd.f32 0.0, %v2706
  %v2708 = vpop.f32.mrb[0].mxu0
  %2709 = vmatprep.mubr.f32.mxu0 0.0
  %2710 = vmatmul.mubr.f32.gmra.mrb[0].mxu0 %v2630
  %v2711 = vpop.f32.mrb[0].mxu0
  %v2712 = vadd.f32 0.0, %v2711
  %v2713 = vpop.f32.mrb[0].mxu0
  %2714 = vmatprep.mubr.f32.mxu0 0.0
  %2715 = vmatmul.mubr.f32.gmra.mrb[0].mxu0 %v2633
  %v2716 = vpop.f32.mrb[0].mxu0
  %v2717 = vadd.f32 0.0, %v2716
  %v2718 = vpop.f32.mrb[0].mxu0
  %2719 = vdwg.mxu0
  %v2720 = vmax.f32 %v2702, 0.0
  %v2721 = vmax.f32 %v2707, 0.0
  %v2722 = vmax.f32 %v2712, 0.0
  %v2723 = vmax.f32 %v2717, 0.0
  %s2724 = scalar_lea.vmem %s4, 16
  %v2725 = vld [vmem:[%s2724] sm:$0x1f]
  %v2727 = vsel %vm208, %v2725, 0
  %2729 = vmatprep.subr.mxu0 0.0
  %2730 = vmatpush1.msra.mxu0 %v2720
  %2731 = vmatprep.subr.mxu0 0.0
  %2732 = vmatpush1.msra.mxu0 %v2721
  %2733 = vmatprep.subr.mxu0 0.0
  %2734 = vmatpush1.msra.mxu0 %v2722
  %2735 = vmatprep.subr.mxu0 0.0
  %2736 = vmatpush1.msra.mxu0 %v2723
  %2737 = vmatprep.subr.mxu0 0.0
  %2738 = vmatpush1.msra.mxu0 0.0
  %2739 = vmatprep.subr.mxu0 0.0
  %2740 = vmatpush1.msra.mxu0 0.0
  %2741 = vmatprep.subr.mxu0 0.0
  %2742 = vmatpush1.msra.mxu0 0.0
  %2743 = vmatprep.subr.mxu0 0.0
  %2744 = vmatpush1.msra.mxu0 0.0
  %2745 = vmatprep.subr.mxu0 0.0
  %2746 = vmatpush1.msra.mxu0 0.0
  %2747 = vmatprep.subr.mxu0 0.0
  %2748 = vmatpush1.msra.mxu0 0.0
  %2749 = vmatprep.subr.mxu0 0.0
  %2750 = vmatpush1.msra.mxu0 0.0
  %2751 = vmatprep.subr.mxu0 0.0
  %2752 = vmatpush1.msra.mxu0 0.0
  %2753 = vmatprep.subr.mxu0 0.0
  %2754 = vmatpush1.msra.mxu0 0.0
  %2755 = vmatprep.subr.mxu0 0.0
  %2756 = vmatpush1.msra.mxu0 0.0
  %2757 = vmatprep.subr.mxu0 0.0
  %2758 = vmatpush1.msra.mxu0 0.0
  %2759 = vmatprep.subr.mxu0 0.0
  %2760 = vmatpush1.msra.mxu0 0.0
  %2761 = vmatprep.subr.mxu0 0.0
  %2762 = vmatpush1.msra.mxu0 0.0
  %2763 = vmatprep.subr.mxu0 0.0
  %2764 = vmatpush1.msra.mxu0 0.0
  %2765 = vmatprep.subr.mxu0 0.0
  %2766 = vmatpush1.msra.mxu0 0.0
  %2767 = vmatprep.subr.mxu0 0.0
  %2768 = vmatpush1.msra.mxu0 0.0
  %2769 = vmatprep.subr.mxu0 0.0
  %2770 = vmatpush1.msra.mxu0 0.0
  %2771 = vmatprep.subr.mxu0 0.0
  %2772 = vmatpush1.msra.mxu0 0.0
  %2773 = vmatprep.subr.mxu0 0.0
  %2774 = vmatpush1.msra.mxu0 0.0
  %2775 = vmatprep.subr.mxu0 0.0
  %2776 = vmatpush1.msra.mxu0 0.0
  %2777 = vmatprep.subr.mxu0 0.0
  %2778 = vmatpush1.msra.mxu0 0.0
  %2779 = vmatprep.subr.mxu0 0.0
  %2780 = vmatpush1.msra.mxu0 0.0
  %2781 = vmatprep.subr.mxu0 0.0
  %2782 = vmatpush1.msra.mxu0 0.0
  %2783 = vmatprep.subr.mxu0 0.0
  %2784 = vmatpush1.msra.mxu0 0.0
  %2785 = vmatprep.subr.mxu0 0.0
  %2786 = vmatpush1.msra.mxu0 0.0
  %2787 = vmatprep.subr.mxu0 0.0
  %2788 = vmatpush1.msra.mxu0 0.0
  %2789 = vmatprep.subr.mxu0 0.0
  %2790 = vmatpush1.msra.mxu0 0.0
  %2791 = vmatprep.subr.mxu0 0.0
  %2792 = vmatpush1.msra.mxu0 0.0
  %2793 = vmatprep.mubr.f32.mxu0 0.0
  %2794 = vmatmul.mubr.f32.gmra.mrb[0].mxu0 %v2727
  %v2795 = vpop.f32.mrb[0].mxu0
  %v2796 = vadd.f32 0.0, %v2795
  %v2797 = vpop.f32.mrb[0].mxu0
  %2798 = vdwg.mxu0
  %v2799 = vtanh.pop %v2796
  %s2800 = scalar_lea.vmem %s10, 576
  %v2801 = vld [vmem:[%s2800] sm:$0xff]
  %v2802 = vld [vmem:[%s2800 + $0x8] sm:$0xff]
  %v2803 = vld [vmem:[%s2800 + $0x10] sm:$0xff]
  %v2804 = vld [vmem:[%s2800 + $0x18] sm:$0xff]
  %v2805 = vlaneseq
  %v2806 = vshrl.u32 %v2805, 7
  %v2807 = vsub.s32 0, %v2806
  %v2808 = vrot.slane %v2799, %v2807
  %v2809 = vmul.f32 %v2801, %v2808
  %v2810 = vmul.f32 %v2802, %v2808
  %v2811 = vmul.f32 %v2803, %v2808
  %v2812 = vmul.f32 %v2804, %v2808
  %s2813 = scalar_lea.vmem %s10, 608
  %v2814 = vld [vmem:[%s2813] sm:$0xff]
  %v2815 = vld [vmem:[%s2813 + $0x8] sm:$0xff]
  %v2816 = vld [vmem:[%s2813 + $0x10] sm:$0xff]
  %v2817 = vld [vmem:[%s2813 + $0x18] sm:$0xff]
  %v2818 = vlaneseq
  %v2819 = vshrl.u32 %v2818, 7
  %v2820 = vsub.s32 1, %v2819
  %v2821 = vrot.slane %v2799, %v2820
  %v2822 = vmul.f32 %v2814, %v2821
  %v2823 = vmul.f32 %v2815, %v2821
  %v2824 = vmul.f32 %v2816, %v2821
  %v2825 = vmul.f32 %v2817, %v2821
  %v2826 = vadd.f32 %v2809, %v2822
  %v2827 = vadd.f32 %v2810, %v2823
  %v2828 = vadd.f32 %v2811, %v2824
  %v2829 = vadd.f32 %v2812, %v2825
  %s2830 = scalar_lea.vmem %s10, 640
  %v2831 = vld [vmem:[%s2830] sm:$0xff]
  %v2832 = vld [vmem:[%s2830 + $0x8] sm:$0xff]
  %v2833 = vld [vmem:[%s2830 + $0x10] sm:$0xff]
  %v2834 = vld [vmem:[%s2830 + $0x18] sm:$0xff]
  %v2835 = vlaneseq
  %v2836 = vshrl.u32 %v2835, 7
  %v2837 = vsub.s32 2, %v2836
  %v2838 = vrot.slane %v2799, %v2837
  %v2839 = vmul.f32 %v2831, %v2838
  %v2840 = vmul.f32 %v2832, %v2838
  %v2841 = vmul.f32 %v2833, %v2838
  %v2842 = vmul.f32 %v2834, %v2838
  %v2843 = vadd.f32 %v2826, %v2839
  %v2844 = vadd.f32 %v2827, %v2840
  %v2845 = vadd.f32 %v2828, %v2841
  %v2846 = vadd.f32 %v2829, %v2842
  %s2847 = scalar_lea.vmem %s10, 672
  %v2848 = vld [vmem:[%s2847] sm:$0xff]
  %v2849 = vld [vmem:[%s2847 + $0x8] sm:$0xff]
  %v2850 = vld [vmem:[%s2847 + $0x10] sm:$0xff]
  %v2851 = vld [vmem:[%s2847 + $0x18] sm:$0xff]
  %v2852 = vlaneseq
  %v2853 = vshrl.u32 %v2852, 7
  %v2854 = vsub.s32 3, %v2853
  %v2855 = vrot.slane %v2799, %v2854
  %v2856 = vmul.f32 %v2848, %v2855
  %v2857 = vmul.f32 %v2849, %v2855
  %v2858 = vmul.f32 %v2850, %v2855
  %v2859 = vmul.f32 %v2851, %v2855
  %v2860 = vadd.f32 %v2843, %v2856
  %v2861 = vadd.f32 %v2844, %v2857
  %v2862 = vadd.f32 %v2845, %v2858
  %v2863 = vadd.f32 %v2846, %v2859
  %s2864 = scalar_lea.vmem %s10, 704
  %v2865 = vld [vmem:[%s2864] sm:$0xff]
  %v2866 = vld [vmem:[%s2864 + $0x8] sm:$0xff]
  %v2867 = vld [vmem:[%s2864 + $0x10] sm:$0xff]
  %v2868 = vld [vmem:[%s2864 + $0x18] sm:$0xff]
  %v2869 = vlaneseq
  %v2870 = vshrl.u32 %v2869, 7
  %v2871 = vsub.s32 4, %v2870
  %v2872 = vrot.slane %v2799, %v2871
  %v2873 = vmul.f32 %v2865, %v2872
  %v2874 = vmul.f32 %v2866, %v2872
  %v2875 = vmul.f32 %v2867, %v2872
  %v2876 = vmul.f32 %v2868, %v2872
  %v2877 = vadd.f32 %v2860, %v2873
  %v2878 = vadd.f32 %v2861, %v2874
  %v2879 = vadd.f32 %v2862, %v2875
  %v2880 = vadd.f32 %v2863, %v2876
  %s2881 = scalar_lea.vmem %s10, 736
  %v2882 = vld [vmem:[%s2881] sm:$0xff]
  %v2883 = vld [vmem:[%s2881 + $0x8] sm:$0xff]
  %v2884 = vld [vmem:[%s2881 + $0x10] sm:$0xff]
  %v2885 = vld [vmem:[%s2881 + $0x18] sm:$0xff]
  %v2886 = vmul.f32 %v2882, %v2265
  %v2887 = vmul.f32 %v2883, %v2265
  %v2888 = vmul.f32 %v2884, %v2265
  %v2889 = vmul.f32 %v2885, %v2265
  %v2890 = vadd.f32 %v2877, %v2886
  %v2891 = vadd.f32 %v2878, %v2887
  %v2892 = vadd.f32 %v2879, %v2888
  %v2893 = vadd.f32 %v2880, %v2889
  %s2894 = scalar_lea.vmem %s10, 768
  %v2895 = vld [vmem:[%s2894] sm:$0xff]
  %v2896 = vld [vmem:[%s2894 + $0x8] sm:$0xff]
  %v2897 = vld [vmem:[%s2894 + $0x10] sm:$0xff]
  %v2898 = vld [vmem:[%s2894 + $0x18] sm:$0xff]
  %v2899 = vmul.f32 %v2895, %v2283
  %v2900 = vmul.f32 %v2896, %v2283
  %v2901 = vmul.f32 %v2897, %v2283
  %v2902 = vmul.f32 %v2898, %v2283
  %v2903 = vadd.f32 %v2890, %v2899
  %v2904 = vadd.f32 %v2891, %v2900
  %v2905 = vadd.f32 %v2892, %v2901
  %v2906 = vadd.f32 %v2893, %v2902
  %s2907 = scalar_lea.vmem %s10, 800
  %v2908 = vld [vmem:[%s2907] sm:$0xff]
  %v2909 = vld [vmem:[%s2907 + $0x8] sm:$0xff]
  %v2910 = vld [vmem:[%s2907 + $0x10] sm:$0xff]
  %v2911 = vld [vmem:[%s2907 + $0x18] sm:$0xff]
  %v2912 = vmul.f32 %v2908, %v2290
  %v2913 = vmul.f32 %v2909, %v2290
  %v2914 = vmul.f32 %v2910, %v2290
  %v2915 = vmul.f32 %v2911, %v2290
  %v2916 = vadd.f32 %v2903, %v2912
  %v2917 = vadd.f32 %v2904, %v2913
  %v2918 = vadd.f32 %v2905, %v2914
  %v2919 = vadd.f32 %v2906, %v2915
  %s2920 = scalar_lea.vmem %s10, 832
  %v2921 = vld [vmem:[%s2920] sm:$0xff]
  %v2922 = vld [vmem:[%s2920 + $0x8] sm:$0xff]
  %v2923 = vld [vmem:[%s2920 + $0x10] sm:$0xff]
  %v2924 = vld [vmem:[%s2920 + $0x18] sm:$0xff]
  %v2925 = vmul.f32 %v2921, %v2297
  %v2926 = vmul.f32 %v2922, %v2297
  %v2927 = vmul.f32 %v2923, %v2297
  %v2928 = vmul.f32 %v2924, %v2297
  %v2929 = vadd.f32 %v2916, %v2925
  %v2930 = vadd.f32 %v2917, %v2926
  %v2931 = vadd.f32 %v2918, %v2927
  %v2932 = vadd.f32 %v2919, %v2928
  %s2933 = scalar_lea.vmem %s11, 64
  %v2934 = vld [vmem:[%s2933] sm:$0xff]
  %v2935 = vld [vmem:[%s2933 + $0x8] sm:$0xff]
  %v2936 = vld [vmem:[%s2933 + $0x10] sm:$0xff]
  %v2937 = vld [vmem:[%s2933 + $0x18] sm:$0xff]
  %2939 = vset.pattern.permute.xlu0 0
  %2940 = vperm.xlu0 %2939, %v2934
  %v2941 = vpop.permute.xlu0 %2940
  %2944 = vset.pattern.permute.xlu0 0
  %2945 = vperm.xlu0 %2944, %v2935
  %v2946 = vpop.permute.xlu0 %2945
  %2949 = vset.pattern.permute.xlu0 0
  %2950 = vperm.xlu0 %2949, %v2936
  %v2951 = vpop.permute.xlu0 %2950
  %2954 = vset.pattern.permute.xlu0 0
  %2955 = vperm.xlu0 %2954, %v2937
  %v2956 = vpop.permute.xlu0 %2955
  %v2959 = vsel %vm55, %v2929, 0
  %v2962 = vsel %vm55, %v2930, 0
  %v2965 = vsel %vm55, %v2931, 0
  %v2968 = vsel %vm55, %v2932, 0
  %2970 = vmatprep.subr.mxu0 0.0
  %2971 = vmatpush1.msra.mxu0 %v54
  %2972 = vmatprep.subr.mxu0 0.0
  %2973 = vmatpush1.msra.mxu0 0.0
  %2974 = vmatprep.subr.mxu0 0.0
  %2975 = vmatpush1.msra.mxu0 0.0
  %2976 = vmatprep.subr.mxu0 0.0
  %2977 = vmatpush1.msra.mxu0 0.0
  %2978 = vmatprep.subr.mxu0 0.0
  %2979 = vmatpush1.msra.mxu0 0.0
  %2980 = vmatprep.subr.mxu0 0.0
  %2981 = vmatpush1.msra.mxu0 0.0
  %2982 = vmatprep.subr.mxu0 0.0
  %2983 = vmatpush1.msra.mxu0 0.0
  %2984 = vmatprep.subr.mxu0 0.0
  %2985 = vmatpush1.msra.mxu0 0.0
  %2986 = vmatprep.subr.mxu0 0.0
  %2987 = vmatpush1.msra.mxu0 0.0
  %2988 = vmatprep.subr.mxu0 0.0
  %2989 = vmatpush1.msra.mxu0 0.0
  %2990 = vmatprep.subr.mxu0 0.0
  %2991 = vmatpush1.msra.mxu0 0.0
  %2992 = vmatprep.subr.mxu0 0.0
  %2993 = vmatpush1.msra.mxu0 0.0
  %2994 = vmatprep.subr.mxu0 0.0
  %2995 = vmatpush1.msra.mxu0 0.0
  %2996 = vmatprep.subr.mxu0 0.0
  %2997 = vmatpush1.msra.mxu0 0.0
  %2998 = vmatprep.subr.mxu0 0.0
  %2999 = vmatpush1.msra.mxu0 0.0
  %3000 = vmatprep.subr.mxu0 0.0
  %3001 = vmatpush1.msra.mxu0 0.0
  %3002 = vmatprep.subr.mxu0 0.0
  %3003 = vmatpush1.msra.mxu0 0.0
  %3004 = vmatprep.subr.mxu0 0.0
  %3005 = vmatpush1.msra.mxu0 0.0
  %3006 = vmatprep.subr.mxu0 0.0
  %3007 = vmatpush1.msra.mxu0 0.0
  %3008 = vmatprep.subr.mxu0 0.0
  %3009 = vmatpush1.msra.mxu0 0.0
  %3010 = vmatprep.subr.mxu0 0.0
  %3011 = vmatpush1.msra.mxu0 0.0
  %3012 = vmatprep.subr.mxu0 0.0
  %3013 = vmatpush1.msra.mxu0 0.0
  %3014 = vmatprep.subr.mxu0 0.0
  %3015 = vmatpush1.msra.mxu0 0.0
  %3016 = vmatprep.subr.mxu0 0.0
  %3017 = vmatpush1.msra.mxu0 0.0
  %3018 = vmatprep.subr.mxu0 0.0
  %3019 = vmatpush1.msra.mxu0 0.0
  %3020 = vmatprep.subr.mxu0 0.0
  %3021 = vmatpush1.msra.mxu0 0.0
  %3022 = vmatprep.subr.mxu0 0.0
  %3023 = vmatpush1.msra.mxu0 0.0
  %3024 = vmatprep.subr.mxu0 0.0
  %3025 = vmatpush1.msra.mxu0 0.0
  %3026 = vmatprep.subr.mxu0 0.0
  %3027 = vmatpush1.msra.mxu0 0.0
  %3028 = vmatprep.subr.mxu0 0.0
  %3029 = vmatpush1.msra.mxu0 0.0
  %3030 = vmatprep.subr.mxu0 0.0
  %3031 = vmatpush1.msra.mxu0 0.0
  %3032 = vmatprep.subr.mxu0 0.0
  %3033 = vmatpush1.msra.mxu0 0.0
  %3034 = vmatprep.mubr.f32.mxu0 0.0
  %3035 = vmatmul.mubr.f32.gmra.mrb[0].mxu0 %v2959
  %v3036 = vpop.f32.mrb[0].mxu0
  %v3037 = vadd.f32 %v2941, %v3036
  %v3038 = vpop.f32.mrb[0].mxu0
  %3039 = vmatprep.mubr.f32.mxu0 0.0
  %3040 = vmatmul.mubr.f32.gmra.mrb[0].mxu0 %v2962
  %v3041 = vpop.f32.mrb[0].mxu0
  %v3042 = vadd.f32 %v2946, %v3041
  %v3043 = vpop.f32.mrb[0].mxu0
  %3044 = vmatprep.mubr.f32.mxu0 0.0
  %3045 = vmatmul.mubr.f32.gmra.mrb[0].mxu0 %v2965
  %v3046 = vpop.f32.mrb[0].mxu0
  %v3047 = vadd.f32 %v2951, %v3046
  %v3048 = vpop.f32.mrb[0].mxu0
  %3049 = vmatprep.mubr.f32.mxu0 0.0
  %3050 = vmatmul.mubr.f32.gmra.mrb[0].mxu0 %v2968
  %v3051 = vpop.f32.mrb[0].mxu0
  %v3052 = vadd.f32 %v2956, %v3051
  %v3053 = vpop.f32.mrb[0].mxu0
  %3054 = vdwg.mxu0
  %v3055 = vmax.f32 %v3037, 0.0
  %v3056 = vmax.f32 %v3042, 0.0
  %v3057 = vmax.f32 %v3047, 0.0
  %v3058 = vmax.f32 %v3052, 0.0
  %s3059 = scalar_lea.vmem %s12, 64
  %v3060 = vld [vmem:[%s3059] sm:$0xff]
  %v3061 = vld [vmem:[%s3059 + $0x8] sm:$0xff]
  %v3062 = vld [vmem:[%s3059 + $0x10] sm:$0xff]
  %v3063 = vld [vmem:[%s3059 + $0x18] sm:$0xff]
  %s3064 = scalar_lea.vmem %s13, 64
  %v3065 = vld [vmem:[%s3064] sm:$0xff]
  %v3066 = vld [vmem:[%s3064 + $0x8] sm:$0xff]
  %v3067 = vld [vmem:[%s3064 + $0x10] sm:$0xff]
  %v3068 = vld [vmem:[%s3064 + $0x18] sm:$0xff]
  %3070 = vset.pattern.permute.xlu0 0
  %3071 = vperm.xlu0 %3070, %v3065
  %v3072 = vpop.permute.xlu0 %3071
  %3075 = vset.pattern.permute.xlu0 0
  %3076 = vperm.xlu0 %3075, %v3066
  %v3077 = vpop.permute.xlu0 %3076
  %3080 = vset.pattern.permute.xlu0 0
  %3081 = vperm.xlu0 %3080, %v3067
  %v3082 = vpop.permute.xlu0 %3081
  %3085 = vset.pattern.permute.xlu0 0
  %3086 = vperm.xlu0 %3085, %v3068
  %v3087 = vpop.permute.xlu0 %3086
  %v3090 = vsel %vm208, %v3060, 0
  %v3093 = vsel %vm208, %v3061, 0
  %v3096 = vsel %vm208, %v3062, 0
  %v3099 = vsel %vm208, %v3063, 0
  %3101 = vmatprep.subr.mxu0 0.0
  %3102 = vmatpush1.msra.mxu0 %v3055
  %3103 = vmatprep.subr.mxu0 0.0
  %3104 = vmatpush1.msra.mxu0 %v3056
  %3105 = vmatprep.subr.mxu0 0.0
  %3106 = vmatpush1.msra.mxu0 %v3057
  %3107 = vmatprep.subr.mxu0 0.0
  %3108 = vmatpush1.msra.mxu0 %v3058
  %3109 = vmatprep.subr.mxu0 0.0
  %3110 = vmatpush1.msra.mxu0 0.0
  %3111 = vmatprep.subr.mxu0 0.0
  %3112 = vmatpush1.msra.mxu0 0.0
  %3113 = vmatprep.subr.mxu0 0.0
  %3114 = vmatpush1.msra.mxu0 0.0
  %3115 = vmatprep.subr.mxu0 0.0
  %3116 = vmatpush1.msra.mxu0 0.0
  %3117 = vmatprep.subr.mxu0 0.0
  %3118 = vmatpush1.msra.mxu0 0.0
  %3119 = vmatprep.subr.mxu0 0.0
  %3120 = vmatpush1.msra.mxu0 0.0
  %3121 = vmatprep.subr.mxu0 0.0
  %3122 = vmatpush1.msra.mxu0 0.0
  %3123 = vmatprep.subr.mxu0 0.0
  %3124 = vmatpush1.msra.mxu0 0.0
  %3125 = vmatprep.subr.mxu0 0.0
  %3126 = vmatpush1.msra.mxu0 0.0
  %3127 = vmatprep.subr.mxu0 0.0
  %3128 = vmatpush1.msra.mxu0 0.0
  %3129 = vmatprep.subr.mxu0 0.0
  %3130 = vmatpush1.msra.mxu0 0.0
  %3131 = vmatprep.subr.mxu0 0.0
  %3132 = vmatpush1.msra.mxu0 0.0
  %3133 = vmatprep.subr.mxu0 0.0
  %3134 = vmatpush1.msra.mxu0 0.0
  %3135 = vmatprep.subr.mxu0 0.0
  %3136 = vmatpush1.msra.mxu0 0.0
  %3137 = vmatprep.subr.mxu0 0.0
  %3138 = vmatpush1.msra.mxu0 0.0
  %3139 = vmatprep.subr.mxu0 0.0
  %3140 = vmatpush1.msra.mxu0 0.0
  %3141 = vmatprep.subr.mxu0 0.0
  %3142 = vmatpush1.msra.mxu0 0.0
  %3143 = vmatprep.subr.mxu0 0.0
  %3144 = vmatpush1.msra.mxu0 0.0
  %3145 = vmatprep.subr.mxu0 0.0
  %3146 = vmatpush1.msra.mxu0 0.0
  %3147 = vmatprep.subr.mxu0 0.0
  %3148 = vmatpush1.msra.mxu0 0.0
  %3149 = vmatprep.subr.mxu0 0.0
  %3150 = vmatpush1.msra.mxu0 0.0
  %3151 = vmatprep.subr.mxu0 0.0
  %3152 = vmatpush1.msra.mxu0 0.0
  %3153 = vmatprep.subr.mxu0 0.0
  %3154 = vmatpush1.msra.mxu0 0.0
  %3155 = vmatprep.subr.mxu0 0.0
  %3156 = vmatpush1.msra.mxu0 0.0
  %3157 = vmatprep.subr.mxu0 0.0
  %3158 = vmatpush1.msra.mxu0 0.0
  %3159 = vmatprep.subr.mxu0 0.0
  %3160 = vmatpush1.msra.mxu0 0.0
  %3161 = vmatprep.subr.mxu0 0.0
  %3162 = vmatpush1.msra.mxu0 0.0
  %3163 = vmatprep.subr.mxu0 0.0
  %3164 = vmatpush1.msra.mxu0 0.0
  %3165 = vmatprep.mubr.f32.mxu0 0.0
  %3166 = vmatmul.mubr.f32.gmra.mrb[0].mxu0 %v3090
  %v3167 = vpop.f32.mrb[0].mxu0
  %v3168 = vadd.f32 %v3072, %v3167
  %v3169 = vpop.f32.mrb[0].mxu0
  %3170 = vmatprep.mubr.f32.mxu0 0.0
  %3171 = vmatmul.mubr.f32.gmra.mrb[0].mxu0 %v3093
  %v3172 = vpop.f32.mrb[0].mxu0
  %v3173 = vadd.f32 %v3077, %v3172
  %v3174 = vpop.f32.mrb[0].mxu0
  %3175 = vmatprep.mubr.f32.mxu0 0.0
  %3176 = vmatmul.mubr.f32.gmra.mrb[0].mxu0 %v3096
  %v3177 = vpop.f32.mrb[0].mxu0
  %v3178 = vadd.f32 %v3082, %v3177
  %v3179 = vpop.f32.mrb[0].mxu0
  %3180 = vmatprep.mubr.f32.mxu0 0.0
  %3181 = vmatmul.mubr.f32.gmra.mrb[0].mxu0 %v3099
  %v3182 = vpop.f32.mrb[0].mxu0
  %v3183 = vadd.f32 %v3087, %v3182
  %v3184 = vpop.f32.mrb[0].mxu0
  %3185 = vdwg.mxu0
  %v3186 = vmax.f32 %v3168, 0.0
  %v3187 = vmax.f32 %v3173, 0.0
  %v3188 = vmax.f32 %v3178, 0.0
  %v3189 = vmax.f32 %v3183, 0.0
  %s3190 = scalar_lea.vmem %s14, 8
  %v3191 = vld [vmem:[%s3190] sm:$0x7]
  %v3193 = vsel %vm208, %v3191, 0
  %3195 = vmatprep.subr.mxu0 0.0
  %3196 = vmatpush1.msra.mxu0 %v3186
  %3197 = vmatprep.subr.mxu0 0.0
  %3198 = vmatpush1.msra.mxu0 %v3187
  %3199 = vmatprep.subr.mxu0 0.0
  %3200 = vmatpush1.msra.mxu0 %v3188
  %3201 = vmatprep.subr.mxu0 0.0
  %3202 = vmatpush1.msra.mxu0 %v3189
  %3203 = vmatprep.subr.mxu0 0.0
  %3204 = vmatpush1.msra.mxu0 0.0
  %3205 = vmatprep.subr.mxu0 0.0
  %3206 = vmatpush1.msra.mxu0 0.0
  %3207 = vmatprep.subr.mxu0 0.0
  %3208 = vmatpush1.msra.mxu0 0.0
  %3209 = vmatprep.subr.mxu0 0.0
  %3210 = vmatpush1.msra.mxu0 0.0
  %3211 = vmatprep.subr.mxu0 0.0
  %3212 = vmatpush1.msra.mxu0 0.0
  %3213 = vmatprep.subr.mxu0 0.0
  %3214 = vmatpush1.msra.mxu0 0.0
  %3215 = vmatprep.subr.mxu0 0.0
  %3216 = vmatpush1.msra.mxu0 0.0
  %3217 = vmatprep.subr.mxu0 0.0
  %3218 = vmatpush1.msra.mxu0 0.0
  %3219 = vmatprep.subr.mxu0 0.0
  %3220 = vmatpush1.msra.mxu0 0.0
  %3221 = vmatprep.subr.mxu0 0.0
  %3222 = vmatpush1.msra.mxu0 0.0
  %3223 = vmatprep.subr.mxu0 0.0
  %3224 = vmatpush1.msra.mxu0 0.0
  %3225 = vmatprep.subr.mxu0 0.0
  %3226 = vmatpush1.msra.mxu0 0.0
  %3227 = vmatprep.subr.mxu0 0.0
  %3228 = vmatpush1.msra.mxu0 0.0
  %3229 = vmatprep.subr.mxu0 0.0
  %3230 = vmatpush1.msra.mxu0 0.0
  %3231 = vmatprep.subr.mxu0 0.0
  %3232 = vmatpush1.msra.mxu0 0.0
  %3233 = vmatprep.subr.mxu0 0.0
  %3234 = vmatpush1.msra.mxu0 0.0
  %3235 = vmatprep.subr.mxu0 0.0
  %3236 = vmatpush1.msra.mxu0 0.0
  %3237 = vmatprep.subr.mxu0 0.0
  %3238 = vmatpush1.msra.mxu0 0.0
  %3239 = vmatprep.subr.mxu0 0.0
  %3240 = vmatpush1.msra.mxu0 0.0
  %3241 = vmatprep.subr.mxu0 0.0
  %3242 = vmatpush1.msra.mxu0 0.0
  %3243 = vmatprep.subr.mxu0 0.0
  %3244 = vmatpush1.msra.mxu0 0.0
  %3245 = vmatprep.subr.mxu0 0.0
  %3246 = vmatpush1.msra.mxu0 0.0
  %3247 = vmatprep.subr.mxu0 0.0
  %3248 = vmatpush1.msra.mxu0 0.0
  %3249 = vmatprep.subr.mxu0 0.0
  %3250 = vmatpush1.msra.mxu0 0.0
  %3251 = vmatprep.subr.mxu0 0.0
  %3252 = vmatpush1.msra.mxu0 0.0
  %3253 = vmatprep.subr.mxu0 0.0
  %3254 = vmatpush1.msra.mxu0 0.0
  %3255 = vmatprep.subr.mxu0 0.0
  %3256 = vmatpush1.msra.mxu0 0.0
  %3257 = vmatprep.subr.mxu0 0.0
  %3258 = vmatpush1.msra.mxu0 0.0
  %3259 = vmatprep.mubr.f32.mxu0 0.0
  %3260 = vmatmul.mubr.f32.gmra.mrb[0].mxu0 %v3193
  %v3261 = vpop.f32.mrb[0].mxu0
  %v3262 = vadd.f32 0.0, %v3261
  %v3263 = vpop.f32.mrb[0].mxu0
  %3264 = vdwg.mxu0
  %v3265 = vadd.f32 %v2257, %v3262
  %s3266 = scalar_lea.vmem %s15, 8
  %v3267 = vld [vmem:[%s3266] sm:$0x7]
  %3269 = vset.pattern.permute.xlu0 0
  %3270 = vperm.xlu0 %3269, %v3267
  %v3271 = vpop.permute.xlu0 %3270
  %v3273 = vadd.f32 %v3265, %v3271
  %vm3274 = vcmask 10240
  %3275 = vst.msk [vmem:[%s16] sm:$0x7] %vm3274, %v3273
  // Predicated region
  $region66: #{tpu_custom_call.1} parent=0 // pred_check
    _
  $region67: #{tpu_custom_call.1} parent=0 // pred_check_branch
    %3277 = sbr.rel (0) target = $region69
  $region68: #{tpu_custom_call.1} parent=0 // pred_region
    _
  $region69: #{tpu_custom_call.1} parent=0 // pred_fallthru
    _
  // Predicated region
  $region70: #{tpu_custom_call.1} parent=0 // pred_check
    _
  $region71: #{tpu_custom_call.1} parent=0 // pred_check_branch
    %3279 = sbr.rel (0) target = $region73
  $region72: #{tpu_custom_call.1} parent=0 // pred_region
    _
  $region73: #{tpu_custom_call.1} parent=0 // pred_fallthru
    _

</llo_original>
